<compile_context>
chip_gen: v6e
topology: v6e:2x2x1
jax: 0.10.0
libtpu: 0.0.40
codegen_flags: <defaults>
</compile_context>

<pallas_src>
import functools

import jax
import jax.numpy as jnp
import numpy as np
from jax.experimental import pallas as pl
from jax.experimental.pallas import tpu as pltpu


# ----------------------------------------------------------------------------
# Fused kernel: adaptive pool (1,1) + flatten + LayerNorm (no affine)
#   in : x   [Bblk, C, HW]   (backbone feature map, spatial flattened)
#   out: y   [Bblk, C]       layernorm_C( pool_{hw}(x) )
# ----------------------------------------------------------------------------
def _pool_lnorm_kernel(x_ref, o_ref, *, pool, use_lnorm, eps):
    x = x_ref[...].astype(jnp.float32)                     # [Bblk, C, HW], f32 accumulation
    if pool == "max":
        pooled = jnp.max(x, axis=2)                        # AdaptiveMaxPool2d((1,1)) + flatten
    else:
        pooled = jnp.mean(x, axis=2)                       # AdaptiveAvgPool2d((1,1)) + flatten
    if use_lnorm:                                          # LayerNorm(C, elementwise_affine=False)
        mu = jnp.mean(pooled, axis=1, keepdims=True)
        var = jnp.mean((pooled - mu) ** 2, axis=1, keepdims=True)
        out = (pooled - mu) * jax.lax.rsqrt(var + eps)
    else:
        out = pooled
    o_ref[...] = out.astype(o_ref.dtype)                   # lane-dense [Bblk, C] store


def _pick_batch_block(B, max_bb):
    """Largest legal batch block: bb == B, or bb | B with bb % 8 == 0 (layout-safe)."""
    if B <= max_bb:
        return B
    for bb in range(max_bb, 0, -1):
        if B % bb == 0 and bb % 8 == 0:
            return bb
    return B  # whole batch as a single block (always layout-legal)


# ----------------------------------------------------------------------------
# Wrapper
# ----------------------------------------------------------------------------
@functools.partial(jax.jit, static_argnames=("pool", "use_lnorm", "eps", "max_batch_block"))
def extractor_forward(feat, pool="max", use_lnorm=True, eps=1e-5, max_batch_block=8):
    """feat: backbone layer4 feature map [B, C, H, W] (f32 or bf16)."""
    B, C, H, W = feat.shape
    HW = H * W
    xf = feat.reshape(B, C, HW)                            # free, contiguous

    bb = _pick_batch_block(B, max_batch_block)
    grid = (B // bb,)

    # VMEM budget: double-buffered input + output blocks, with headroom (capped, safe on v7x).
    blk_bytes = bb * C * (HW + 1) * xf.dtype.itemsize
    vmem_limit = int(min(max(4 * blk_bytes + (2 << 20), 16 << 20), 32 << 20))

    kernel = functools.partial(_pool_lnorm_kernel, pool=pool, use_lnorm=use_lnorm, eps=eps)

    return pl.pallas_call(
        kernel,
        out_shape=jax.ShapeDtypeStruct((B, C), jnp.float32),
        grid=grid,
        in_specs=[pl.BlockSpec((bb, C, HW), lambda b: (b, 0, 0))],
        out_specs=pl.BlockSpec((bb, C), lambda b: (b, 0)),
        compiler_params=pltpu.CompilerParams(
            dimension_semantics=("parallel",),             # batch blocks are independent (v7x 2-TC)
            vmem_limit_bytes=vmem_limit,
        ),
    )(xf)


# ----------------------------------------------------------------------------
# Pure-JAX reference (mirrors the PyTorch forward, post-backbone)
# ----------------------------------------------------------------------------
def reference(x, pool="max", use_lnorm=True, eps=1e-5):
    pooled = x.max(axis=(2, 3)) if pool == "max" else x.mean(axis=(2, 3))
    if not use_lnorm:
        return pooled
    mu = pooled.mean(axis=1, keepdims=True)
    var = ((pooled - mu) ** 2).mean(axis=1, keepdims=True)
    return (pooled - mu) / jnp.sqrt(var + eps)


if __name__ == "__main__":
    # Small stand-in for the real ResNet50 layer4 output ([B, 2048, h, w]).
    B, C, H, W = 2, 256, 8, 8
    key = jax.random.PRNGKey(0)
    x_feat = jax.random.normal(key, (B, C, H, W), jnp.float32)

    # Default module config: pool='max', use_lnorm=True.
    out = jax.block_until_ready(extractor_forward(x_feat))
    assert out.shape == (B, C)
    np.testing.assert_allclose(
        np.asarray(out), np.asarray(reference(x_feat)), rtol=2e-3, atol=2e-3
    )

    # Also exercise the pool='avg' variant supported by the module.
    out_avg = jax.block_until_ready(extractor_forward(x_feat, pool="avg"))
    np.testing.assert_allclose(
        np.asarray(out_avg), np.asarray(reference(x_feat, pool="avg")), rtol=2e-3, atol=2e-3
    )

    print("KERNEL_OK")
</pallas_src>

<mosaic_0001>
module attributes {stable_mosaic.version = 11 : i64} {
  func.func @_pool_lnorm_kernel(%arg0: i32, %arg1: memref<2x256x64xf32, #tpu.memory_space<vmem>>, %arg2: memref<2x256xf32, #tpu.memory_space<vmem>>) attributes {dimension_semantics = [#tpu.dimension_semantics<parallel>], iteration_bounds = array<i64: 1>, scalar_prefetch = 0 : i64, scratch_operands = 0 : i64, tpu.core_type = #tpu.core_type<tc>, window_params = [{transform_indices = @transform_0, window_bounds = array<i64: 2, 256, 64>}, {transform_indices = @transform_1, window_bounds = array<i64: 2, 256>}]} {
    %c0 = arith.constant 0 : index
    %c0_0 = arith.constant 0 : index
    %c0_1 = arith.constant 0 : index
    %0 = vector.load %arg1[%c0, %c0_0, %c0_1] : memref<2x256x64xf32, #tpu.memory_space<vmem>>, vector<2x256x64xf32>
    %cst = arith.constant dense<0xFF800000> : vector<2x256xf32>
    %1 = vector.multi_reduction <maximumf>, %0, %cst [2] : vector<2x256x64xf32> to vector<2x256xf32>
    %cst_2 = arith.constant dense<0.000000e+00> : vector<2xf32>
    %2 = vector.multi_reduction <add>, %1, %cst_2 [1] : vector<2x256xf32> to vector<2xf32>
    %3 = vector.shape_cast %2 : vector<2xf32> to vector<2x1xf32>
    %cst_3 = arith.constant 2.560000e+02 : f32
    %4 = vector.broadcast %cst_3 : f32 to vector<2x1xf32>
    %5 = arith.divf %3, %4 : vector<2x1xf32>
    %6 = vector.broadcast %5 : vector<2x1xf32> to vector<2x256xf32>
    %7 = arith.subf %1, %6 : vector<2x256xf32>
    %8 = arith.mulf %7, %7 : vector<2x256xf32>
    %cst_4 = arith.constant dense<0.000000e+00> : vector<2xf32>
    %9 = vector.multi_reduction <add>, %8, %cst_4 [1] : vector<2x256xf32> to vector<2xf32>
    %10 = vector.shape_cast %9 : vector<2xf32> to vector<2x1xf32>
    %cst_5 = arith.constant 2.560000e+02 : f32
    %11 = vector.broadcast %cst_5 : f32 to vector<2x1xf32>
    %12 = arith.divf %10, %11 : vector<2x1xf32>
    %13 = vector.broadcast %5 : vector<2x1xf32> to vector<2x256xf32>
    %14 = arith.subf %1, %13 : vector<2x256xf32>
    %cst_6 = arith.constant 9.99999974E-6 : f32
    %15 = vector.broadcast %cst_6 : f32 to vector<2x1xf32>
    %16 = arith.addf %12, %15 : vector<2x1xf32>
    %17 = math.rsqrt %16 : vector<2x1xf32>
    %18 = vector.broadcast %17 : vector<2x1xf32> to vector<2x256xf32>
    %19 = arith.mulf %14, %18 : vector<2x256xf32>
    %c0_7 = arith.constant 0 : index
    %c0_8 = arith.constant 0 : index
    %20 = vector.load %arg2[%c0_7, %c0_8] : memref<2x256xf32, #tpu.memory_space<vmem>>, vector<2x256xf32>
    tpu.vector_store %arg2[%c0_7, %c0_8], %19 {strides = array<i32>} : memref<2x256xf32, #tpu.memory_space<vmem>>, vector<2x256xf32>,
    return
  }
  func.func @transform_0(%arg0: i32) -> (i32, i32, i32) {
    %c0_i32 = arith.constant 0 : i32
    %c0_i32_0 = arith.constant 0 : i32
    %c0_i32_1 = arith.constant 0 : i32
    return %arg0, %c0_i32, %c0_i32_0 : i32, i32, i32
  }
  func.func @transform_1(%arg0: i32) -> (i32, i32) {
    %c0_i32 = arith.constant 0 : i32
    %c0_i32_0 = arith.constant 0 : i32
    return %arg0, %c0_i32 : i32, i32
  }
}

</mosaic_0001>

<llo_original>
// kernel: extractor_forward.1
$region0: #{extractor_forward.1}
  #allocation0 [shape = 'u32[]', space=smem, size = 0x4, offset = 0x4, fixed_abs, tag = 'smem constant byte address 0x4 - core index']
  #allocation1 [shape = 'u32[144,128]{1,0:T(1,128)}', space=vmem, size = 0x12000, scoped, tag = 'internal scratch']
  %s0 = inlined_call_operand.vmem [shape: f32[2,256,64], index: 0, kind: input, shape index: {}]
  %s1 = inlined_call_operand.hbm [shape: f32[2,256], index: 1, kind: output, shape index: {}]
  %s2 = sld [smem:[#allocation0]]
  $region14: #{extractor_forward.1} parent=0
    _
  %s4 = ssub.s32 1, %s2
  %s5 = scalar_select 0, %s4, %s2
  $region1: #{extractor_forward.1} parent=0
    #allocation2 [shape = 'u8[2048]{0}', space=vmem, size = 0x800, scoped, tag = 'output window, operand 0, single buffered']
    #allocation3 [shape = 's32[1]{0}', space=sflag, size = 0x4, scoped, tag = 'scoped memory for extractor_forward.1']
    %6 = vsyncpa [#allocation3], 0
    // Predicated region
    $region2: #{extractor_forward.1} parent=1 // pred_check
      _
    $region3: #{extractor_forward.1} parent=1 // pred_check_branch
      %8 = sbr.rel (0) target = $region5
    $region4: #{extractor_forward.1} parent=1 // pred_region
      _
    $region5: #{extractor_forward.1} parent=1 // pred_fallthru
      _
    %v9 = vld [vmem:[%s0] sm:$0xff]
    %v10 = vld [vmem:[%s0 + $0x8] sm:$0xff]
    %v11 = vld [vmem:[%s0 + $0x10] sm:$0xff]
    %v12 = vld [vmem:[%s0 + $0x18] sm:$0xff]
    %v13 = vld [vmem:[%s0 + $0x20] sm:$0xff]
    %v14 = vld [vmem:[%s0 + $0x28] sm:$0xff]
    %v15 = vld [vmem:[%s0 + $0x30] sm:$0xff]
    %v16 = vld [vmem:[%s0 + $0x38] sm:$0xff]
    %v17 = vld [vmem:[%s0 + $0x40] sm:$0xff]
    %v18 = vld [vmem:[%s0 + $0x48] sm:$0xff]
    %v19 = vld [vmem:[%s0 + $0x50] sm:$0xff]
    %v20 = vld [vmem:[%s0 + $0x58] sm:$0xff]
    %v21 = vld [vmem:[%s0 + $0x60] sm:$0xff]
    %v22 = vld [vmem:[%s0 + $0x68] sm:$0xff]
    %v23 = vld [vmem:[%s0 + $0x70] sm:$0xff]
    %v24 = vld [vmem:[%s0 + $0x78] sm:$0xff]
    %v25 = vld [vmem:[%s0 + $0x80] sm:$0xff]
    %v26 = vld [vmem:[%s0 + $0x88] sm:$0xff]
    %v27 = vld [vmem:[%s0 + $0x90] sm:$0xff]
    %v28 = vld [vmem:[%s0 + $0x98] sm:$0xff]
    %v29 = vld [vmem:[%s0 + $0xa0] sm:$0xff]
    %v30 = vld [vmem:[%s0 + $0xa8] sm:$0xff]
    %v31 = vld [vmem:[%s0 + $0xb0] sm:$0xff]
    %v32 = vld [vmem:[%s0 + $0xb8] sm:$0xff]
    %v33 = vld [vmem:[%s0 + $0xc0] sm:$0xff]
    %v34 = vld [vmem:[%s0 + $0xc8] sm:$0xff]
    %v35 = vld [vmem:[%s0 + $0xd0] sm:$0xff]
    %v36 = vld [vmem:[%s0 + $0xd8] sm:$0xff]
    %v37 = vld [vmem:[%s0 + $0xe0] sm:$0xff]
    %v38 = vld [vmem:[%s0 + $0xe8] sm:$0xff]
    %v39 = vld [vmem:[%s0 + $0xf0] sm:$0xff]
    %v40 = vld [vmem:[%s0 + $0xf8] sm:$0xff]
    %v41 = vld [vmem:[%s0 + $0x100] sm:$0xff]
    %v42 = vld [vmem:[%s0 + $0x108] sm:$0xff]
    %v43 = vld [vmem:[%s0 + $0x110] sm:$0xff]
    %v44 = vld [vmem:[%s0 + $0x118] sm:$0xff]
    %v45 = vld [vmem:[%s0 + $0x120] sm:$0xff]
    %v46 = vld [vmem:[%s0 + $0x128] sm:$0xff]
    %v47 = vld [vmem:[%s0 + $0x130] sm:$0xff]
    %v48 = vld [vmem:[%s0 + $0x138] sm:$0xff]
    %v49 = vld [vmem:[%s0 + $0x140] sm:$0xff]
    %v50 = vld [vmem:[%s0 + $0x148] sm:$0xff]
    %v51 = vld [vmem:[%s0 + $0x150] sm:$0xff]
    %v52 = vld [vmem:[%s0 + $0x158] sm:$0xff]
    %v53 = vld [vmem:[%s0 + $0x160] sm:$0xff]
    %v54 = vld [vmem:[%s0 + $0x168] sm:$0xff]
    %v55 = vld [vmem:[%s0 + $0x170] sm:$0xff]
    %v56 = vld [vmem:[%s0 + $0x178] sm:$0xff]
    %v57 = vld [vmem:[%s0 + $0x180] sm:$0xff]
    %v58 = vld [vmem:[%s0 + $0x188] sm:$0xff]
    %v59 = vld [vmem:[%s0 + $0x190] sm:$0xff]
    %v60 = vld [vmem:[%s0 + $0x198] sm:$0xff]
    %v61 = vld [vmem:[%s0 + $0x1a0] sm:$0xff]
    %v62 = vld [vmem:[%s0 + $0x1a8] sm:$0xff]
    %v63 = vld [vmem:[%s0 + $0x1b0] sm:$0xff]
    %v64 = vld [vmem:[%s0 + $0x1b8] sm:$0xff]
    %v65 = vld [vmem:[%s0 + $0x1c0] sm:$0xff]
    %v66 = vld [vmem:[%s0 + $0x1c8] sm:$0xff]
    %v67 = vld [vmem:[%s0 + $0x1d0] sm:$0xff]
    %v68 = vld [vmem:[%s0 + $0x1d8] sm:$0xff]
    %v69 = vld [vmem:[%s0 + $0x1e0] sm:$0xff]
    %v70 = vld [vmem:[%s0 + $0x1e8] sm:$0xff]
    %v71 = vld [vmem:[%s0 + $0x1f0] sm:$0xff]
    %v72 = vld [vmem:[%s0 + $0x1f8] sm:$0xff]
    %vm73 = vcmask 523264
    %v74 = vsel %vm73, %v9, -inf
    %75 = vmax.xlane.f32.xlu0 %v74
    %v76 = vpop.xlane.xlu0 %75
    %v77 = vsel %vm73, %v10, -inf
    %78 = vmax.xlane.f32.xlu0 %v77
    %v79 = vpop.xlane.xlu0 %78
    %v80 = vsel %vm73, %v11, -inf
    %81 = vmax.xlane.f32.xlu0 %v80
    %v82 = vpop.xlane.xlu0 %81
    %v83 = vsel %vm73, %v12, -inf
    %84 = vmax.xlane.f32.xlu0 %v83
    %v85 = vpop.xlane.xlu0 %84
    %v86 = vsel %vm73, %v13, -inf
    %87 = vmax.xlane.f32.xlu0 %v86
    %v88 = vpop.xlane.xlu0 %87
    %v89 = vsel %vm73, %v14, -inf
    %90 = vmax.xlane.f32.xlu0 %v89
    %v91 = vpop.xlane.xlu0 %90
    %v92 = vsel %vm73, %v15, -inf
    %93 = vmax.xlane.f32.xlu0 %v92
    %v94 = vpop.xlane.xlu0 %93
    %v95 = vsel %vm73, %v16, -inf
    %96 = vmax.xlane.f32.xlu0 %v95
    %v97 = vpop.xlane.xlu0 %96
    %v98 = vsel %vm73, %v17, -inf
    %99 = vmax.xlane.f32.xlu0 %v98
    %v100 = vpop.xlane.xlu0 %99
    %v101 = vsel %vm73, %v18, -inf
    %102 = vmax.xlane.f32.xlu0 %v101
    %v103 = vpop.xlane.xlu0 %102
    %v104 = vsel %vm73, %v19, -inf
    %105 = vmax.xlane.f32.xlu0 %v104
    %v106 = vpop.xlane.xlu0 %105
    %v107 = vsel %vm73, %v20, -inf
    %108 = vmax.xlane.f32.xlu0 %v107
    %v109 = vpop.xlane.xlu0 %108
    %v110 = vsel %vm73, %v21, -inf
    %111 = vmax.xlane.f32.xlu0 %v110
    %v112 = vpop.xlane.xlu0 %111
    %v113 = vsel %vm73, %v22, -inf
    %114 = vmax.xlane.f32.xlu0 %v113
    %v115 = vpop.xlane.xlu0 %114
    %v116 = vsel %vm73, %v23, -inf
    %117 = vmax.xlane.f32.xlu0 %v116
    %v118 = vpop.xlane.xlu0 %117
    %v119 = vsel %vm73, %v24, -inf
    %120 = vmax.xlane.f32.xlu0 %v119
    %v121 = vpop.xlane.xlu0 %120
    %v122 = vsel %vm73, %v25, -inf
    %123 = vmax.xlane.f32.xlu0 %v122
    %v124 = vpop.xlane.xlu0 %123
    %v125 = vsel %vm73, %v26, -inf
    %126 = vmax.xlane.f32.xlu0 %v125
    %v127 = vpop.xlane.xlu0 %126
    %v128 = vsel %vm73, %v27, -inf
    %129 = vmax.xlane.f32.xlu0 %v128
    %v130 = vpop.xlane.xlu0 %129
    %v131 = vsel %vm73, %v28, -inf
    %132 = vmax.xlane.f32.xlu0 %v131
    %v133 = vpop.xlane.xlu0 %132
    %v134 = vsel %vm73, %v29, -inf
    %135 = vmax.xlane.f32.xlu0 %v134
    %v136 = vpop.xlane.xlu0 %135
    %v137 = vsel %vm73, %v30, -inf
    %138 = vmax.xlane.f32.xlu0 %v137
    %v139 = vpop.xlane.xlu0 %138
    %v140 = vsel %vm73, %v31, -inf
    %141 = vmax.xlane.f32.xlu0 %v140
    %v142 = vpop.xlane.xlu0 %141
    %v143 = vsel %vm73, %v32, -inf
    %144 = vmax.xlane.f32.xlu0 %v143
    %v145 = vpop.xlane.xlu0 %144
    %v146 = vsel %vm73, %v33, -inf
    %147 = vmax.xlane.f32.xlu0 %v146
    %v148 = vpop.xlane.xlu0 %147
    %v149 = vsel %vm73, %v34, -inf
    %150 = vmax.xlane.f32.xlu0 %v149
    %v151 = vpop.xlane.xlu0 %150
    %v152 = vsel %vm73, %v35, -inf
    %153 = vmax.xlane.f32.xlu0 %v152
    %v154 = vpop.xlane.xlu0 %153
    %v155 = vsel %vm73, %v36, -inf
    %156 = vmax.xlane.f32.xlu0 %v155
    %v157 = vpop.xlane.xlu0 %156
    %v158 = vsel %vm73, %v37, -inf
    %159 = vmax.xlane.f32.xlu0 %v158
    %v160 = vpop.xlane.xlu0 %159
    %v161 = vsel %vm73, %v38, -inf
    %162 = vmax.xlane.f32.xlu0 %v161
    %v163 = vpop.xlane.xlu0 %162
    %v164 = vsel %vm73, %v39, -inf
    %165 = vmax.xlane.f32.xlu0 %v164
    %v166 = vpop.xlane.xlu0 %165
    %v167 = vsel %vm73, %v40, -inf
    %168 = vmax.xlane.f32.xlu0 %v167
    %v169 = vpop.xlane.xlu0 %168
    %v170 = vsel %vm73, %v41, -inf
    %171 = vmax.xlane.f32.xlu0 %v170
    %v172 = vpop.xlane.xlu0 %171
    %v173 = vsel %vm73, %v42, -inf
    %174 = vmax.xlane.f32.xlu0 %v173
    %v175 = vpop.xlane.xlu0 %174
    %v176 = vsel %vm73, %v43, -inf
    %177 = vmax.xlane.f32.xlu0 %v176
    %v178 = vpop.xlane.xlu0 %177
    %v179 = vsel %vm73, %v44, -inf
    %180 = vmax.xlane.f32.xlu0 %v179
    %v181 = vpop.xlane.xlu0 %180
    %v182 = vsel %vm73, %v45, -inf
    %183 = vmax.xlane.f32.xlu0 %v182
    %v184 = vpop.xlane.xlu0 %183
    %v185 = vsel %vm73, %v46, -inf
    %186 = vmax.xlane.f32.xlu0 %v185
    %v187 = vpop.xlane.xlu0 %186
    %v188 = vsel %vm73, %v47, -inf
    %189 = vmax.xlane.f32.xlu0 %v188
    %v190 = vpop.xlane.xlu0 %189
    %v191 = vsel %vm73, %v48, -inf
    %192 = vmax.xlane.f32.xlu0 %v191
    %v193 = vpop.xlane.xlu0 %192
    %v194 = vsel %vm73, %v49, -inf
    %195 = vmax.xlane.f32.xlu0 %v194
    %v196 = vpop.xlane.xlu0 %195
    %v197 = vsel %vm73, %v50, -inf
    %198 = vmax.xlane.f32.xlu0 %v197
    %v199 = vpop.xlane.xlu0 %198
    %v200 = vsel %vm73, %v51, -inf
    %201 = vmax.xlane.f32.xlu0 %v200
    %v202 = vpop.xlane.xlu0 %201
    %v203 = vsel %vm73, %v52, -inf
    %204 = vmax.xlane.f32.xlu0 %v203
    %v205 = vpop.xlane.xlu0 %204
    %v206 = vsel %vm73, %v53, -inf
    %207 = vmax.xlane.f32.xlu0 %v206
    %v208 = vpop.xlane.xlu0 %207
    %v209 = vsel %vm73, %v54, -inf
    %210 = vmax.xlane.f32.xlu0 %v209
    %v211 = vpop.xlane.xlu0 %210
    %v212 = vsel %vm73, %v55, -inf
    %213 = vmax.xlane.f32.xlu0 %v212
    %v214 = vpop.xlane.xlu0 %213
    %v215 = vsel %vm73, %v56, -inf
    %216 = vmax.xlane.f32.xlu0 %v215
    %v217 = vpop.xlane.xlu0 %216
    %v218 = vsel %vm73, %v57, -inf
    %219 = vmax.xlane.f32.xlu0 %v218
    %v220 = vpop.xlane.xlu0 %219
    %v221 = vsel %vm73, %v58, -inf
    %222 = vmax.xlane.f32.xlu0 %v221
    %v223 = vpop.xlane.xlu0 %222
    %v224 = vsel %vm73, %v59, -inf
    %225 = vmax.xlane.f32.xlu0 %v224
    %v226 = vpop.xlane.xlu0 %225
    %v227 = vsel %vm73, %v60, -inf
    %228 = vmax.xlane.f32.xlu0 %v227
    %v229 = vpop.xlane.xlu0 %228
    %v230 = vsel %vm73, %v61, -inf
    %231 = vmax.xlane.f32.xlu0 %v230
    %v232 = vpop.xlane.xlu0 %231
    %v233 = vsel %vm73, %v62, -inf
    %234 = vmax.xlane.f32.xlu0 %v233
    %v235 = vpop.xlane.xlu0 %234
    %v236 = vsel %vm73, %v63, -inf
    %237 = vmax.xlane.f32.xlu0 %v236
    %v238 = vpop.xlane.xlu0 %237
    %v239 = vsel %vm73, %v64, -inf
    %240 = vmax.xlane.f32.xlu0 %v239
    %v241 = vpop.xlane.xlu0 %240
    %v242 = vsel %vm73, %v65, -inf
    %243 = vmax.xlane.f32.xlu0 %v242
    %v244 = vpop.xlane.xlu0 %243
    %v245 = vsel %vm73, %v66, -inf
    %246 = vmax.xlane.f32.xlu0 %v245
    %v247 = vpop.xlane.xlu0 %246
    %v248 = vsel %vm73, %v67, -inf
    %249 = vmax.xlane.f32.xlu0 %v248
    %v250 = vpop.xlane.xlu0 %249
    %v251 = vsel %vm73, %v68, -inf
    %252 = vmax.xlane.f32.xlu0 %v251
    %v253 = vpop.xlane.xlu0 %252
    %v254 = vsel %vm73, %v69, -inf
    %255 = vmax.xlane.f32.xlu0 %v254
    %v256 = vpop.xlane.xlu0 %255
    %v257 = vsel %vm73, %v70, -inf
    %258 = vmax.xlane.f32.xlu0 %v257
    %v259 = vpop.xlane.xlu0 %258
    %v260 = vsel %vm73, %v71, -inf
    %261 = vmax.xlane.f32.xlu0 %v260
    %v262 = vpop.xlane.xlu0 %261
    %v263 = vsel %vm73, %v72, -inf
    %264 = vmax.xlane.f32.xlu0 %v263
    %v265 = vpop.xlane.xlu0 %264
    %v330 = vlaneseq
    %v331 = vand.u32 %v330, 127
    %v332 = vlaneseq
    %v333 = vshrl.u32 %v332, 7
    %v334 = vsub.s32 %v331, %v333
    %v335 = vrot.slane %v76, %v334
    %v336 = vadd.s32 %v331, 4294967288
    %v337 = vlaneseq
    %v338 = vshrl.u32 %v337, 7
    %v339 = vsub.s32 %v336, %v338
    %v340 = vrot.slane %v79, %v339
    %vm341 = vcmask 130112
    %v342 = vsel %vm341, %v340, %v335
    %v343 = vadd.s32 %v331, 4294967280
    %v344 = vlaneseq
    %v345 = vshrl.u32 %v344, 7
    %v346 = vsub.s32 %v343, %v345
    %v347 = vrot.slane %v82, %v346
    %vm348 = vcmask 195712
    %v349 = vsel %vm348, %v347, %v342
    %v350 = vadd.s32 %v331, 4294967272
    %v351 = vlaneseq
    %v352 = vshrl.u32 %v351, 7
    %v353 = vsub.s32 %v350, %v352
    %v354 = vrot.slane %v85, %v353
    %vm355 = vcmask 261312
    %v356 = vsel %vm355, %v354, %v349
    %v357 = vadd.s32 %v331, 4294967264
    %v358 = vlaneseq
    %v359 = vshrl.u32 %v358, 7
    %v360 = vsub.s32 %v357, %v359
    %v361 = vrot.slane %v88, %v360
    %vm362 = vcmask 326912
    %v363 = vsel %vm362, %v361, %v356
    %v364 = vadd.s32 %v331, 4294967256
    %v365 = vlaneseq
    %v366 = vshrl.u32 %v365, 7
    %v367 = vsub.s32 %v364, %v366
    %v368 = vrot.slane %v91, %v367
    %vm369 = vcmask 392512
    %v370 = vsel %vm369, %v368, %v363
    %v371 = vadd.s32 %v331, 4294967248
    %v372 = vlaneseq
    %v373 = vshrl.u32 %v372, 7
    %v374 = vsub.s32 %v371, %v373
    %v375 = vrot.slane %v94, %v374
    %vm376 = vcmask 458112
    %v377 = vsel %vm376, %v375, %v370
    %v378 = vadd.s32 %v331, 4294967240
    %v379 = vlaneseq
    %v380 = vshrl.u32 %v379, 7
    %v381 = vsub.s32 %v378, %v380
    %v382 = vrot.slane %v97, %v381
    %vm383 = vcmask 523712
    %v384 = vsel %vm383, %v382, %v377
    %v385 = vadd.s32 %v331, 4294967232
    %v386 = vlaneseq
    %v387 = vshrl.u32 %v386, 7
    %v388 = vsub.s32 %v385, %v387
    %v389 = vrot.slane %v100, %v388
    %vm390 = vcmask 589312
    %v391 = vsel %vm390, %v389, %v384
    %v392 = vadd.s32 %v331, 4294967224
    %v393 = vlaneseq
    %v394 = vshrl.u32 %v393, 7
    %v395 = vsub.s32 %v392, %v394
    %v396 = vrot.slane %v103, %v395
    %vm397 = vcmask 654912
    %v398 = vsel %vm397, %v396, %v391
    %v399 = vadd.s32 %v331, 4294967216
    %v400 = vlaneseq
    %v401 = vshrl.u32 %v400, 7
    %v402 = vsub.s32 %v399, %v401
    %v403 = vrot.slane %v106, %v402
    %vm404 = vcmask 720512
    %v405 = vsel %vm404, %v403, %v398
    %v406 = vadd.s32 %v331, 4294967208
    %v407 = vlaneseq
    %v408 = vshrl.u32 %v407, 7
    %v409 = vsub.s32 %v406, %v408
    %v410 = vrot.slane %v109, %v409
    %vm411 = vcmask 786112
    %v412 = vsel %vm411, %v410, %v405
    %v413 = vadd.s32 %v331, 4294967200
    %v414 = vlaneseq
    %v415 = vshrl.u32 %v414, 7
    %v416 = vsub.s32 %v413, %v415
    %v417 = vrot.slane %v112, %v416
    %vm418 = vcmask 851712
    %v419 = vsel %vm418, %v417, %v412
    %v420 = vadd.s32 %v331, 4294967192
    %v421 = vlaneseq
    %v422 = vshrl.u32 %v421, 7
    %v423 = vsub.s32 %v420, %v422
    %v424 = vrot.slane %v115, %v423
    %vm425 = vcmask 917312
    %v426 = vsel %vm425, %v424, %v419
    %v427 = vadd.s32 %v331, 4294967184
    %v428 = vlaneseq
    %v429 = vshrl.u32 %v428, 7
    %v430 = vsub.s32 %v427, %v429
    %v431 = vrot.slane %v118, %v430
    %vm432 = vcmask 982912
    %v433 = vsel %vm432, %v431, %v426
    %v434 = vadd.s32 %v331, 4294967176
    %v435 = vlaneseq
    %v436 = vshrl.u32 %v435, 7
    %v437 = vsub.s32 %v434, %v436
    %v438 = vrot.slane %v121, %v437
    %vm439 = vcmask 1048512
    %v440 = vsel %vm439, %v438, %v433
    %v441 = vlaneseq
    %v442 = vshrl.u32 %v441, 7
    %v443 = vsub.s32 %v331, %v442
    %v444 = vrot.slane %v124, %v443
    %v445 = vlaneseq
    %v446 = vshrl.u32 %v445, 7
    %v447 = vsub.s32 %v336, %v446
    %v448 = vrot.slane %v127, %v447
    %v449 = vsel %vm341, %v448, %v444
    %v450 = vlaneseq
    %v451 = vshrl.u32 %v450, 7
    %v452 = vsub.s32 %v343, %v451
    %v453 = vrot.slane %v130, %v452
    %v454 = vsel %vm348, %v453, %v449
    %v455 = vlaneseq
    %v456 = vshrl.u32 %v455, 7
    %v457 = vsub.s32 %v350, %v456
    %v458 = vrot.slane %v133, %v457
    %v459 = vsel %vm355, %v458, %v454
    %v460 = vlaneseq
    %v461 = vshrl.u32 %v460, 7
    %v462 = vsub.s32 %v357, %v461
    %v463 = vrot.slane %v136, %v462
    %v464 = vsel %vm362, %v463, %v459
    %v465 = vlaneseq
    %v466 = vshrl.u32 %v465, 7
    %v467 = vsub.s32 %v364, %v466
    %v468 = vrot.slane %v139, %v467
    %v469 = vsel %vm369, %v468, %v464
    %v470 = vlaneseq
    %v471 = vshrl.u32 %v470, 7
    %v472 = vsub.s32 %v371, %v471
    %v473 = vrot.slane %v142, %v472
    %v474 = vsel %vm376, %v473, %v469
    %v475 = vlaneseq
    %v476 = vshrl.u32 %v475, 7
    %v477 = vsub.s32 %v378, %v476
    %v478 = vrot.slane %v145, %v477
    %v479 = vsel %vm383, %v478, %v474
    %v480 = vlaneseq
    %v481 = vshrl.u32 %v480, 7
    %v482 = vsub.s32 %v385, %v481
    %v483 = vrot.slane %v148, %v482
    %v484 = vsel %vm390, %v483, %v479
    %v485 = vlaneseq
    %v486 = vshrl.u32 %v485, 7
    %v487 = vsub.s32 %v392, %v486
    %v488 = vrot.slane %v151, %v487
    %v489 = vsel %vm397, %v488, %v484
    %v490 = vlaneseq
    %v491 = vshrl.u32 %v490, 7
    %v492 = vsub.s32 %v399, %v491
    %v493 = vrot.slane %v154, %v492
    %v494 = vsel %vm404, %v493, %v489
    %v495 = vlaneseq
    %v496 = vshrl.u32 %v495, 7
    %v497 = vsub.s32 %v406, %v496
    %v498 = vrot.slane %v157, %v497
    %v499 = vsel %vm411, %v498, %v494
    %v500 = vlaneseq
    %v501 = vshrl.u32 %v500, 7
    %v502 = vsub.s32 %v413, %v501
    %v503 = vrot.slane %v160, %v502
    %v504 = vsel %vm418, %v503, %v499
    %v505 = vlaneseq
    %v506 = vshrl.u32 %v505, 7
    %v507 = vsub.s32 %v420, %v506
    %v508 = vrot.slane %v163, %v507
    %v509 = vsel %vm425, %v508, %v504
    %v510 = vlaneseq
    %v511 = vshrl.u32 %v510, 7
    %v512 = vsub.s32 %v427, %v511
    %v513 = vrot.slane %v166, %v512
    %v514 = vsel %vm432, %v513, %v509
    %v515 = vlaneseq
    %v516 = vshrl.u32 %v515, 7
    %v517 = vsub.s32 %v434, %v516
    %v518 = vrot.slane %v169, %v517
    %v519 = vsel %vm439, %v518, %v514
    %v520 = vlaneseq
    %v521 = vshrl.u32 %v520, 7
    %v522 = vsub.s32 %v331, %v521
    %v523 = vrot.slane %v172, %v522
    %v524 = vlaneseq
    %v525 = vshrl.u32 %v524, 7
    %v526 = vsub.s32 %v336, %v525
    %v527 = vrot.slane %v175, %v526
    %v528 = vsel %vm341, %v527, %v523
    %v529 = vlaneseq
    %v530 = vshrl.u32 %v529, 7
    %v531 = vsub.s32 %v343, %v530
    %v532 = vrot.slane %v178, %v531
    %v533 = vsel %vm348, %v532, %v528
    %v534 = vlaneseq
    %v535 = vshrl.u32 %v534, 7
    %v536 = vsub.s32 %v350, %v535
    %v537 = vrot.slane %v181, %v536
    %v538 = vsel %vm355, %v537, %v533
    %v539 = vlaneseq
    %v540 = vshrl.u32 %v539, 7
    %v541 = vsub.s32 %v357, %v540
    %v542 = vrot.slane %v184, %v541
    %v543 = vsel %vm362, %v542, %v538
    %v544 = vlaneseq
    %v545 = vshrl.u32 %v544, 7
    %v546 = vsub.s32 %v364, %v545
    %v547 = vrot.slane %v187, %v546
    %v548 = vsel %vm369, %v547, %v543
    %v549 = vlaneseq
    %v550 = vshrl.u32 %v549, 7
    %v551 = vsub.s32 %v371, %v550
    %v552 = vrot.slane %v190, %v551
    %v553 = vsel %vm376, %v552, %v548
    %v554 = vlaneseq
    %v555 = vshrl.u32 %v554, 7
    %v556 = vsub.s32 %v378, %v555
    %v557 = vrot.slane %v193, %v556
    %v558 = vsel %vm383, %v557, %v553
    %v559 = vlaneseq
    %v560 = vshrl.u32 %v559, 7
    %v561 = vsub.s32 %v385, %v560
    %v562 = vrot.slane %v196, %v561
    %v563 = vsel %vm390, %v562, %v558
    %v564 = vlaneseq
    %v565 = vshrl.u32 %v564, 7
    %v566 = vsub.s32 %v392, %v565
    %v567 = vrot.slane %v199, %v566
    %v568 = vsel %vm397, %v567, %v563
    %v569 = vlaneseq
    %v570 = vshrl.u32 %v569, 7
    %v571 = vsub.s32 %v399, %v570
    %v572 = vrot.slane %v202, %v571
    %v573 = vsel %vm404, %v572, %v568
    %v574 = vlaneseq
    %v575 = vshrl.u32 %v574, 7
    %v576 = vsub.s32 %v406, %v575
    %v577 = vrot.slane %v205, %v576
    %v578 = vsel %vm411, %v577, %v573
    %v579 = vlaneseq
    %v580 = vshrl.u32 %v579, 7
    %v581 = vsub.s32 %v413, %v580
    %v582 = vrot.slane %v208, %v581
    %v583 = vsel %vm418, %v582, %v578
    %v584 = vlaneseq
    %v585 = vshrl.u32 %v584, 7
    %v586 = vsub.s32 %v420, %v585
    %v587 = vrot.slane %v211, %v586
    %v588 = vsel %vm425, %v587, %v583
    %v589 = vlaneseq
    %v590 = vshrl.u32 %v589, 7
    %v591 = vsub.s32 %v427, %v590
    %v592 = vrot.slane %v214, %v591
    %v593 = vsel %vm432, %v592, %v588
    %v594 = vlaneseq
    %v595 = vshrl.u32 %v594, 7
    %v596 = vsub.s32 %v434, %v595
    %v597 = vrot.slane %v217, %v596
    %v598 = vsel %vm439, %v597, %v593
    %v599 = vlaneseq
    %v600 = vshrl.u32 %v599, 7
    %v601 = vsub.s32 %v331, %v600
    %v602 = vrot.slane %v220, %v601
    %v603 = vlaneseq
    %v604 = vshrl.u32 %v603, 7
    %v605 = vsub.s32 %v336, %v604
    %v606 = vrot.slane %v223, %v605
    %v607 = vsel %vm341, %v606, %v602
    %v608 = vlaneseq
    %v609 = vshrl.u32 %v608, 7
    %v610 = vsub.s32 %v343, %v609
    %v611 = vrot.slane %v226, %v610
    %v612 = vsel %vm348, %v611, %v607
    %v613 = vlaneseq
    %v614 = vshrl.u32 %v613, 7
    %v615 = vsub.s32 %v350, %v614
    %v616 = vrot.slane %v229, %v615
    %v617 = vsel %vm355, %v616, %v612
    %v618 = vlaneseq
    %v619 = vshrl.u32 %v618, 7
    %v620 = vsub.s32 %v357, %v619
    %v621 = vrot.slane %v232, %v620
    %v622 = vsel %vm362, %v621, %v617
    %v623 = vlaneseq
    %v624 = vshrl.u32 %v623, 7
    %v625 = vsub.s32 %v364, %v624
    %v626 = vrot.slane %v235, %v625
    %v627 = vsel %vm369, %v626, %v622
    %v628 = vlaneseq
    %v629 = vshrl.u32 %v628, 7
    %v630 = vsub.s32 %v371, %v629
    %v631 = vrot.slane %v238, %v630
    %v632 = vsel %vm376, %v631, %v627
    %v633 = vlaneseq
    %v634 = vshrl.u32 %v633, 7
    %v635 = vsub.s32 %v378, %v634
    %v636 = vrot.slane %v241, %v635
    %v637 = vsel %vm383, %v636, %v632
    %v638 = vlaneseq
    %v639 = vshrl.u32 %v638, 7
    %v640 = vsub.s32 %v385, %v639
    %v641 = vrot.slane %v244, %v640
    %v642 = vsel %vm390, %v641, %v637
    %v643 = vlaneseq
    %v644 = vshrl.u32 %v643, 7
    %v645 = vsub.s32 %v392, %v644
    %v646 = vrot.slane %v247, %v645
    %v647 = vsel %vm397, %v646, %v642
    %v648 = vlaneseq
    %v649 = vshrl.u32 %v648, 7
    %v650 = vsub.s32 %v399, %v649
    %v651 = vrot.slane %v250, %v650
    %v652 = vsel %vm404, %v651, %v647
    %v653 = vlaneseq
    %v654 = vshrl.u32 %v653, 7
    %v655 = vsub.s32 %v406, %v654
    %v656 = vrot.slane %v253, %v655
    %v657 = vsel %vm411, %v656, %v652
    %v658 = vlaneseq
    %v659 = vshrl.u32 %v658, 7
    %v660 = vsub.s32 %v413, %v659
    %v661 = vrot.slane %v256, %v660
    %v662 = vsel %vm418, %v661, %v657
    %v663 = vlaneseq
    %v664 = vshrl.u32 %v663, 7
    %v665 = vsub.s32 %v420, %v664
    %v666 = vrot.slane %v259, %v665
    %v667 = vsel %vm425, %v666, %v662
    %v668 = vlaneseq
    %v669 = vshrl.u32 %v668, 7
    %v670 = vsub.s32 %v427, %v669
    %v671 = vrot.slane %v262, %v670
    %v672 = vsel %vm432, %v671, %v667
    %v673 = vlaneseq
    %v674 = vshrl.u32 %v673, 7
    %v675 = vsub.s32 %v434, %v674
    %v676 = vrot.slane %v265, %v675
    %v677 = vsel %vm439, %v676, %v672
    %vm678 = vcmask 1041409
    %v679 = vsel %vm678, %v598, %v440
    %v680 = vsel %vm678, %v677, %v519
    %vm683 = vcmask 1041408
    %v684 = vsel %vm683, %v679, 0.0
    %v685 = vsel %vm683, %v680, 0.0
    %v686 = vadd.f32 %v684, %v685
    %687 = vadd.xlane.f32.xlu0 %v686
    %v688 = vpop.xlane.xlu0 %687
    %v689 = vrcp.pop 256.0
    %v690 = vmul.f32 %v688, %v689
    %v692 = vlaneseq
    %v693 = vshrl.u32 %v692, 7
    %v694 = vsub.s32 0, %v693
    %v695 = vrot.slane %v690, %v694
    %v696 = vlaneseq
    %v697 = vshrl.u32 %v696, 7
    %v698 = vsub.s32 1, %v697
    %v699 = vrot.slane %v690, %v698
    %v702 = vsub.f32 %v76, %v695
    %v703 = vsub.f32 %v79, %v695
    %v704 = vsub.f32 %v82, %v695
    %v705 = vsub.f32 %v85, %v695
    %v706 = vsub.f32 %v88, %v695
    %v707 = vsub.f32 %v91, %v695
    %v708 = vsub.f32 %v94, %v695
    %v709 = vsub.f32 %v97, %v695
    %v710 = vsub.f32 %v100, %v695
    %v711 = vsub.f32 %v103, %v695
    %v712 = vsub.f32 %v106, %v695
    %v713 = vsub.f32 %v109, %v695
    %v714 = vsub.f32 %v112, %v695
    %v715 = vsub.f32 %v115, %v695
    %v716 = vsub.f32 %v118, %v695
    %v717 = vsub.f32 %v121, %v695
    %v718 = vsub.f32 %v124, %v695
    %v719 = vsub.f32 %v127, %v695
    %v720 = vsub.f32 %v130, %v695
    %v721 = vsub.f32 %v133, %v695
    %v722 = vsub.f32 %v136, %v695
    %v723 = vsub.f32 %v139, %v695
    %v724 = vsub.f32 %v142, %v695
    %v725 = vsub.f32 %v145, %v695
    %v726 = vsub.f32 %v148, %v695
    %v727 = vsub.f32 %v151, %v695
    %v728 = vsub.f32 %v154, %v695
    %v729 = vsub.f32 %v157, %v695
    %v730 = vsub.f32 %v160, %v695
    %v731 = vsub.f32 %v163, %v695
    %v732 = vsub.f32 %v166, %v695
    %v733 = vsub.f32 %v169, %v695
    %v734 = vsub.f32 %v172, %v699
    %v735 = vsub.f32 %v175, %v699
    %v736 = vsub.f32 %v178, %v699
    %v737 = vsub.f32 %v181, %v699
    %v738 = vsub.f32 %v184, %v699
    %v739 = vsub.f32 %v187, %v699
    %v740 = vsub.f32 %v190, %v699
    %v741 = vsub.f32 %v193, %v699
    %v742 = vsub.f32 %v196, %v699
    %v743 = vsub.f32 %v199, %v699
    %v744 = vsub.f32 %v202, %v699
    %v745 = vsub.f32 %v205, %v699
    %v746 = vsub.f32 %v208, %v699
    %v747 = vsub.f32 %v211, %v699
    %v748 = vsub.f32 %v214, %v699
    %v749 = vsub.f32 %v217, %v699
    %v750 = vsub.f32 %v220, %v699
    %v751 = vsub.f32 %v223, %v699
    %v752 = vsub.f32 %v226, %v699
    %v753 = vsub.f32 %v229, %v699
    %v754 = vsub.f32 %v232, %v699
    %v755 = vsub.f32 %v235, %v699
    %v756 = vsub.f32 %v238, %v699
    %v757 = vsub.f32 %v241, %v699
    %v758 = vsub.f32 %v244, %v699
    %v759 = vsub.f32 %v247, %v699
    %v760 = vsub.f32 %v250, %v699
    %v761 = vsub.f32 %v253, %v699
    %v762 = vsub.f32 %v256, %v699
    %v763 = vsub.f32 %v259, %v699
    %v764 = vsub.f32 %v262, %v699
    %v765 = vsub.f32 %v265, %v699
    %v766 = vmul.f32 %v702, %v702
    %v767 = vmul.f32 %v703, %v703
    %v768 = vmul.f32 %v704, %v704
    %v769 = vmul.f32 %v705, %v705
    %v770 = vmul.f32 %v706, %v706
    %v771 = vmul.f32 %v707, %v707
    %v772 = vmul.f32 %v708, %v708
    %v773 = vmul.f32 %v709, %v709
    %v774 = vmul.f32 %v710, %v710
    %v775 = vmul.f32 %v711, %v711
    %v776 = vmul.f32 %v712, %v712
    %v777 = vmul.f32 %v713, %v713
    %v778 = vmul.f32 %v714, %v714
    %v779 = vmul.f32 %v715, %v715
    %v780 = vmul.f32 %v716, %v716
    %v781 = vmul.f32 %v717, %v717
    %v782 = vmul.f32 %v718, %v718
    %v783 = vmul.f32 %v719, %v719
    %v784 = vmul.f32 %v720, %v720
    %v785 = vmul.f32 %v721, %v721
    %v786 = vmul.f32 %v722, %v722
    %v787 = vmul.f32 %v723, %v723
    %v788 = vmul.f32 %v724, %v724
    %v789 = vmul.f32 %v725, %v725
    %v790 = vmul.f32 %v726, %v726
    %v791 = vmul.f32 %v727, %v727
    %v792 = vmul.f32 %v728, %v728
    %v793 = vmul.f32 %v729, %v729
    %v794 = vmul.f32 %v730, %v730
    %v795 = vmul.f32 %v731, %v731
    %v796 = vmul.f32 %v732, %v732
    %v797 = vmul.f32 %v733, %v733
    %v798 = vmul.f32 %v734, %v734
    %v799 = vmul.f32 %v735, %v735
    %v800 = vmul.f32 %v736, %v736
    %v801 = vmul.f32 %v737, %v737
    %v802 = vmul.f32 %v738, %v738
    %v803 = vmul.f32 %v739, %v739
    %v804 = vmul.f32 %v740, %v740
    %v805 = vmul.f32 %v741, %v741
    %v806 = vmul.f32 %v742, %v742
    %v807 = vmul.f32 %v743, %v743
    %v808 = vmul.f32 %v744, %v744
    %v809 = vmul.f32 %v745, %v745
    %v810 = vmul.f32 %v746, %v746
    %v811 = vmul.f32 %v747, %v747
    %v812 = vmul.f32 %v748, %v748
    %v813 = vmul.f32 %v749, %v749
    %v814 = vmul.f32 %v750, %v750
    %v815 = vmul.f32 %v751, %v751
    %v816 = vmul.f32 %v752, %v752
    %v817 = vmul.f32 %v753, %v753
    %v818 = vmul.f32 %v754, %v754
    %v819 = vmul.f32 %v755, %v755
    %v820 = vmul.f32 %v756, %v756
    %v821 = vmul.f32 %v757, %v757
    %v822 = vmul.f32 %v758, %v758
    %v823 = vmul.f32 %v759, %v759
    %v824 = vmul.f32 %v760, %v760
    %v825 = vmul.f32 %v761, %v761
    %v826 = vmul.f32 %v762, %v762
    %v827 = vmul.f32 %v763, %v763
    %v828 = vmul.f32 %v764, %v764
    %v829 = vmul.f32 %v765, %v765
    %894 = vset.pattern.permute.xlu0 0
    %895 = vperm.xlu0 %894, %v766
    %v896 = vpop.permute.xlu0 %895
    %897 = vset.pattern.permute.xlu0 0
    %898 = vperm.xlu0 %897, %v767
    %v899 = vpop.permute.xlu0 %898
    %900 = vset.pattern.permute.xlu0 0
    %901 = vperm.xlu0 %900, %v768
    %v902 = vpop.permute.xlu0 %901
    %903 = vset.pattern.permute.xlu0 0
    %904 = vperm.xlu0 %903, %v769
    %v905 = vpop.permute.xlu0 %904
    %906 = vset.pattern.permute.xlu0 0
    %907 = vperm.xlu0 %906, %v770
    %v908 = vpop.permute.xlu0 %907
    %909 = vset.pattern.permute.xlu0 0
    %910 = vperm.xlu0 %909, %v771
    %v911 = vpop.permute.xlu0 %910
    %912 = vset.pattern.permute.xlu0 0
    %913 = vperm.xlu0 %912, %v772
    %v914 = vpop.permute.xlu0 %913
    %915 = vset.pattern.permute.xlu0 0
    %916 = vperm.xlu0 %915, %v773
    %v917 = vpop.permute.xlu0 %916
    %918 = vset.pattern.permute.xlu0 0
    %919 = vperm.xlu0 %918, %v774
    %v920 = vpop.permute.xlu0 %919
    %921 = vset.pattern.permute.xlu0 0
    %922 = vperm.xlu0 %921, %v775
    %v923 = vpop.permute.xlu0 %922
    %924 = vset.pattern.permute.xlu0 0
    %925 = vperm.xlu0 %924, %v776
    %v926 = vpop.permute.xlu0 %925
    %927 = vset.pattern.permute.xlu0 0
    %928 = vperm.xlu0 %927, %v777
    %v929 = vpop.permute.xlu0 %928
    %930 = vset.pattern.permute.xlu0 0
    %931 = vperm.xlu0 %930, %v778
    %v932 = vpop.permute.xlu0 %931
    %933 = vset.pattern.permute.xlu0 0
    %934 = vperm.xlu0 %933, %v779
    %v935 = vpop.permute.xlu0 %934
    %936 = vset.pattern.permute.xlu0 0
    %937 = vperm.xlu0 %936, %v780
    %v938 = vpop.permute.xlu0 %937
    %939 = vset.pattern.permute.xlu0 0
    %940 = vperm.xlu0 %939, %v781
    %v941 = vpop.permute.xlu0 %940
    %942 = vset.pattern.permute.xlu0 0
    %943 = vperm.xlu0 %942, %v782
    %v944 = vpop.permute.xlu0 %943
    %945 = vset.pattern.permute.xlu0 0
    %946 = vperm.xlu0 %945, %v783
    %v947 = vpop.permute.xlu0 %946
    %948 = vset.pattern.permute.xlu0 0
    %949 = vperm.xlu0 %948, %v784
    %v950 = vpop.permute.xlu0 %949
    %951 = vset.pattern.permute.xlu0 0
    %952 = vperm.xlu0 %951, %v785
    %v953 = vpop.permute.xlu0 %952
    %954 = vset.pattern.permute.xlu0 0
    %955 = vperm.xlu0 %954, %v786
    %v956 = vpop.permute.xlu0 %955
    %957 = vset.pattern.permute.xlu0 0
    %958 = vperm.xlu0 %957, %v787
    %v959 = vpop.permute.xlu0 %958
    %960 = vset.pattern.permute.xlu0 0
    %961 = vperm.xlu0 %960, %v788
    %v962 = vpop.permute.xlu0 %961
    %963 = vset.pattern.permute.xlu0 0
    %964 = vperm.xlu0 %963, %v789
    %v965 = vpop.permute.xlu0 %964
    %966 = vset.pattern.permute.xlu0 0
    %967 = vperm.xlu0 %966, %v790
    %v968 = vpop.permute.xlu0 %967
    %969 = vset.pattern.permute.xlu0 0
    %970 = vperm.xlu0 %969, %v791
    %v971 = vpop.permute.xlu0 %970
    %972 = vset.pattern.permute.xlu0 0
    %973 = vperm.xlu0 %972, %v792
    %v974 = vpop.permute.xlu0 %973
    %975 = vset.pattern.permute.xlu0 0
    %976 = vperm.xlu0 %975, %v793
    %v977 = vpop.permute.xlu0 %976
    %978 = vset.pattern.permute.xlu0 0
    %979 = vperm.xlu0 %978, %v794
    %v980 = vpop.permute.xlu0 %979
    %981 = vset.pattern.permute.xlu0 0
    %982 = vperm.xlu0 %981, %v795
    %v983 = vpop.permute.xlu0 %982
    %984 = vset.pattern.permute.xlu0 0
    %985 = vperm.xlu0 %984, %v796
    %v986 = vpop.permute.xlu0 %985
    %987 = vset.pattern.permute.xlu0 0
    %988 = vperm.xlu0 %987, %v797
    %v989 = vpop.permute.xlu0 %988
    %990 = vset.pattern.permute.xlu0 0
    %991 = vperm.xlu0 %990, %v798
    %v992 = vpop.permute.xlu0 %991
    %993 = vset.pattern.permute.xlu0 0
    %994 = vperm.xlu0 %993, %v799
    %v995 = vpop.permute.xlu0 %994
    %996 = vset.pattern.permute.xlu0 0
    %997 = vperm.xlu0 %996, %v800
    %v998 = vpop.permute.xlu0 %997
    %999 = vset.pattern.permute.xlu0 0
    %1000 = vperm.xlu0 %999, %v801
    %v1001 = vpop.permute.xlu0 %1000
    %1002 = vset.pattern.permute.xlu0 0
    %1003 = vperm.xlu0 %1002, %v802
    %v1004 = vpop.permute.xlu0 %1003
    %1005 = vset.pattern.permute.xlu0 0
    %1006 = vperm.xlu0 %1005, %v803
    %v1007 = vpop.permute.xlu0 %1006
    %1008 = vset.pattern.permute.xlu0 0
    %1009 = vperm.xlu0 %1008, %v804
    %v1010 = vpop.permute.xlu0 %1009
    %1011 = vset.pattern.permute.xlu0 0
    %1012 = vperm.xlu0 %1011, %v805
    %v1013 = vpop.permute.xlu0 %1012
    %1014 = vset.pattern.permute.xlu0 0
    %1015 = vperm.xlu0 %1014, %v806
    %v1016 = vpop.permute.xlu0 %1015
    %1017 = vset.pattern.permute.xlu0 0
    %1018 = vperm.xlu0 %1017, %v807
    %v1019 = vpop.permute.xlu0 %1018
    %1020 = vset.pattern.permute.xlu0 0
    %1021 = vperm.xlu0 %1020, %v808
    %v1022 = vpop.permute.xlu0 %1021
    %1023 = vset.pattern.permute.xlu0 0
    %1024 = vperm.xlu0 %1023, %v809
    %v1025 = vpop.permute.xlu0 %1024
    %1026 = vset.pattern.permute.xlu0 0
    %1027 = vperm.xlu0 %1026, %v810
    %v1028 = vpop.permute.xlu0 %1027
    %1029 = vset.pattern.permute.xlu0 0
    %1030 = vperm.xlu0 %1029, %v811
    %v1031 = vpop.permute.xlu0 %1030
    %1032 = vset.pattern.permute.xlu0 0
    %1033 = vperm.xlu0 %1032, %v812
    %v1034 = vpop.permute.xlu0 %1033
    %1035 = vset.pattern.permute.xlu0 0
    %1036 = vperm.xlu0 %1035, %v813
    %v1037 = vpop.permute.xlu0 %1036
    %1038 = vset.pattern.permute.xlu0 0
    %1039 = vperm.xlu0 %1038, %v814
    %v1040 = vpop.permute.xlu0 %1039
    %1041 = vset.pattern.permute.xlu0 0
    %1042 = vperm.xlu0 %1041, %v815
    %v1043 = vpop.permute.xlu0 %1042
    %1044 = vset.pattern.permute.xlu0 0
    %1045 = vperm.xlu0 %1044, %v816
    %v1046 = vpop.permute.xlu0 %1045
    %1047 = vset.pattern.permute.xlu0 0
    %1048 = vperm.xlu0 %1047, %v817
    %v1049 = vpop.permute.xlu0 %1048
    %1050 = vset.pattern.permute.xlu0 0
    %1051 = vperm.xlu0 %1050, %v818
    %v1052 = vpop.permute.xlu0 %1051
    %1053 = vset.pattern.permute.xlu0 0
    %1054 = vperm.xlu0 %1053, %v819
    %v1055 = vpop.permute.xlu0 %1054
    %1056 = vset.pattern.permute.xlu0 0
    %1057 = vperm.xlu0 %1056, %v820
    %v1058 = vpop.permute.xlu0 %1057
    %1059 = vset.pattern.permute.xlu0 0
    %1060 = vperm.xlu0 %1059, %v821
    %v1061 = vpop.permute.xlu0 %1060
    %1062 = vset.pattern.permute.xlu0 0
    %1063 = vperm.xlu0 %1062, %v822
    %v1064 = vpop.permute.xlu0 %1063
    %1065 = vset.pattern.permute.xlu0 0
    %1066 = vperm.xlu0 %1065, %v823
    %v1067 = vpop.permute.xlu0 %1066
    %1068 = vset.pattern.permute.xlu0 0
    %1069 = vperm.xlu0 %1068, %v824
    %v1070 = vpop.permute.xlu0 %1069
    %1071 = vset.pattern.permute.xlu0 0
    %1072 = vperm.xlu0 %1071, %v825
    %v1073 = vpop.permute.xlu0 %1072
    %1074 = vset.pattern.permute.xlu0 0
    %1075 = vperm.xlu0 %1074, %v826
    %v1076 = vpop.permute.xlu0 %1075
    %1077 = vset.pattern.permute.xlu0 0
    %1078 = vperm.xlu0 %1077, %v827
    %v1079 = vpop.permute.xlu0 %1078
    %1080 = vset.pattern.permute.xlu0 0
    %1081 = vperm.xlu0 %1080, %v828
    %v1082 = vpop.permute.xlu0 %1081
    %1083 = vset.pattern.permute.xlu0 0
    %1084 = vperm.xlu0 %1083, %v829
    %v1085 = vpop.permute.xlu0 %1084
    %v1086 = vlaneseq
    %v1087 = vshrl.u32 %v1086, 7
    %v1088 = vsub.s32 %v331, %v1087
    %v1089 = vrot.slane %v896, %v1088
    %v1090 = vlaneseq
    %v1091 = vshrl.u32 %v1090, 7
    %v1092 = vsub.s32 %v336, %v1091
    %v1093 = vrot.slane %v899, %v1092
    %v1094 = vsel %vm341, %v1093, %v1089
    %v1095 = vlaneseq
    %v1096 = vshrl.u32 %v1095, 7
    %v1097 = vsub.s32 %v343, %v1096
    %v1098 = vrot.slane %v902, %v1097
    %v1099 = vsel %vm348, %v1098, %v1094
    %v1100 = vlaneseq
    %v1101 = vshrl.u32 %v1100, 7
    %v1102 = vsub.s32 %v350, %v1101
    %v1103 = vrot.slane %v905, %v1102
    %v1104 = vsel %vm355, %v1103, %v1099
    %v1105 = vlaneseq
    %v1106 = vshrl.u32 %v1105, 7
    %v1107 = vsub.s32 %v357, %v1106
    %v1108 = vrot.slane %v908, %v1107
    %v1109 = vsel %vm362, %v1108, %v1104
    %v1110 = vlaneseq
    %v1111 = vshrl.u32 %v1110, 7
    %v1112 = vsub.s32 %v364, %v1111
    %v1113 = vrot.slane %v911, %v1112
    %v1114 = vsel %vm369, %v1113, %v1109
    %v1115 = vlaneseq
    %v1116 = vshrl.u32 %v1115, 7
    %v1117 = vsub.s32 %v371, %v1116
    %v1118 = vrot.slane %v914, %v1117
    %v1119 = vsel %vm376, %v1118, %v1114
    %v1120 = vlaneseq
    %v1121 = vshrl.u32 %v1120, 7
    %v1122 = vsub.s32 %v378, %v1121
    %v1123 = vrot.slane %v917, %v1122
    %v1124 = vsel %vm383, %v1123, %v1119
    %v1125 = vlaneseq
    %v1126 = vshrl.u32 %v1125, 7
    %v1127 = vsub.s32 %v385, %v1126
    %v1128 = vrot.slane %v920, %v1127
    %v1129 = vsel %vm390, %v1128, %v1124
    %v1130 = vlaneseq
    %v1131 = vshrl.u32 %v1130, 7
    %v1132 = vsub.s32 %v392, %v1131
    %v1133 = vrot.slane %v923, %v1132
    %v1134 = vsel %vm397, %v1133, %v1129
    %v1135 = vlaneseq
    %v1136 = vshrl.u32 %v1135, 7
    %v1137 = vsub.s32 %v399, %v1136
    %v1138 = vrot.slane %v926, %v1137
    %v1139 = vsel %vm404, %v1138, %v1134
    %v1140 = vlaneseq
    %v1141 = vshrl.u32 %v1140, 7
    %v1142 = vsub.s32 %v406, %v1141
    %v1143 = vrot.slane %v929, %v1142
    %v1144 = vsel %vm411, %v1143, %v1139
    %v1145 = vlaneseq
    %v1146 = vshrl.u32 %v1145, 7
    %v1147 = vsub.s32 %v413, %v1146
    %v1148 = vrot.slane %v932, %v1147
    %v1149 = vsel %vm418, %v1148, %v1144
    %v1150 = vlaneseq
    %v1151 = vshrl.u32 %v1150, 7
    %v1152 = vsub.s32 %v420, %v1151
    %v1153 = vrot.slane %v935, %v1152
    %v1154 = vsel %vm425, %v1153, %v1149
    %v1155 = vlaneseq
    %v1156 = vshrl.u32 %v1155, 7
    %v1157 = vsub.s32 %v427, %v1156
    %v1158 = vrot.slane %v938, %v1157
    %v1159 = vsel %vm432, %v1158, %v1154
    %v1160 = vlaneseq
    %v1161 = vshrl.u32 %v1160, 7
    %v1162 = vsub.s32 %v434, %v1161
    %v1163 = vrot.slane %v941, %v1162
    %v1164 = vsel %vm439, %v1163, %v1159
    %v1165 = vlaneseq
    %v1166 = vshrl.u32 %v1165, 7
    %v1167 = vsub.s32 %v331, %v1166
    %v1168 = vrot.slane %v944, %v1167
    %v1169 = vlaneseq
    %v1170 = vshrl.u32 %v1169, 7
    %v1171 = vsub.s32 %v336, %v1170
    %v1172 = vrot.slane %v947, %v1171
    %v1173 = vsel %vm341, %v1172, %v1168
    %v1174 = vlaneseq
    %v1175 = vshrl.u32 %v1174, 7
    %v1176 = vsub.s32 %v343, %v1175
    %v1177 = vrot.slane %v950, %v1176
    %v1178 = vsel %vm348, %v1177, %v1173
    %v1179 = vlaneseq
    %v1180 = vshrl.u32 %v1179, 7
    %v1181 = vsub.s32 %v350, %v1180
    %v1182 = vrot.slane %v953, %v1181
    %v1183 = vsel %vm355, %v1182, %v1178
    %v1184 = vlaneseq
    %v1185 = vshrl.u32 %v1184, 7
    %v1186 = vsub.s32 %v357, %v1185
    %v1187 = vrot.slane %v956, %v1186
    %v1188 = vsel %vm362, %v1187, %v1183
    %v1189 = vlaneseq
    %v1190 = vshrl.u32 %v1189, 7
    %v1191 = vsub.s32 %v364, %v1190
    %v1192 = vrot.slane %v959, %v1191
    %v1193 = vsel %vm369, %v1192, %v1188
    %v1194 = vlaneseq
    %v1195 = vshrl.u32 %v1194, 7
    %v1196 = vsub.s32 %v371, %v1195
    %v1197 = vrot.slane %v962, %v1196
    %v1198 = vsel %vm376, %v1197, %v1193
    %v1199 = vlaneseq
    %v1200 = vshrl.u32 %v1199, 7
    %v1201 = vsub.s32 %v378, %v1200
    %v1202 = vrot.slane %v965, %v1201
    %v1203 = vsel %vm383, %v1202, %v1198
    %v1204 = vlaneseq
    %v1205 = vshrl.u32 %v1204, 7
    %v1206 = vsub.s32 %v385, %v1205
    %v1207 = vrot.slane %v968, %v1206
    %v1208 = vsel %vm390, %v1207, %v1203
    %v1209 = vlaneseq
    %v1210 = vshrl.u32 %v1209, 7
    %v1211 = vsub.s32 %v392, %v1210
    %v1212 = vrot.slane %v971, %v1211
    %v1213 = vsel %vm397, %v1212, %v1208
    %v1214 = vlaneseq
    %v1215 = vshrl.u32 %v1214, 7
    %v1216 = vsub.s32 %v399, %v1215
    %v1217 = vrot.slane %v974, %v1216
    %v1218 = vsel %vm404, %v1217, %v1213
    %v1219 = vlaneseq
    %v1220 = vshrl.u32 %v1219, 7
    %v1221 = vsub.s32 %v406, %v1220
    %v1222 = vrot.slane %v977, %v1221
    %v1223 = vsel %vm411, %v1222, %v1218
    %v1224 = vlaneseq
    %v1225 = vshrl.u32 %v1224, 7
    %v1226 = vsub.s32 %v413, %v1225
    %v1227 = vrot.slane %v980, %v1226
    %v1228 = vsel %vm418, %v1227, %v1223
    %v1229 = vlaneseq
    %v1230 = vshrl.u32 %v1229, 7
    %v1231 = vsub.s32 %v420, %v1230
    %v1232 = vrot.slane %v983, %v1231
    %v1233 = vsel %vm425, %v1232, %v1228
    %v1234 = vlaneseq
    %v1235 = vshrl.u32 %v1234, 7
    %v1236 = vsub.s32 %v427, %v1235
    %v1237 = vrot.slane %v986, %v1236
    %v1238 = vsel %vm432, %v1237, %v1233
    %v1239 = vlaneseq
    %v1240 = vshrl.u32 %v1239, 7
    %v1241 = vsub.s32 %v434, %v1240
    %v1242 = vrot.slane %v989, %v1241
    %v1243 = vsel %vm439, %v1242, %v1238
    %v1244 = vlaneseq
    %v1245 = vshrl.u32 %v1244, 7
    %v1246 = vsub.s32 %v331, %v1245
    %v1247 = vrot.slane %v992, %v1246
    %v1248 = vlaneseq
    %v1249 = vshrl.u32 %v1248, 7
    %v1250 = vsub.s32 %v336, %v1249
    %v1251 = vrot.slane %v995, %v1250
    %v1252 = vsel %vm341, %v1251, %v1247
    %v1253 = vlaneseq
    %v1254 = vshrl.u32 %v1253, 7
    %v1255 = vsub.s32 %v343, %v1254
    %v1256 = vrot.slane %v998, %v1255
    %v1257 = vsel %vm348, %v1256, %v1252
    %v1258 = vlaneseq
    %v1259 = vshrl.u32 %v1258, 7
    %v1260 = vsub.s32 %v350, %v1259
    %v1261 = vrot.slane %v1001, %v1260
    %v1262 = vsel %vm355, %v1261, %v1257
    %v1263 = vlaneseq
    %v1264 = vshrl.u32 %v1263, 7
    %v1265 = vsub.s32 %v357, %v1264
    %v1266 = vrot.slane %v1004, %v1265
    %v1267 = vsel %vm362, %v1266, %v1262
    %v1268 = vlaneseq
    %v1269 = vshrl.u32 %v1268, 7
    %v1270 = vsub.s32 %v364, %v1269
    %v1271 = vrot.slane %v1007, %v1270
    %v1272 = vsel %vm369, %v1271, %v1267
    %v1273 = vlaneseq
    %v1274 = vshrl.u32 %v1273, 7
    %v1275 = vsub.s32 %v371, %v1274
    %v1276 = vrot.slane %v1010, %v1275
    %v1277 = vsel %vm376, %v1276, %v1272
    %v1278 = vlaneseq
    %v1279 = vshrl.u32 %v1278, 7
    %v1280 = vsub.s32 %v378, %v1279
    %v1281 = vrot.slane %v1013, %v1280
    %v1282 = vsel %vm383, %v1281, %v1277
    %v1283 = vlaneseq
    %v1284 = vshrl.u32 %v1283, 7
    %v1285 = vsub.s32 %v385, %v1284
    %v1286 = vrot.slane %v1016, %v1285
    %v1287 = vsel %vm390, %v1286, %v1282
    %v1288 = vlaneseq
    %v1289 = vshrl.u32 %v1288, 7
    %v1290 = vsub.s32 %v392, %v1289
    %v1291 = vrot.slane %v1019, %v1290
    %v1292 = vsel %vm397, %v1291, %v1287
    %v1293 = vlaneseq
    %v1294 = vshrl.u32 %v1293, 7
    %v1295 = vsub.s32 %v399, %v1294
    %v1296 = vrot.slane %v1022, %v1295
    %v1297 = vsel %vm404, %v1296, %v1292
    %v1298 = vlaneseq
    %v1299 = vshrl.u32 %v1298, 7
    %v1300 = vsub.s32 %v406, %v1299
    %v1301 = vrot.slane %v1025, %v1300
    %v1302 = vsel %vm411, %v1301, %v1297
    %v1303 = vlaneseq
    %v1304 = vshrl.u32 %v1303, 7
    %v1305 = vsub.s32 %v413, %v1304
    %v1306 = vrot.slane %v1028, %v1305
    %v1307 = vsel %vm418, %v1306, %v1302
    %v1308 = vlaneseq
    %v1309 = vshrl.u32 %v1308, 7
    %v1310 = vsub.s32 %v420, %v1309
    %v1311 = vrot.slane %v1031, %v1310
    %v1312 = vsel %vm425, %v1311, %v1307
    %v1313 = vlaneseq
    %v1314 = vshrl.u32 %v1313, 7
    %v1315 = vsub.s32 %v427, %v1314
    %v1316 = vrot.slane %v1034, %v1315
    %v1317 = vsel %vm432, %v1316, %v1312
    %v1318 = vlaneseq
    %v1319 = vshrl.u32 %v1318, 7
    %v1320 = vsub.s32 %v434, %v1319
    %v1321 = vrot.slane %v1037, %v1320
    %v1322 = vsel %vm439, %v1321, %v1317
    %v1323 = vlaneseq
    %v1324 = vshrl.u32 %v1323, 7
    %v1325 = vsub.s32 %v331, %v1324
    %v1326 = vrot.slane %v1040, %v1325
    %v1327 = vlaneseq
    %v1328 = vshrl.u32 %v1327, 7
    %v1329 = vsub.s32 %v336, %v1328
    %v1330 = vrot.slane %v1043, %v1329
    %v1331 = vsel %vm341, %v1330, %v1326
    %v1332 = vlaneseq
    %v1333 = vshrl.u32 %v1332, 7
    %v1334 = vsub.s32 %v343, %v1333
    %v1335 = vrot.slane %v1046, %v1334
    %v1336 = vsel %vm348, %v1335, %v1331
    %v1337 = vlaneseq
    %v1338 = vshrl.u32 %v1337, 7
    %v1339 = vsub.s32 %v350, %v1338
    %v1340 = vrot.slane %v1049, %v1339
    %v1341 = vsel %vm355, %v1340, %v1336
    %v1342 = vlaneseq
    %v1343 = vshrl.u32 %v1342, 7
    %v1344 = vsub.s32 %v357, %v1343
    %v1345 = vrot.slane %v1052, %v1344
    %v1346 = vsel %vm362, %v1345, %v1341
    %v1347 = vlaneseq
    %v1348 = vshrl.u32 %v1347, 7
    %v1349 = vsub.s32 %v364, %v1348
    %v1350 = vrot.slane %v1055, %v1349
    %v1351 = vsel %vm369, %v1350, %v1346
    %v1352 = vlaneseq
    %v1353 = vshrl.u32 %v1352, 7
    %v1354 = vsub.s32 %v371, %v1353
    %v1355 = vrot.slane %v1058, %v1354
    %v1356 = vsel %vm376, %v1355, %v1351
    %v1357 = vlaneseq
    %v1358 = vshrl.u32 %v1357, 7
    %v1359 = vsub.s32 %v378, %v1358
    %v1360 = vrot.slane %v1061, %v1359
    %v1361 = vsel %vm383, %v1360, %v1356
    %v1362 = vlaneseq
    %v1363 = vshrl.u32 %v1362, 7
    %v1364 = vsub.s32 %v385, %v1363
    %v1365 = vrot.slane %v1064, %v1364
    %v1366 = vsel %vm390, %v1365, %v1361
    %v1367 = vlaneseq
    %v1368 = vshrl.u32 %v1367, 7
    %v1369 = vsub.s32 %v392, %v1368
    %v1370 = vrot.slane %v1067, %v1369
    %v1371 = vsel %vm397, %v1370, %v1366
    %v1372 = vlaneseq
    %v1373 = vshrl.u32 %v1372, 7
    %v1374 = vsub.s32 %v399, %v1373
    %v1375 = vrot.slane %v1070, %v1374
    %v1376 = vsel %vm404, %v1375, %v1371
    %v1377 = vlaneseq
    %v1378 = vshrl.u32 %v1377, 7
    %v1379 = vsub.s32 %v406, %v1378
    %v1380 = vrot.slane %v1073, %v1379
    %v1381 = vsel %vm411, %v1380, %v1376
    %v1382 = vlaneseq
    %v1383 = vshrl.u32 %v1382, 7
    %v1384 = vsub.s32 %v413, %v1383
    %v1385 = vrot.slane %v1076, %v1384
    %v1386 = vsel %vm418, %v1385, %v1381
    %v1387 = vlaneseq
    %v1388 = vshrl.u32 %v1387, 7
    %v1389 = vsub.s32 %v420, %v1388
    %v1390 = vrot.slane %v1079, %v1389
    %v1391 = vsel %vm425, %v1390, %v1386
    %v1392 = vlaneseq
    %v1393 = vshrl.u32 %v1392, 7
    %v1394 = vsub.s32 %v427, %v1393
    %v1395 = vrot.slane %v1082, %v1394
    %v1396 = vsel %vm432, %v1395, %v1391
    %v1397 = vlaneseq
    %v1398 = vshrl.u32 %v1397, 7
    %v1399 = vsub.s32 %v434, %v1398
    %v1400 = vrot.slane %v1085, %v1399
    %v1401 = vsel %vm439, %v1400, %v1396
    %v1402 = vsel %vm678, %v1322, %v1164
    %v1403 = vsel %vm678, %v1401, %v1243
    %v1406 = vsel %vm683, %v1402, 0.0
    %v1407 = vsel %vm683, %v1403, 0.0
    %v1408 = vadd.f32 %v1406, %v1407
    %1409 = vadd.xlane.f32.xlu0 %v1408
    %v1410 = vpop.xlane.xlu0 %1409
    %v1411 = vmul.f32 %v1410, %v689
    %v1412 = vadd.f32 %v1411, 1e-05
    %v1413 = vrsqrt.pop %v1412
    %v1415 = vlaneseq
    %v1416 = vshrl.u32 %v1415, 7
    %v1417 = vsub.s32 0, %v1416
    %v1418 = vrot.slane %v1413, %v1417
    %v1419 = vlaneseq
    %v1420 = vshrl.u32 %v1419, 7
    %v1421 = vsub.s32 1, %v1420
    %v1422 = vrot.slane %v1413, %v1421
    %v1425 = vmul.f32 %v702, %v1418
    %v1426 = vmul.f32 %v703, %v1418
    %v1427 = vmul.f32 %v704, %v1418
    %v1428 = vmul.f32 %v705, %v1418
    %v1429 = vmul.f32 %v706, %v1418
    %v1430 = vmul.f32 %v707, %v1418
    %v1431 = vmul.f32 %v708, %v1418
    %v1432 = vmul.f32 %v709, %v1418
    %v1433 = vmul.f32 %v710, %v1418
    %v1434 = vmul.f32 %v711, %v1418
    %v1435 = vmul.f32 %v712, %v1418
    %v1436 = vmul.f32 %v713, %v1418
    %v1437 = vmul.f32 %v714, %v1418
    %v1438 = vmul.f32 %v715, %v1418
    %v1439 = vmul.f32 %v716, %v1418
    %v1440 = vmul.f32 %v717, %v1418
    %v1441 = vmul.f32 %v718, %v1418
    %v1442 = vmul.f32 %v719, %v1418
    %v1443 = vmul.f32 %v720, %v1418
    %v1444 = vmul.f32 %v721, %v1418
    %v1445 = vmul.f32 %v722, %v1418
    %v1446 = vmul.f32 %v723, %v1418
    %v1447 = vmul.f32 %v724, %v1418
    %v1448 = vmul.f32 %v725, %v1418
    %v1449 = vmul.f32 %v726, %v1418
    %v1450 = vmul.f32 %v727, %v1418
    %v1451 = vmul.f32 %v728, %v1418
    %v1452 = vmul.f32 %v729, %v1418
    %v1453 = vmul.f32 %v730, %v1418
    %v1454 = vmul.f32 %v731, %v1418
    %v1455 = vmul.f32 %v732, %v1418
    %v1456 = vmul.f32 %v733, %v1418
    %v1457 = vmul.f32 %v734, %v1422
    %v1458 = vmul.f32 %v735, %v1422
    %v1459 = vmul.f32 %v736, %v1422
    %v1460 = vmul.f32 %v737, %v1422
    %v1461 = vmul.f32 %v738, %v1422
    %v1462 = vmul.f32 %v739, %v1422
    %v1463 = vmul.f32 %v740, %v1422
    %v1464 = vmul.f32 %v741, %v1422
    %v1465 = vmul.f32 %v742, %v1422
    %v1466 = vmul.f32 %v743, %v1422
    %v1467 = vmul.f32 %v744, %v1422
    %v1468 = vmul.f32 %v745, %v1422
    %v1469 = vmul.f32 %v746, %v1422
    %v1470 = vmul.f32 %v747, %v1422
    %v1471 = vmul.f32 %v748, %v1422
    %v1472 = vmul.f32 %v749, %v1422
    %v1473 = vmul.f32 %v750, %v1422
    %v1474 = vmul.f32 %v751, %v1422
    %v1475 = vmul.f32 %v752, %v1422
    %v1476 = vmul.f32 %v753, %v1422
    %v1477 = vmul.f32 %v754, %v1422
    %v1478 = vmul.f32 %v755, %v1422
    %v1479 = vmul.f32 %v756, %v1422
    %v1480 = vmul.f32 %v757, %v1422
    %v1481 = vmul.f32 %v758, %v1422
    %v1482 = vmul.f32 %v759, %v1422
    %v1483 = vmul.f32 %v760, %v1422
    %v1484 = vmul.f32 %v761, %v1422
    %v1485 = vmul.f32 %v762, %v1422
    %v1486 = vmul.f32 %v763, %v1422
    %v1487 = vmul.f32 %v764, %v1422
    %v1488 = vmul.f32 %v765, %v1422
    %v1553 = vcombine.high %v1425, %v1425
    %v1555 = vunpack.c.l.s4 1983009808
    %v1556 = vunpack.c.0.s8 %v1555
    %v1557 = vlaneseq
    %v1558 = vshrl.u32 %v1557, 7
    %v1559 = vsub.s32 %v1556, %v1558
    %v1560 = vrot.slane %v1425, %v1559
    %v1562 = vunpack.c.l.s4 1983009808
    %v1563 = vunpack.c.0.s8 %v1562
    %v1564 = vlaneseq
    %v1565 = vshrl.u32 %v1564, 7
    %v1566 = vsub.s32 %v1563, %v1565
    %v1567 = vrot.slane %v1553, %v1566
    %v1568 = vcombine.high %v1560, %v1560
    %v1569 = vcombine.high %v1567, %v1567
    %v1570 = vcombine.high %v1426, %v1426
    %v1572 = vunpack.c.l.s4 1983009808
    %v1573 = vunpack.c.0.s8 %v1572
    %v1574 = vlaneseq
    %v1575 = vshrl.u32 %v1574, 7
    %v1576 = vsub.s32 %v1573, %v1575
    %v1577 = vrot.slane %v1426, %v1576
    %v1579 = vunpack.c.l.s4 1983009808
    %v1580 = vunpack.c.0.s8 %v1579
    %v1581 = vlaneseq
    %v1582 = vshrl.u32 %v1581, 7
    %v1583 = vsub.s32 %v1580, %v1582
    %v1584 = vrot.slane %v1570, %v1583
    %v1585 = vcombine.high %v1577, %v1577
    %v1586 = vcombine.high %v1584, %v1584
    %v1587 = vcombine.high %v1427, %v1427
    %v1589 = vunpack.c.l.s4 1983009808
    %v1590 = vunpack.c.0.s8 %v1589
    %v1591 = vlaneseq
    %v1592 = vshrl.u32 %v1591, 7
    %v1593 = vsub.s32 %v1590, %v1592
    %v1594 = vrot.slane %v1427, %v1593
    %v1596 = vunpack.c.l.s4 1983009808
    %v1597 = vunpack.c.0.s8 %v1596
    %v1598 = vlaneseq
    %v1599 = vshrl.u32 %v1598, 7
    %v1600 = vsub.s32 %v1597, %v1599
    %v1601 = vrot.slane %v1587, %v1600
    %v1602 = vcombine.high %v1594, %v1594
    %v1603 = vcombine.high %v1601, %v1601
    %v1604 = vcombine.high %v1428, %v1428
    %v1606 = vunpack.c.l.s4 1983009808
    %v1607 = vunpack.c.0.s8 %v1606
    %v1608 = vlaneseq
    %v1609 = vshrl.u32 %v1608, 7
    %v1610 = vsub.s32 %v1607, %v1609
    %v1611 = vrot.slane %v1428, %v1610
    %v1613 = vunpack.c.l.s4 1983009808
    %v1614 = vunpack.c.0.s8 %v1613
    %v1615 = vlaneseq
    %v1616 = vshrl.u32 %v1615, 7
    %v1617 = vsub.s32 %v1614, %v1616
    %v1618 = vrot.slane %v1604, %v1617
    %v1619 = vcombine.high %v1611, %v1611
    %v1620 = vcombine.high %v1618, %v1618
    %v1621 = vcombine.high %v1429, %v1429
    %v1623 = vunpack.c.l.s4 1983009808
    %v1624 = vunpack.c.0.s8 %v1623
    %v1625 = vlaneseq
    %v1626 = vshrl.u32 %v1625, 7
    %v1627 = vsub.s32 %v1624, %v1626
    %v1628 = vrot.slane %v1429, %v1627
    %v1630 = vunpack.c.l.s4 1983009808
    %v1631 = vunpack.c.0.s8 %v1630
    %v1632 = vlaneseq
    %v1633 = vshrl.u32 %v1632, 7
    %v1634 = vsub.s32 %v1631, %v1633
    %v1635 = vrot.slane %v1621, %v1634
    %v1636 = vcombine.high %v1628, %v1628
    %v1637 = vcombine.high %v1635, %v1635
    %v1638 = vcombine.high %v1430, %v1430
    %v1640 = vunpack.c.l.s4 1983009808
    %v1641 = vunpack.c.0.s8 %v1640
    %v1642 = vlaneseq
    %v1643 = vshrl.u32 %v1642, 7
    %v1644 = vsub.s32 %v1641, %v1643
    %v1645 = vrot.slane %v1430, %v1644
    %v1647 = vunpack.c.l.s4 1983009808
    %v1648 = vunpack.c.0.s8 %v1647
    %v1649 = vlaneseq
    %v1650 = vshrl.u32 %v1649, 7
    %v1651 = vsub.s32 %v1648, %v1650
    %v1652 = vrot.slane %v1638, %v1651
    %v1653 = vcombine.high %v1645, %v1645
    %v1654 = vcombine.high %v1652, %v1652
    %v1655 = vcombine.high %v1431, %v1431
    %v1657 = vunpack.c.l.s4 1983009808
    %v1658 = vunpack.c.0.s8 %v1657
    %v1659 = vlaneseq
    %v1660 = vshrl.u32 %v1659, 7
    %v1661 = vsub.s32 %v1658, %v1660
    %v1662 = vrot.slane %v1431, %v1661
    %v1664 = vunpack.c.l.s4 1983009808
    %v1665 = vunpack.c.0.s8 %v1664
    %v1666 = vlaneseq
    %v1667 = vshrl.u32 %v1666, 7
    %v1668 = vsub.s32 %v1665, %v1667
    %v1669 = vrot.slane %v1655, %v1668
    %v1670 = vcombine.high %v1662, %v1662
    %v1671 = vcombine.high %v1669, %v1669
    %v1672 = vcombine.high %v1432, %v1432
    %v1674 = vunpack.c.l.s4 1983009808
    %v1675 = vunpack.c.0.s8 %v1674
    %v1676 = vlaneseq
    %v1677 = vshrl.u32 %v1676, 7
    %v1678 = vsub.s32 %v1675, %v1677
    %v1679 = vrot.slane %v1432, %v1678
    %v1681 = vunpack.c.l.s4 1983009808
    %v1682 = vunpack.c.0.s8 %v1681
    %v1683 = vlaneseq
    %v1684 = vshrl.u32 %v1683, 7
    %v1685 = vsub.s32 %v1682, %v1684
    %v1686 = vrot.slane %v1672, %v1685
    %v1687 = vcombine.high %v1679, %v1679
    %v1688 = vcombine.high %v1686, %v1686
    %v1689 = vcombine.high %v1433, %v1433
    %v1691 = vunpack.c.l.s4 1983009808
    %v1692 = vunpack.c.0.s8 %v1691
    %v1693 = vlaneseq
    %v1694 = vshrl.u32 %v1693, 7
    %v1695 = vsub.s32 %v1692, %v1694
    %v1696 = vrot.slane %v1433, %v1695
    %v1698 = vunpack.c.l.s4 1983009808
    %v1699 = vunpack.c.0.s8 %v1698
    %v1700 = vlaneseq
    %v1701 = vshrl.u32 %v1700, 7
    %v1702 = vsub.s32 %v1699, %v1701
    %v1703 = vrot.slane %v1689, %v1702
    %v1704 = vcombine.high %v1696, %v1696
    %v1705 = vcombine.high %v1703, %v1703
    %v1706 = vcombine.high %v1434, %v1434
    %v1708 = vunpack.c.l.s4 1983009808
    %v1709 = vunpack.c.0.s8 %v1708
    %v1710 = vlaneseq
    %v1711 = vshrl.u32 %v1710, 7
    %v1712 = vsub.s32 %v1709, %v1711
    %v1713 = vrot.slane %v1434, %v1712
    %v1715 = vunpack.c.l.s4 1983009808
    %v1716 = vunpack.c.0.s8 %v1715
    %v1717 = vlaneseq
    %v1718 = vshrl.u32 %v1717, 7
    %v1719 = vsub.s32 %v1716, %v1718
    %v1720 = vrot.slane %v1706, %v1719
    %v1721 = vcombine.high %v1713, %v1713
    %v1722 = vcombine.high %v1720, %v1720
    %v1723 = vcombine.high %v1435, %v1435
    %v1725 = vunpack.c.l.s4 1983009808
    %v1726 = vunpack.c.0.s8 %v1725
    %v1727 = vlaneseq
    %v1728 = vshrl.u32 %v1727, 7
    %v1729 = vsub.s32 %v1726, %v1728
    %v1730 = vrot.slane %v1435, %v1729
    %v1732 = vunpack.c.l.s4 1983009808
    %v1733 = vunpack.c.0.s8 %v1732
    %v1734 = vlaneseq
    %v1735 = vshrl.u32 %v1734, 7
    %v1736 = vsub.s32 %v1733, %v1735
    %v1737 = vrot.slane %v1723, %v1736
    %v1738 = vcombine.high %v1730, %v1730
    %v1739 = vcombine.high %v1737, %v1737
    %v1740 = vcombine.high %v1436, %v1436
    %v1742 = vunpack.c.l.s4 1983009808
    %v1743 = vunpack.c.0.s8 %v1742
    %v1744 = vlaneseq
    %v1745 = vshrl.u32 %v1744, 7
    %v1746 = vsub.s32 %v1743, %v1745
    %v1747 = vrot.slane %v1436, %v1746
    %v1749 = vunpack.c.l.s4 1983009808
    %v1750 = vunpack.c.0.s8 %v1749
    %v1751 = vlaneseq
    %v1752 = vshrl.u32 %v1751, 7
    %v1753 = vsub.s32 %v1750, %v1752
    %v1754 = vrot.slane %v1740, %v1753
    %v1755 = vcombine.high %v1747, %v1747
    %v1756 = vcombine.high %v1754, %v1754
    %v1757 = vcombine.high %v1437, %v1437
    %v1759 = vunpack.c.l.s4 1983009808
    %v1760 = vunpack.c.0.s8 %v1759
    %v1761 = vlaneseq
    %v1762 = vshrl.u32 %v1761, 7
    %v1763 = vsub.s32 %v1760, %v1762
    %v1764 = vrot.slane %v1437, %v1763
    %v1766 = vunpack.c.l.s4 1983009808
    %v1767 = vunpack.c.0.s8 %v1766
    %v1768 = vlaneseq
    %v1769 = vshrl.u32 %v1768, 7
    %v1770 = vsub.s32 %v1767, %v1769
    %v1771 = vrot.slane %v1757, %v1770
    %v1772 = vcombine.high %v1764, %v1764
    %v1773 = vcombine.high %v1771, %v1771
    %v1774 = vcombine.high %v1438, %v1438
    %v1776 = vunpack.c.l.s4 1983009808
    %v1777 = vunpack.c.0.s8 %v1776
    %v1778 = vlaneseq
    %v1779 = vshrl.u32 %v1778, 7
    %v1780 = vsub.s32 %v1777, %v1779
    %v1781 = vrot.slane %v1438, %v1780
    %v1783 = vunpack.c.l.s4 1983009808
    %v1784 = vunpack.c.0.s8 %v1783
    %v1785 = vlaneseq
    %v1786 = vshrl.u32 %v1785, 7
    %v1787 = vsub.s32 %v1784, %v1786
    %v1788 = vrot.slane %v1774, %v1787
    %v1789 = vcombine.high %v1781, %v1781
    %v1790 = vcombine.high %v1788, %v1788
    %v1791 = vcombine.high %v1439, %v1439
    %v1793 = vunpack.c.l.s4 1983009808
    %v1794 = vunpack.c.0.s8 %v1793
    %v1795 = vlaneseq
    %v1796 = vshrl.u32 %v1795, 7
    %v1797 = vsub.s32 %v1794, %v1796
    %v1798 = vrot.slane %v1439, %v1797
    %v1800 = vunpack.c.l.s4 1983009808
    %v1801 = vunpack.c.0.s8 %v1800
    %v1802 = vlaneseq
    %v1803 = vshrl.u32 %v1802, 7
    %v1804 = vsub.s32 %v1801, %v1803
    %v1805 = vrot.slane %v1791, %v1804
    %v1806 = vcombine.high %v1798, %v1798
    %v1807 = vcombine.high %v1805, %v1805
    %v1808 = vcombine.high %v1440, %v1440
    %v1810 = vunpack.c.l.s4 1983009808
    %v1811 = vunpack.c.0.s8 %v1810
    %v1812 = vlaneseq
    %v1813 = vshrl.u32 %v1812, 7
    %v1814 = vsub.s32 %v1811, %v1813
    %v1815 = vrot.slane %v1440, %v1814
    %v1817 = vunpack.c.l.s4 1983009808
    %v1818 = vunpack.c.0.s8 %v1817
    %v1819 = vlaneseq
    %v1820 = vshrl.u32 %v1819, 7
    %v1821 = vsub.s32 %v1818, %v1820
    %v1822 = vrot.slane %v1808, %v1821
    %v1823 = vcombine.high %v1815, %v1815
    %v1824 = vcombine.high %v1822, %v1822
    %v1825 = vcombine.high %v1441, %v1441
    %v1827 = vunpack.c.l.s4 1983009808
    %v1828 = vunpack.c.0.s8 %v1827
    %v1829 = vlaneseq
    %v1830 = vshrl.u32 %v1829, 7
    %v1831 = vsub.s32 %v1828, %v1830
    %v1832 = vrot.slane %v1441, %v1831
    %v1834 = vunpack.c.l.s4 1983009808
    %v1835 = vunpack.c.0.s8 %v1834
    %v1836 = vlaneseq
    %v1837 = vshrl.u32 %v1836, 7
    %v1838 = vsub.s32 %v1835, %v1837
    %v1839 = vrot.slane %v1825, %v1838
    %v1840 = vcombine.high %v1832, %v1832
    %v1841 = vcombine.high %v1839, %v1839
    %v1842 = vcombine.high %v1442, %v1442
    %v1844 = vunpack.c.l.s4 1983009808
    %v1845 = vunpack.c.0.s8 %v1844
    %v1846 = vlaneseq
    %v1847 = vshrl.u32 %v1846, 7
    %v1848 = vsub.s32 %v1845, %v1847
    %v1849 = vrot.slane %v1442, %v1848
    %v1851 = vunpack.c.l.s4 1983009808
    %v1852 = vunpack.c.0.s8 %v1851
    %v1853 = vlaneseq
    %v1854 = vshrl.u32 %v1853, 7
    %v1855 = vsub.s32 %v1852, %v1854
    %v1856 = vrot.slane %v1842, %v1855
    %v1857 = vcombine.high %v1849, %v1849
    %v1858 = vcombine.high %v1856, %v1856
    %v1859 = vcombine.high %v1443, %v1443
    %v1861 = vunpack.c.l.s4 1983009808
    %v1862 = vunpack.c.0.s8 %v1861
    %v1863 = vlaneseq
    %v1864 = vshrl.u32 %v1863, 7
    %v1865 = vsub.s32 %v1862, %v1864
    %v1866 = vrot.slane %v1443, %v1865
    %v1868 = vunpack.c.l.s4 1983009808
    %v1869 = vunpack.c.0.s8 %v1868
    %v1870 = vlaneseq
    %v1871 = vshrl.u32 %v1870, 7
    %v1872 = vsub.s32 %v1869, %v1871
    %v1873 = vrot.slane %v1859, %v1872
    %v1874 = vcombine.high %v1866, %v1866
    %v1875 = vcombine.high %v1873, %v1873
    %v1876 = vcombine.high %v1444, %v1444
    %v1878 = vunpack.c.l.s4 1983009808
    %v1879 = vunpack.c.0.s8 %v1878
    %v1880 = vlaneseq
    %v1881 = vshrl.u32 %v1880, 7
    %v1882 = vsub.s32 %v1879, %v1881
    %v1883 = vrot.slane %v1444, %v1882
    %v1885 = vunpack.c.l.s4 1983009808
    %v1886 = vunpack.c.0.s8 %v1885
    %v1887 = vlaneseq
    %v1888 = vshrl.u32 %v1887, 7
    %v1889 = vsub.s32 %v1886, %v1888
    %v1890 = vrot.slane %v1876, %v1889
    %v1891 = vcombine.high %v1883, %v1883
    %v1892 = vcombine.high %v1890, %v1890
    %v1893 = vcombine.high %v1445, %v1445
    %v1895 = vunpack.c.l.s4 1983009808
    %v1896 = vunpack.c.0.s8 %v1895
    %v1897 = vlaneseq
    %v1898 = vshrl.u32 %v1897, 7
    %v1899 = vsub.s32 %v1896, %v1898
    %v1900 = vrot.slane %v1445, %v1899
    %v1902 = vunpack.c.l.s4 1983009808
    %v1903 = vunpack.c.0.s8 %v1902
    %v1904 = vlaneseq
    %v1905 = vshrl.u32 %v1904, 7
    %v1906 = vsub.s32 %v1903, %v1905
    %v1907 = vrot.slane %v1893, %v1906
    %v1908 = vcombine.high %v1900, %v1900
    %v1909 = vcombine.high %v1907, %v1907
    %v1910 = vcombine.high %v1446, %v1446
    %v1912 = vunpack.c.l.s4 1983009808
    %v1913 = vunpack.c.0.s8 %v1912
    %v1914 = vlaneseq
    %v1915 = vshrl.u32 %v1914, 7
    %v1916 = vsub.s32 %v1913, %v1915
    %v1917 = vrot.slane %v1446, %v1916
    %v1919 = vunpack.c.l.s4 1983009808
    %v1920 = vunpack.c.0.s8 %v1919
    %v1921 = vlaneseq
    %v1922 = vshrl.u32 %v1921, 7
    %v1923 = vsub.s32 %v1920, %v1922
    %v1924 = vrot.slane %v1910, %v1923
    %v1925 = vcombine.high %v1917, %v1917
    %v1926 = vcombine.high %v1924, %v1924
    %v1927 = vcombine.high %v1447, %v1447
    %v1929 = vunpack.c.l.s4 1983009808
    %v1930 = vunpack.c.0.s8 %v1929
    %v1931 = vlaneseq
    %v1932 = vshrl.u32 %v1931, 7
    %v1933 = vsub.s32 %v1930, %v1932
    %v1934 = vrot.slane %v1447, %v1933
    %v1936 = vunpack.c.l.s4 1983009808
    %v1937 = vunpack.c.0.s8 %v1936
    %v1938 = vlaneseq
    %v1939 = vshrl.u32 %v1938, 7
    %v1940 = vsub.s32 %v1937, %v1939
    %v1941 = vrot.slane %v1927, %v1940
    %v1942 = vcombine.high %v1934, %v1934
    %v1943 = vcombine.high %v1941, %v1941
    %v1944 = vcombine.high %v1448, %v1448
    %v1946 = vunpack.c.l.s4 1983009808
    %v1947 = vunpack.c.0.s8 %v1946
    %v1948 = vlaneseq
    %v1949 = vshrl.u32 %v1948, 7
    %v1950 = vsub.s32 %v1947, %v1949
    %v1951 = vrot.slane %v1448, %v1950
    %v1953 = vunpack.c.l.s4 1983009808
    %v1954 = vunpack.c.0.s8 %v1953
    %v1955 = vlaneseq
    %v1956 = vshrl.u32 %v1955, 7
    %v1957 = vsub.s32 %v1954, %v1956
    %v1958 = vrot.slane %v1944, %v1957
    %v1959 = vcombine.high %v1951, %v1951
    %v1960 = vcombine.high %v1958, %v1958
    %v1961 = vcombine.high %v1449, %v1449
    %v1963 = vunpack.c.l.s4 1983009808
    %v1964 = vunpack.c.0.s8 %v1963
    %v1965 = vlaneseq
    %v1966 = vshrl.u32 %v1965, 7
    %v1967 = vsub.s32 %v1964, %v1966
    %v1968 = vrot.slane %v1449, %v1967
    %v1970 = vunpack.c.l.s4 1983009808
    %v1971 = vunpack.c.0.s8 %v1970
    %v1972 = vlaneseq
    %v1973 = vshrl.u32 %v1972, 7
    %v1974 = vsub.s32 %v1971, %v1973
    %v1975 = vrot.slane %v1961, %v1974
    %v1976 = vcombine.high %v1968, %v1968
    %v1977 = vcombine.high %v1975, %v1975
    %v1978 = vcombine.high %v1450, %v1450
    %v1980 = vunpack.c.l.s4 1983009808
    %v1981 = vunpack.c.0.s8 %v1980
    %v1982 = vlaneseq
    %v1983 = vshrl.u32 %v1982, 7
    %v1984 = vsub.s32 %v1981, %v1983
    %v1985 = vrot.slane %v1450, %v1984
    %v1987 = vunpack.c.l.s4 1983009808
    %v1988 = vunpack.c.0.s8 %v1987
    %v1989 = vlaneseq
    %v1990 = vshrl.u32 %v1989, 7
    %v1991 = vsub.s32 %v1988, %v1990
    %v1992 = vrot.slane %v1978, %v1991
    %v1993 = vcombine.high %v1985, %v1985
    %v1994 = vcombine.high %v1992, %v1992
    %v1995 = vcombine.high %v1451, %v1451
    %v1997 = vunpack.c.l.s4 1983009808
    %v1998 = vunpack.c.0.s8 %v1997
    %v1999 = vlaneseq
    %v2000 = vshrl.u32 %v1999, 7
    %v2001 = vsub.s32 %v1998, %v2000
    %v2002 = vrot.slane %v1451, %v2001
    %v2004 = vunpack.c.l.s4 1983009808
    %v2005 = vunpack.c.0.s8 %v2004
    %v2006 = vlaneseq
    %v2007 = vshrl.u32 %v2006, 7
    %v2008 = vsub.s32 %v2005, %v2007
    %v2009 = vrot.slane %v1995, %v2008
    %v2010 = vcombine.high %v2002, %v2002
    %v2011 = vcombine.high %v2009, %v2009
    %v2012 = vcombine.high %v1452, %v1452
    %v2014 = vunpack.c.l.s4 1983009808
    %v2015 = vunpack.c.0.s8 %v2014
    %v2016 = vlaneseq
    %v2017 = vshrl.u32 %v2016, 7
    %v2018 = vsub.s32 %v2015, %v2017
    %v2019 = vrot.slane %v1452, %v2018
    %v2021 = vunpack.c.l.s4 1983009808
    %v2022 = vunpack.c.0.s8 %v2021
    %v2023 = vlaneseq
    %v2024 = vshrl.u32 %v2023, 7
    %v2025 = vsub.s32 %v2022, %v2024
    %v2026 = vrot.slane %v2012, %v2025
    %v2027 = vcombine.high %v2019, %v2019
    %v2028 = vcombine.high %v2026, %v2026
    %v2029 = vcombine.high %v1453, %v1453
    %v2031 = vunpack.c.l.s4 1983009808
    %v2032 = vunpack.c.0.s8 %v2031
    %v2033 = vlaneseq
    %v2034 = vshrl.u32 %v2033, 7
    %v2035 = vsub.s32 %v2032, %v2034
    %v2036 = vrot.slane %v1453, %v2035
    %v2038 = vunpack.c.l.s4 1983009808
    %v2039 = vunpack.c.0.s8 %v2038
    %v2040 = vlaneseq
    %v2041 = vshrl.u32 %v2040, 7
    %v2042 = vsub.s32 %v2039, %v2041
    %v2043 = vrot.slane %v2029, %v2042
    %v2044 = vcombine.high %v2036, %v2036
    %v2045 = vcombine.high %v2043, %v2043
    %v2046 = vcombine.high %v1454, %v1454
    %v2048 = vunpack.c.l.s4 1983009808
    %v2049 = vunpack.c.0.s8 %v2048
    %v2050 = vlaneseq
    %v2051 = vshrl.u32 %v2050, 7
    %v2052 = vsub.s32 %v2049, %v2051
    %v2053 = vrot.slane %v1454, %v2052
    %v2055 = vunpack.c.l.s4 1983009808
    %v2056 = vunpack.c.0.s8 %v2055
    %v2057 = vlaneseq
    %v2058 = vshrl.u32 %v2057, 7
    %v2059 = vsub.s32 %v2056, %v2058
    %v2060 = vrot.slane %v2046, %v2059
    %v2061 = vcombine.high %v2053, %v2053
    %v2062 = vcombine.high %v2060, %v2060
    %v2063 = vcombine.high %v1455, %v1455
    %v2065 = vunpack.c.l.s4 1983009808
    %v2066 = vunpack.c.0.s8 %v2065
    %v2067 = vlaneseq
    %v2068 = vshrl.u32 %v2067, 7
    %v2069 = vsub.s32 %v2066, %v2068
    %v2070 = vrot.slane %v1455, %v2069
    %v2072 = vunpack.c.l.s4 1983009808
    %v2073 = vunpack.c.0.s8 %v2072
    %v2074 = vlaneseq
    %v2075 = vshrl.u32 %v2074, 7
    %v2076 = vsub.s32 %v2073, %v2075
    %v2077 = vrot.slane %v2063, %v2076
    %v2078 = vcombine.high %v2070, %v2070
    %v2079 = vcombine.high %v2077, %v2077
    %v2080 = vcombine.high %v1456, %v1456
    %v2082 = vunpack.c.l.s4 1983009808
    %v2083 = vunpack.c.0.s8 %v2082
    %v2084 = vlaneseq
    %v2085 = vshrl.u32 %v2084, 7
    %v2086 = vsub.s32 %v2083, %v2085
    %v2087 = vrot.slane %v1456, %v2086
    %v2089 = vunpack.c.l.s4 1983009808
    %v2090 = vunpack.c.0.s8 %v2089
    %v2091 = vlaneseq
    %v2092 = vshrl.u32 %v2091, 7
    %v2093 = vsub.s32 %v2090, %v2092
    %v2094 = vrot.slane %v2080, %v2093
    %v2095 = vcombine.high %v2087, %v2087
    %v2096 = vcombine.high %v2094, %v2094
    %v2097 = vcombine.high %v1457, %v1457
    %v2099 = vunpack.c.l.s4 1983009808
    %v2100 = vunpack.c.0.s8 %v2099
    %v2101 = vlaneseq
    %v2102 = vshrl.u32 %v2101, 7
    %v2103 = vsub.s32 %v2100, %v2102
    %v2104 = vrot.slane %v1457, %v2103
    %v2106 = vunpack.c.l.s4 1983009808
    %v2107 = vunpack.c.0.s8 %v2106
    %v2108 = vlaneseq
    %v2109 = vshrl.u32 %v2108, 7
    %v2110 = vsub.s32 %v2107, %v2109
    %v2111 = vrot.slane %v2097, %v2110
    %v2112 = vcombine.high %v2104, %v2104
    %v2113 = vcombine.high %v2111, %v2111
    %v2114 = vcombine.high %v1458, %v1458
    %v2116 = vunpack.c.l.s4 1983009808
    %v2117 = vunpack.c.0.s8 %v2116
    %v2118 = vlaneseq
    %v2119 = vshrl.u32 %v2118, 7
    %v2120 = vsub.s32 %v2117, %v2119
    %v2121 = vrot.slane %v1458, %v2120
    %v2123 = vunpack.c.l.s4 1983009808
    %v2124 = vunpack.c.0.s8 %v2123
    %v2125 = vlaneseq
    %v2126 = vshrl.u32 %v2125, 7
    %v2127 = vsub.s32 %v2124, %v2126
    %v2128 = vrot.slane %v2114, %v2127
    %v2129 = vcombine.high %v2121, %v2121
    %v2130 = vcombine.high %v2128, %v2128
    %v2131 = vcombine.high %v1459, %v1459
    %v2133 = vunpack.c.l.s4 1983009808
    %v2134 = vunpack.c.0.s8 %v2133
    %v2135 = vlaneseq
    %v2136 = vshrl.u32 %v2135, 7
    %v2137 = vsub.s32 %v2134, %v2136
    %v2138 = vrot.slane %v1459, %v2137
    %v2140 = vunpack.c.l.s4 1983009808
    %v2141 = vunpack.c.0.s8 %v2140
    %v2142 = vlaneseq
    %v2143 = vshrl.u32 %v2142, 7
    %v2144 = vsub.s32 %v2141, %v2143
    %v2145 = vrot.slane %v2131, %v2144
    %v2146 = vcombine.high %v2138, %v2138
    %v2147 = vcombine.high %v2145, %v2145
    %v2148 = vcombine.high %v1460, %v1460
    %v2150 = vunpack.c.l.s4 1983009808
    %v2151 = vunpack.c.0.s8 %v2150
    %v2152 = vlaneseq
    %v2153 = vshrl.u32 %v2152, 7
    %v2154 = vsub.s32 %v2151, %v2153
    %v2155 = vrot.slane %v1460, %v2154
    %v2157 = vunpack.c.l.s4 1983009808
    %v2158 = vunpack.c.0.s8 %v2157
    %v2159 = vlaneseq
    %v2160 = vshrl.u32 %v2159, 7
    %v2161 = vsub.s32 %v2158, %v2160
    %v2162 = vrot.slane %v2148, %v2161
    %v2163 = vcombine.high %v2155, %v2155
    %v2164 = vcombine.high %v2162, %v2162
    %v2165 = vcombine.high %v1461, %v1461
    %v2167 = vunpack.c.l.s4 1983009808
    %v2168 = vunpack.c.0.s8 %v2167
    %v2169 = vlaneseq
    %v2170 = vshrl.u32 %v2169, 7
    %v2171 = vsub.s32 %v2168, %v2170
    %v2172 = vrot.slane %v1461, %v2171
    %v2174 = vunpack.c.l.s4 1983009808
    %v2175 = vunpack.c.0.s8 %v2174
    %v2176 = vlaneseq
    %v2177 = vshrl.u32 %v2176, 7
    %v2178 = vsub.s32 %v2175, %v2177
    %v2179 = vrot.slane %v2165, %v2178
    %v2180 = vcombine.high %v2172, %v2172
    %v2181 = vcombine.high %v2179, %v2179
    %v2182 = vcombine.high %v1462, %v1462
    %v2184 = vunpack.c.l.s4 1983009808
    %v2185 = vunpack.c.0.s8 %v2184
    %v2186 = vlaneseq
    %v2187 = vshrl.u32 %v2186, 7
    %v2188 = vsub.s32 %v2185, %v2187
    %v2189 = vrot.slane %v1462, %v2188
    %v2191 = vunpack.c.l.s4 1983009808
    %v2192 = vunpack.c.0.s8 %v2191
    %v2193 = vlaneseq
    %v2194 = vshrl.u32 %v2193, 7
    %v2195 = vsub.s32 %v2192, %v2194
    %v2196 = vrot.slane %v2182, %v2195
    %v2197 = vcombine.high %v2189, %v2189
    %v2198 = vcombine.high %v2196, %v2196
    %v2199 = vcombine.high %v1463, %v1463
    %v2201 = vunpack.c.l.s4 1983009808
    %v2202 = vunpack.c.0.s8 %v2201
    %v2203 = vlaneseq
    %v2204 = vshrl.u32 %v2203, 7
    %v2205 = vsub.s32 %v2202, %v2204
    %v2206 = vrot.slane %v1463, %v2205
    %v2208 = vunpack.c.l.s4 1983009808
    %v2209 = vunpack.c.0.s8 %v2208
    %v2210 = vlaneseq
    %v2211 = vshrl.u32 %v2210, 7
    %v2212 = vsub.s32 %v2209, %v2211
    %v2213 = vrot.slane %v2199, %v2212
    %v2214 = vcombine.high %v2206, %v2206
    %v2215 = vcombine.high %v2213, %v2213
    %v2216 = vcombine.high %v1464, %v1464
    %v2218 = vunpack.c.l.s4 1983009808
    %v2219 = vunpack.c.0.s8 %v2218
    %v2220 = vlaneseq
    %v2221 = vshrl.u32 %v2220, 7
    %v2222 = vsub.s32 %v2219, %v2221
    %v2223 = vrot.slane %v1464, %v2222
    %v2225 = vunpack.c.l.s4 1983009808
    %v2226 = vunpack.c.0.s8 %v2225
    %v2227 = vlaneseq
    %v2228 = vshrl.u32 %v2227, 7
    %v2229 = vsub.s32 %v2226, %v2228
    %v2230 = vrot.slane %v2216, %v2229
    %v2231 = vcombine.high %v2223, %v2223
    %v2232 = vcombine.high %v2230, %v2230
    %v2233 = vcombine.high %v1465, %v1465
    %v2235 = vunpack.c.l.s4 1983009808
    %v2236 = vunpack.c.0.s8 %v2235
    %v2237 = vlaneseq
    %v2238 = vshrl.u32 %v2237, 7
    %v2239 = vsub.s32 %v2236, %v2238
    %v2240 = vrot.slane %v1465, %v2239
    %v2242 = vunpack.c.l.s4 1983009808
    %v2243 = vunpack.c.0.s8 %v2242
    %v2244 = vlaneseq
    %v2245 = vshrl.u32 %v2244, 7
    %v2246 = vsub.s32 %v2243, %v2245
    %v2247 = vrot.slane %v2233, %v2246
    %v2248 = vcombine.high %v2240, %v2240
    %v2249 = vcombine.high %v2247, %v2247
    %v2250 = vcombine.high %v1466, %v1466
    %v2252 = vunpack.c.l.s4 1983009808
    %v2253 = vunpack.c.0.s8 %v2252
    %v2254 = vlaneseq
    %v2255 = vshrl.u32 %v2254, 7
    %v2256 = vsub.s32 %v2253, %v2255
    %v2257 = vrot.slane %v1466, %v2256
    %v2259 = vunpack.c.l.s4 1983009808
    %v2260 = vunpack.c.0.s8 %v2259
    %v2261 = vlaneseq
    %v2262 = vshrl.u32 %v2261, 7
    %v2263 = vsub.s32 %v2260, %v2262
    %v2264 = vrot.slane %v2250, %v2263
    %v2265 = vcombine.high %v2257, %v2257
    %v2266 = vcombine.high %v2264, %v2264
    %v2267 = vcombine.high %v1467, %v1467
    %v2269 = vunpack.c.l.s4 1983009808
    %v2270 = vunpack.c.0.s8 %v2269
    %v2271 = vlaneseq
    %v2272 = vshrl.u32 %v2271, 7
    %v2273 = vsub.s32 %v2270, %v2272
    %v2274 = vrot.slane %v1467, %v2273
    %v2276 = vunpack.c.l.s4 1983009808
    %v2277 = vunpack.c.0.s8 %v2276
    %v2278 = vlaneseq
    %v2279 = vshrl.u32 %v2278, 7
    %v2280 = vsub.s32 %v2277, %v2279
    %v2281 = vrot.slane %v2267, %v2280
    %v2282 = vcombine.high %v2274, %v2274
    %v2283 = vcombine.high %v2281, %v2281
    %v2284 = vcombine.high %v1468, %v1468
    %v2286 = vunpack.c.l.s4 1983009808
    %v2287 = vunpack.c.0.s8 %v2286
    %v2288 = vlaneseq
    %v2289 = vshrl.u32 %v2288, 7
    %v2290 = vsub.s32 %v2287, %v2289
    %v2291 = vrot.slane %v1468, %v2290
    %v2293 = vunpack.c.l.s4 1983009808
    %v2294 = vunpack.c.0.s8 %v2293
    %v2295 = vlaneseq
    %v2296 = vshrl.u32 %v2295, 7
    %v2297 = vsub.s32 %v2294, %v2296
    %v2298 = vrot.slane %v2284, %v2297
    %v2299 = vcombine.high %v2291, %v2291
    %v2300 = vcombine.high %v2298, %v2298
    %v2301 = vcombine.high %v1469, %v1469
    %v2303 = vunpack.c.l.s4 1983009808
    %v2304 = vunpack.c.0.s8 %v2303
    %v2305 = vlaneseq
    %v2306 = vshrl.u32 %v2305, 7
    %v2307 = vsub.s32 %v2304, %v2306
    %v2308 = vrot.slane %v1469, %v2307
    %v2310 = vunpack.c.l.s4 1983009808
    %v2311 = vunpack.c.0.s8 %v2310
    %v2312 = vlaneseq
    %v2313 = vshrl.u32 %v2312, 7
    %v2314 = vsub.s32 %v2311, %v2313
    %v2315 = vrot.slane %v2301, %v2314
    %v2316 = vcombine.high %v2308, %v2308
    %v2317 = vcombine.high %v2315, %v2315
    %v2318 = vcombine.high %v1470, %v1470
    %v2320 = vunpack.c.l.s4 1983009808
    %v2321 = vunpack.c.0.s8 %v2320
    %v2322 = vlaneseq
    %v2323 = vshrl.u32 %v2322, 7
    %v2324 = vsub.s32 %v2321, %v2323
    %v2325 = vrot.slane %v1470, %v2324
    %v2327 = vunpack.c.l.s4 1983009808
    %v2328 = vunpack.c.0.s8 %v2327
    %v2329 = vlaneseq
    %v2330 = vshrl.u32 %v2329, 7
    %v2331 = vsub.s32 %v2328, %v2330
    %v2332 = vrot.slane %v2318, %v2331
    %v2333 = vcombine.high %v2325, %v2325
    %v2334 = vcombine.high %v2332, %v2332
    %v2335 = vcombine.high %v1471, %v1471
    %v2337 = vunpack.c.l.s4 1983009808
    %v2338 = vunpack.c.0.s8 %v2337
    %v2339 = vlaneseq
    %v2340 = vshrl.u32 %v2339, 7
    %v2341 = vsub.s32 %v2338, %v2340
    %v2342 = vrot.slane %v1471, %v2341
    %v2344 = vunpack.c.l.s4 1983009808
    %v2345 = vunpack.c.0.s8 %v2344
    %v2346 = vlaneseq
    %v2347 = vshrl.u32 %v2346, 7
    %v2348 = vsub.s32 %v2345, %v2347
    %v2349 = vrot.slane %v2335, %v2348
    %v2350 = vcombine.high %v2342, %v2342
    %v2351 = vcombine.high %v2349, %v2349
    %v2352 = vcombine.high %v1472, %v1472
    %v2354 = vunpack.c.l.s4 1983009808
    %v2355 = vunpack.c.0.s8 %v2354
    %v2356 = vlaneseq
    %v2357 = vshrl.u32 %v2356, 7
    %v2358 = vsub.s32 %v2355, %v2357
    %v2359 = vrot.slane %v1472, %v2358
    %v2361 = vunpack.c.l.s4 1983009808
    %v2362 = vunpack.c.0.s8 %v2361
    %v2363 = vlaneseq
    %v2364 = vshrl.u32 %v2363, 7
    %v2365 = vsub.s32 %v2362, %v2364
    %v2366 = vrot.slane %v2352, %v2365
    %v2367 = vcombine.high %v2359, %v2359
    %v2368 = vcombine.high %v2366, %v2366
    %v2369 = vcombine.high %v1473, %v1473
    %v2371 = vunpack.c.l.s4 1983009808
    %v2372 = vunpack.c.0.s8 %v2371
    %v2373 = vlaneseq
    %v2374 = vshrl.u32 %v2373, 7
    %v2375 = vsub.s32 %v2372, %v2374
    %v2376 = vrot.slane %v1473, %v2375
    %v2378 = vunpack.c.l.s4 1983009808
    %v2379 = vunpack.c.0.s8 %v2378
    %v2380 = vlaneseq
    %v2381 = vshrl.u32 %v2380, 7
    %v2382 = vsub.s32 %v2379, %v2381
    %v2383 = vrot.slane %v2369, %v2382
    %v2384 = vcombine.high %v2376, %v2376
    %v2385 = vcombine.high %v2383, %v2383
    %v2386 = vcombine.high %v1474, %v1474
    %v2388 = vunpack.c.l.s4 1983009808
    %v2389 = vunpack.c.0.s8 %v2388
    %v2390 = vlaneseq
    %v2391 = vshrl.u32 %v2390, 7
    %v2392 = vsub.s32 %v2389, %v2391
    %v2393 = vrot.slane %v1474, %v2392
    %v2395 = vunpack.c.l.s4 1983009808
    %v2396 = vunpack.c.0.s8 %v2395
    %v2397 = vlaneseq
    %v2398 = vshrl.u32 %v2397, 7
    %v2399 = vsub.s32 %v2396, %v2398
    %v2400 = vrot.slane %v2386, %v2399
    %v2401 = vcombine.high %v2393, %v2393
    %v2402 = vcombine.high %v2400, %v2400
    %v2403 = vcombine.high %v1475, %v1475
    %v2405 = vunpack.c.l.s4 1983009808
    %v2406 = vunpack.c.0.s8 %v2405
    %v2407 = vlaneseq
    %v2408 = vshrl.u32 %v2407, 7
    %v2409 = vsub.s32 %v2406, %v2408
    %v2410 = vrot.slane %v1475, %v2409
    %v2412 = vunpack.c.l.s4 1983009808
    %v2413 = vunpack.c.0.s8 %v2412
    %v2414 = vlaneseq
    %v2415 = vshrl.u32 %v2414, 7
    %v2416 = vsub.s32 %v2413, %v2415
    %v2417 = vrot.slane %v2403, %v2416
    %v2418 = vcombine.high %v2410, %v2410
    %v2419 = vcombine.high %v2417, %v2417
    %v2420 = vcombine.high %v1476, %v1476
    %v2422 = vunpack.c.l.s4 1983009808
    %v2423 = vunpack.c.0.s8 %v2422
    %v2424 = vlaneseq
    %v2425 = vshrl.u32 %v2424, 7
    %v2426 = vsub.s32 %v2423, %v2425
    %v2427 = vrot.slane %v1476, %v2426
    %v2429 = vunpack.c.l.s4 1983009808
    %v2430 = vunpack.c.0.s8 %v2429
    %v2431 = vlaneseq
    %v2432 = vshrl.u32 %v2431, 7
    %v2433 = vsub.s32 %v2430, %v2432
    %v2434 = vrot.slane %v2420, %v2433
    %v2435 = vcombine.high %v2427, %v2427
    %v2436 = vcombine.high %v2434, %v2434
    %v2437 = vcombine.high %v1477, %v1477
    %v2439 = vunpack.c.l.s4 1983009808
    %v2440 = vunpack.c.0.s8 %v2439
    %v2441 = vlaneseq
    %v2442 = vshrl.u32 %v2441, 7
    %v2443 = vsub.s32 %v2440, %v2442
    %v2444 = vrot.slane %v1477, %v2443
    %v2446 = vunpack.c.l.s4 1983009808
    %v2447 = vunpack.c.0.s8 %v2446
    %v2448 = vlaneseq
    %v2449 = vshrl.u32 %v2448, 7
    %v2450 = vsub.s32 %v2447, %v2449
    %v2451 = vrot.slane %v2437, %v2450
    %v2452 = vcombine.high %v2444, %v2444
    %v2453 = vcombine.high %v2451, %v2451
    %v2454 = vcombine.high %v1478, %v1478
    %v2456 = vunpack.c.l.s4 1983009808
    %v2457 = vunpack.c.0.s8 %v2456
    %v2458 = vlaneseq
    %v2459 = vshrl.u32 %v2458, 7
    %v2460 = vsub.s32 %v2457, %v2459
    %v2461 = vrot.slane %v1478, %v2460
    %v2463 = vunpack.c.l.s4 1983009808
    %v2464 = vunpack.c.0.s8 %v2463
    %v2465 = vlaneseq
    %v2466 = vshrl.u32 %v2465, 7
    %v2467 = vsub.s32 %v2464, %v2466
    %v2468 = vrot.slane %v2454, %v2467
    %v2469 = vcombine.high %v2461, %v2461
    %v2470 = vcombine.high %v2468, %v2468
    %v2471 = vcombine.high %v1479, %v1479
    %v2473 = vunpack.c.l.s4 1983009808
    %v2474 = vunpack.c.0.s8 %v2473
    %v2475 = vlaneseq
    %v2476 = vshrl.u32 %v2475, 7
    %v2477 = vsub.s32 %v2474, %v2476
    %v2478 = vrot.slane %v1479, %v2477
    %v2480 = vunpack.c.l.s4 1983009808
    %v2481 = vunpack.c.0.s8 %v2480
    %v2482 = vlaneseq
    %v2483 = vshrl.u32 %v2482, 7
    %v2484 = vsub.s32 %v2481, %v2483
    %v2485 = vrot.slane %v2471, %v2484
    %v2486 = vcombine.high %v2478, %v2478
    %v2487 = vcombine.high %v2485, %v2485
    %v2488 = vcombine.high %v1480, %v1480
    %v2490 = vunpack.c.l.s4 1983009808
    %v2491 = vunpack.c.0.s8 %v2490
    %v2492 = vlaneseq
    %v2493 = vshrl.u32 %v2492, 7
    %v2494 = vsub.s32 %v2491, %v2493
    %v2495 = vrot.slane %v1480, %v2494
    %v2497 = vunpack.c.l.s4 1983009808
    %v2498 = vunpack.c.0.s8 %v2497
    %v2499 = vlaneseq
    %v2500 = vshrl.u32 %v2499, 7
    %v2501 = vsub.s32 %v2498, %v2500
    %v2502 = vrot.slane %v2488, %v2501
    %v2503 = vcombine.high %v2495, %v2495
    %v2504 = vcombine.high %v2502, %v2502
    %v2505 = vcombine.high %v1481, %v1481
    %v2507 = vunpack.c.l.s4 1983009808
    %v2508 = vunpack.c.0.s8 %v2507
    %v2509 = vlaneseq
    %v2510 = vshrl.u32 %v2509, 7
    %v2511 = vsub.s32 %v2508, %v2510
    %v2512 = vrot.slane %v1481, %v2511
    %v2514 = vunpack.c.l.s4 1983009808
    %v2515 = vunpack.c.0.s8 %v2514
    %v2516 = vlaneseq
    %v2517 = vshrl.u32 %v2516, 7
    %v2518 = vsub.s32 %v2515, %v2517
    %v2519 = vrot.slane %v2505, %v2518
    %v2520 = vcombine.high %v2512, %v2512
    %v2521 = vcombine.high %v2519, %v2519
    %v2522 = vcombine.high %v1482, %v1482
    %v2524 = vunpack.c.l.s4 1983009808
    %v2525 = vunpack.c.0.s8 %v2524
    %v2526 = vlaneseq
    %v2527 = vshrl.u32 %v2526, 7
    %v2528 = vsub.s32 %v2525, %v2527
    %v2529 = vrot.slane %v1482, %v2528
    %v2531 = vunpack.c.l.s4 1983009808
    %v2532 = vunpack.c.0.s8 %v2531
    %v2533 = vlaneseq
    %v2534 = vshrl.u32 %v2533, 7
    %v2535 = vsub.s32 %v2532, %v2534
    %v2536 = vrot.slane %v2522, %v2535
    %v2537 = vcombine.high %v2529, %v2529
    %v2538 = vcombine.high %v2536, %v2536
    %v2539 = vcombine.high %v1483, %v1483
    %v2541 = vunpack.c.l.s4 1983009808
    %v2542 = vunpack.c.0.s8 %v2541
    %v2543 = vlaneseq
    %v2544 = vshrl.u32 %v2543, 7
    %v2545 = vsub.s32 %v2542, %v2544
    %v2546 = vrot.slane %v1483, %v2545
    %v2548 = vunpack.c.l.s4 1983009808
    %v2549 = vunpack.c.0.s8 %v2548
    %v2550 = vlaneseq
    %v2551 = vshrl.u32 %v2550, 7
    %v2552 = vsub.s32 %v2549, %v2551
    %v2553 = vrot.slane %v2539, %v2552
    %v2554 = vcombine.high %v2546, %v2546
    %v2555 = vcombine.high %v2553, %v2553
    %v2556 = vcombine.high %v1484, %v1484
    %v2558 = vunpack.c.l.s4 1983009808
    %v2559 = vunpack.c.0.s8 %v2558
    %v2560 = vlaneseq
    %v2561 = vshrl.u32 %v2560, 7
    %v2562 = vsub.s32 %v2559, %v2561
    %v2563 = vrot.slane %v1484, %v2562
    %v2565 = vunpack.c.l.s4 1983009808
    %v2566 = vunpack.c.0.s8 %v2565
    %v2567 = vlaneseq
    %v2568 = vshrl.u32 %v2567, 7
    %v2569 = vsub.s32 %v2566, %v2568
    %v2570 = vrot.slane %v2556, %v2569
    %v2571 = vcombine.high %v2563, %v2563
    %v2572 = vcombine.high %v2570, %v2570
    %v2573 = vcombine.high %v1485, %v1485
    %v2575 = vunpack.c.l.s4 1983009808
    %v2576 = vunpack.c.0.s8 %v2575
    %v2577 = vlaneseq
    %v2578 = vshrl.u32 %v2577, 7
    %v2579 = vsub.s32 %v2576, %v2578
    %v2580 = vrot.slane %v1485, %v2579
    %v2582 = vunpack.c.l.s4 1983009808
    %v2583 = vunpack.c.0.s8 %v2582
    %v2584 = vlaneseq
    %v2585 = vshrl.u32 %v2584, 7
    %v2586 = vsub.s32 %v2583, %v2585
    %v2587 = vrot.slane %v2573, %v2586
    %v2588 = vcombine.high %v2580, %v2580
    %v2589 = vcombine.high %v2587, %v2587
    %v2590 = vcombine.high %v1486, %v1486
    %v2592 = vunpack.c.l.s4 1983009808
    %v2593 = vunpack.c.0.s8 %v2592
    %v2594 = vlaneseq
    %v2595 = vshrl.u32 %v2594, 7
    %v2596 = vsub.s32 %v2593, %v2595
    %v2597 = vrot.slane %v1486, %v2596
    %v2599 = vunpack.c.l.s4 1983009808
    %v2600 = vunpack.c.0.s8 %v2599
    %v2601 = vlaneseq
    %v2602 = vshrl.u32 %v2601, 7
    %v2603 = vsub.s32 %v2600, %v2602
    %v2604 = vrot.slane %v2590, %v2603
    %v2605 = vcombine.high %v2597, %v2597
    %v2606 = vcombine.high %v2604, %v2604
    %v2607 = vcombine.high %v1487, %v1487
    %v2609 = vunpack.c.l.s4 1983009808
    %v2610 = vunpack.c.0.s8 %v2609
    %v2611 = vlaneseq
    %v2612 = vshrl.u32 %v2611, 7
    %v2613 = vsub.s32 %v2610, %v2612
    %v2614 = vrot.slane %v1487, %v2613
    %v2616 = vunpack.c.l.s4 1983009808
    %v2617 = vunpack.c.0.s8 %v2616
    %v2618 = vlaneseq
    %v2619 = vshrl.u32 %v2618, 7
    %v2620 = vsub.s32 %v2617, %v2619
    %v2621 = vrot.slane %v2607, %v2620
    %v2622 = vcombine.high %v2614, %v2614
    %v2623 = vcombine.high %v2621, %v2621
    %v2624 = vcombine.high %v1488, %v1488
    %v2626 = vunpack.c.l.s4 1983009808
    %v2627 = vunpack.c.0.s8 %v2626
    %v2628 = vlaneseq
    %v2629 = vshrl.u32 %v2628, 7
    %v2630 = vsub.s32 %v2627, %v2629
    %v2631 = vrot.slane %v1488, %v2630
    %v2633 = vunpack.c.l.s4 1983009808
    %v2634 = vunpack.c.0.s8 %v2633
    %v2635 = vlaneseq
    %v2636 = vshrl.u32 %v2635, 7
    %v2637 = vsub.s32 %v2634, %v2636
    %v2638 = vrot.slane %v2624, %v2637
    %v2639 = vcombine.high %v2631, %v2631
    %v2640 = vcombine.high %v2638, %v2638
    %v2641 = vcombine.low %v1560, %v1568
    %v2642 = vcombine.low %v1567, %v1569
    %v2644 = vunpack.c.l.s4 1983009808
    %v2645 = vunpack.c.0.s8 %v2644
    %v2646 = vlaneseq
    %v2647 = vshrl.u32 %v2646, 7
    %v2648 = vsub.s32 %v2645, %v2647
    %v2649 = vrot.slane %v2641, %v2648
    %v2651 = vunpack.c.l.s4 1983009808
    %v2652 = vunpack.c.0.s8 %v2651
    %v2653 = vlaneseq
    %v2654 = vshrl.u32 %v2653, 7
    %v2655 = vsub.s32 %v2652, %v2654
    %v2656 = vrot.slane %v2642, %v2655
    %v2657 = vcombine.low %v2649, %v2656
    %v2658 = vcombine.low %v1577, %v1585
    %v2659 = vcombine.low %v1584, %v1586
    %v2661 = vunpack.c.l.s4 1983009808
    %v2662 = vunpack.c.0.s8 %v2661
    %v2663 = vlaneseq
    %v2664 = vshrl.u32 %v2663, 7
    %v2665 = vsub.s32 %v2662, %v2664
    %v2666 = vrot.slane %v2658, %v2665
    %v2668 = vunpack.c.l.s4 1983009808
    %v2669 = vunpack.c.0.s8 %v2668
    %v2670 = vlaneseq
    %v2671 = vshrl.u32 %v2670, 7
    %v2672 = vsub.s32 %v2669, %v2671
    %v2673 = vrot.slane %v2659, %v2672
    %v2674 = vcombine.low %v2666, %v2673
    %v2675 = vcombine.low %v1594, %v1602
    %v2676 = vcombine.low %v1601, %v1603
    %v2678 = vunpack.c.l.s4 1983009808
    %v2679 = vunpack.c.0.s8 %v2678
    %v2680 = vlaneseq
    %v2681 = vshrl.u32 %v2680, 7
    %v2682 = vsub.s32 %v2679, %v2681
    %v2683 = vrot.slane %v2675, %v2682
    %v2685 = vunpack.c.l.s4 1983009808
    %v2686 = vunpack.c.0.s8 %v2685
    %v2687 = vlaneseq
    %v2688 = vshrl.u32 %v2687, 7
    %v2689 = vsub.s32 %v2686, %v2688
    %v2690 = vrot.slane %v2676, %v2689
    %v2691 = vcombine.low %v2683, %v2690
    %v2692 = vcombine.low %v1611, %v1619
    %v2693 = vcombine.low %v1618, %v1620
    %v2695 = vunpack.c.l.s4 1983009808
    %v2696 = vunpack.c.0.s8 %v2695
    %v2697 = vlaneseq
    %v2698 = vshrl.u32 %v2697, 7
    %v2699 = vsub.s32 %v2696, %v2698
    %v2700 = vrot.slane %v2692, %v2699
    %v2702 = vunpack.c.l.s4 1983009808
    %v2703 = vunpack.c.0.s8 %v2702
    %v2704 = vlaneseq
    %v2705 = vshrl.u32 %v2704, 7
    %v2706 = vsub.s32 %v2703, %v2705
    %v2707 = vrot.slane %v2693, %v2706
    %v2708 = vcombine.low %v2700, %v2707
    %v2709 = vcombine.low %v1628, %v1636
    %v2710 = vcombine.low %v1635, %v1637
    %v2712 = vunpack.c.l.s4 1983009808
    %v2713 = vunpack.c.0.s8 %v2712
    %v2714 = vlaneseq
    %v2715 = vshrl.u32 %v2714, 7
    %v2716 = vsub.s32 %v2713, %v2715
    %v2717 = vrot.slane %v2709, %v2716
    %v2719 = vunpack.c.l.s4 1983009808
    %v2720 = vunpack.c.0.s8 %v2719
    %v2721 = vlaneseq
    %v2722 = vshrl.u32 %v2721, 7
    %v2723 = vsub.s32 %v2720, %v2722
    %v2724 = vrot.slane %v2710, %v2723
    %v2725 = vcombine.low %v2717, %v2724
    %v2726 = vcombine.low %v1645, %v1653
    %v2727 = vcombine.low %v1652, %v1654
    %v2729 = vunpack.c.l.s4 1983009808
    %v2730 = vunpack.c.0.s8 %v2729
    %v2731 = vlaneseq
    %v2732 = vshrl.u32 %v2731, 7
    %v2733 = vsub.s32 %v2730, %v2732
    %v2734 = vrot.slane %v2726, %v2733
    %v2736 = vunpack.c.l.s4 1983009808
    %v2737 = vunpack.c.0.s8 %v2736
    %v2738 = vlaneseq
    %v2739 = vshrl.u32 %v2738, 7
    %v2740 = vsub.s32 %v2737, %v2739
    %v2741 = vrot.slane %v2727, %v2740
    %v2742 = vcombine.low %v2734, %v2741
    %v2743 = vcombine.low %v1662, %v1670
    %v2744 = vcombine.low %v1669, %v1671
    %v2746 = vunpack.c.l.s4 1983009808
    %v2747 = vunpack.c.0.s8 %v2746
    %v2748 = vlaneseq
    %v2749 = vshrl.u32 %v2748, 7
    %v2750 = vsub.s32 %v2747, %v2749
    %v2751 = vrot.slane %v2743, %v2750
    %v2753 = vunpack.c.l.s4 1983009808
    %v2754 = vunpack.c.0.s8 %v2753
    %v2755 = vlaneseq
    %v2756 = vshrl.u32 %v2755, 7
    %v2757 = vsub.s32 %v2754, %v2756
    %v2758 = vrot.slane %v2744, %v2757
    %v2759 = vcombine.low %v2751, %v2758
    %v2760 = vcombine.low %v1679, %v1687
    %v2761 = vcombine.low %v1686, %v1688
    %v2763 = vunpack.c.l.s4 1983009808
    %v2764 = vunpack.c.0.s8 %v2763
    %v2765 = vlaneseq
    %v2766 = vshrl.u32 %v2765, 7
    %v2767 = vsub.s32 %v2764, %v2766
    %v2768 = vrot.slane %v2760, %v2767
    %v2770 = vunpack.c.l.s4 1983009808
    %v2771 = vunpack.c.0.s8 %v2770
    %v2772 = vlaneseq
    %v2773 = vshrl.u32 %v2772, 7
    %v2774 = vsub.s32 %v2771, %v2773
    %v2775 = vrot.slane %v2761, %v2774
    %v2776 = vcombine.low %v2768, %v2775
    %v2777 = vcombine.low %v1696, %v1704
    %v2778 = vcombine.low %v1703, %v1705
    %v2780 = vunpack.c.l.s4 1983009808
    %v2781 = vunpack.c.0.s8 %v2780
    %v2782 = vlaneseq
    %v2783 = vshrl.u32 %v2782, 7
    %v2784 = vsub.s32 %v2781, %v2783
    %v2785 = vrot.slane %v2777, %v2784
    %v2787 = vunpack.c.l.s4 1983009808
    %v2788 = vunpack.c.0.s8 %v2787
    %v2789 = vlaneseq
    %v2790 = vshrl.u32 %v2789, 7
    %v2791 = vsub.s32 %v2788, %v2790
    %v2792 = vrot.slane %v2778, %v2791
    %v2793 = vcombine.low %v2785, %v2792
    %v2794 = vcombine.low %v1713, %v1721
    %v2795 = vcombine.low %v1720, %v1722
    %v2797 = vunpack.c.l.s4 1983009808
    %v2798 = vunpack.c.0.s8 %v2797
    %v2799 = vlaneseq
    %v2800 = vshrl.u32 %v2799, 7
    %v2801 = vsub.s32 %v2798, %v2800
    %v2802 = vrot.slane %v2794, %v2801
    %v2804 = vunpack.c.l.s4 1983009808
    %v2805 = vunpack.c.0.s8 %v2804
    %v2806 = vlaneseq
    %v2807 = vshrl.u32 %v2806, 7
    %v2808 = vsub.s32 %v2805, %v2807
    %v2809 = vrot.slane %v2795, %v2808
    %v2810 = vcombine.low %v2802, %v2809
    %v2811 = vcombine.low %v1730, %v1738
    %v2812 = vcombine.low %v1737, %v1739
    %v2814 = vunpack.c.l.s4 1983009808
    %v2815 = vunpack.c.0.s8 %v2814
    %v2816 = vlaneseq
    %v2817 = vshrl.u32 %v2816, 7
    %v2818 = vsub.s32 %v2815, %v2817
    %v2819 = vrot.slane %v2811, %v2818
    %v2821 = vunpack.c.l.s4 1983009808
    %v2822 = vunpack.c.0.s8 %v2821
    %v2823 = vlaneseq
    %v2824 = vshrl.u32 %v2823, 7
    %v2825 = vsub.s32 %v2822, %v2824
    %v2826 = vrot.slane %v2812, %v2825
    %v2827 = vcombine.low %v2819, %v2826
    %v2828 = vcombine.low %v1747, %v1755
    %v2829 = vcombine.low %v1754, %v1756
    %v2831 = vunpack.c.l.s4 1983009808
    %v2832 = vunpack.c.0.s8 %v2831
    %v2833 = vlaneseq
    %v2834 = vshrl.u32 %v2833, 7
    %v2835 = vsub.s32 %v2832, %v2834
    %v2836 = vrot.slane %v2828, %v2835
    %v2838 = vunpack.c.l.s4 1983009808
    %v2839 = vunpack.c.0.s8 %v2838
    %v2840 = vlaneseq
    %v2841 = vshrl.u32 %v2840, 7
    %v2842 = vsub.s32 %v2839, %v2841
    %v2843 = vrot.slane %v2829, %v2842
    %v2844 = vcombine.low %v2836, %v2843
    %v2845 = vcombine.low %v1764, %v1772
    %v2846 = vcombine.low %v1771, %v1773
    %v2848 = vunpack.c.l.s4 1983009808
    %v2849 = vunpack.c.0.s8 %v2848
    %v2850 = vlaneseq
    %v2851 = vshrl.u32 %v2850, 7
    %v2852 = vsub.s32 %v2849, %v2851
    %v2853 = vrot.slane %v2845, %v2852
    %v2855 = vunpack.c.l.s4 1983009808
    %v2856 = vunpack.c.0.s8 %v2855
    %v2857 = vlaneseq
    %v2858 = vshrl.u32 %v2857, 7
    %v2859 = vsub.s32 %v2856, %v2858
    %v2860 = vrot.slane %v2846, %v2859
    %v2861 = vcombine.low %v2853, %v2860
    %v2862 = vcombine.low %v1781, %v1789
    %v2863 = vcombine.low %v1788, %v1790
    %v2865 = vunpack.c.l.s4 1983009808
    %v2866 = vunpack.c.0.s8 %v2865
    %v2867 = vlaneseq
    %v2868 = vshrl.u32 %v2867, 7
    %v2869 = vsub.s32 %v2866, %v2868
    %v2870 = vrot.slane %v2862, %v2869
    %v2872 = vunpack.c.l.s4 1983009808
    %v2873 = vunpack.c.0.s8 %v2872
    %v2874 = vlaneseq
    %v2875 = vshrl.u32 %v2874, 7
    %v2876 = vsub.s32 %v2873, %v2875
    %v2877 = vrot.slane %v2863, %v2876
    %v2878 = vcombine.low %v2870, %v2877
    %v2879 = vcombine.low %v1798, %v1806
    %v2880 = vcombine.low %v1805, %v1807
    %v2882 = vunpack.c.l.s4 1983009808
    %v2883 = vunpack.c.0.s8 %v2882
    %v2884 = vlaneseq
    %v2885 = vshrl.u32 %v2884, 7
    %v2886 = vsub.s32 %v2883, %v2885
    %v2887 = vrot.slane %v2879, %v2886
    %v2889 = vunpack.c.l.s4 1983009808
    %v2890 = vunpack.c.0.s8 %v2889
    %v2891 = vlaneseq
    %v2892 = vshrl.u32 %v2891, 7
    %v2893 = vsub.s32 %v2890, %v2892
    %v2894 = vrot.slane %v2880, %v2893
    %v2895 = vcombine.low %v2887, %v2894
    %v2896 = vcombine.low %v1815, %v1823
    %v2897 = vcombine.low %v1822, %v1824
    %v2899 = vunpack.c.l.s4 1983009808
    %v2900 = vunpack.c.0.s8 %v2899
    %v2901 = vlaneseq
    %v2902 = vshrl.u32 %v2901, 7
    %v2903 = vsub.s32 %v2900, %v2902
    %v2904 = vrot.slane %v2896, %v2903
    %v2906 = vunpack.c.l.s4 1983009808
    %v2907 = vunpack.c.0.s8 %v2906
    %v2908 = vlaneseq
    %v2909 = vshrl.u32 %v2908, 7
    %v2910 = vsub.s32 %v2907, %v2909
    %v2911 = vrot.slane %v2897, %v2910
    %v2912 = vcombine.low %v2904, %v2911
    %v2913 = vcombine.low %v1832, %v1840
    %v2914 = vcombine.low %v1839, %v1841
    %v2916 = vunpack.c.l.s4 1983009808
    %v2917 = vunpack.c.0.s8 %v2916
    %v2918 = vlaneseq
    %v2919 = vshrl.u32 %v2918, 7
    %v2920 = vsub.s32 %v2917, %v2919
    %v2921 = vrot.slane %v2913, %v2920
    %v2923 = vunpack.c.l.s4 1983009808
    %v2924 = vunpack.c.0.s8 %v2923
    %v2925 = vlaneseq
    %v2926 = vshrl.u32 %v2925, 7
    %v2927 = vsub.s32 %v2924, %v2926
    %v2928 = vrot.slane %v2914, %v2927
    %v2929 = vcombine.low %v2921, %v2928
    %v2930 = vcombine.low %v1849, %v1857
    %v2931 = vcombine.low %v1856, %v1858
    %v2933 = vunpack.c.l.s4 1983009808
    %v2934 = vunpack.c.0.s8 %v2933
    %v2935 = vlaneseq
    %v2936 = vshrl.u32 %v2935, 7
    %v2937 = vsub.s32 %v2934, %v2936
    %v2938 = vrot.slane %v2930, %v2937
    %v2940 = vunpack.c.l.s4 1983009808
    %v2941 = vunpack.c.0.s8 %v2940
    %v2942 = vlaneseq
    %v2943 = vshrl.u32 %v2942, 7
    %v2944 = vsub.s32 %v2941, %v2943
    %v2945 = vrot.slane %v2931, %v2944
    %v2946 = vcombine.low %v2938, %v2945
    %v2947 = vcombine.low %v1866, %v1874
    %v2948 = vcombine.low %v1873, %v1875
    %v2950 = vunpack.c.l.s4 1983009808
    %v2951 = vunpack.c.0.s8 %v2950
    %v2952 = vlaneseq
    %v2953 = vshrl.u32 %v2952, 7
    %v2954 = vsub.s32 %v2951, %v2953
    %v2955 = vrot.slane %v2947, %v2954
    %v2957 = vunpack.c.l.s4 1983009808
    %v2958 = vunpack.c.0.s8 %v2957
    %v2959 = vlaneseq
    %v2960 = vshrl.u32 %v2959, 7
    %v2961 = vsub.s32 %v2958, %v2960
    %v2962 = vrot.slane %v2948, %v2961
    %v2963 = vcombine.low %v2955, %v2962
    %v2964 = vcombine.low %v1883, %v1891
    %v2965 = vcombine.low %v1890, %v1892
    %v2967 = vunpack.c.l.s4 1983009808
    %v2968 = vunpack.c.0.s8 %v2967
    %v2969 = vlaneseq
    %v2970 = vshrl.u32 %v2969, 7
    %v2971 = vsub.s32 %v2968, %v2970
    %v2972 = vrot.slane %v2964, %v2971
    %v2974 = vunpack.c.l.s4 1983009808
    %v2975 = vunpack.c.0.s8 %v2974
    %v2976 = vlaneseq
    %v2977 = vshrl.u32 %v2976, 7
    %v2978 = vsub.s32 %v2975, %v2977
    %v2979 = vrot.slane %v2965, %v2978
    %v2980 = vcombine.low %v2972, %v2979
    %v2981 = vcombine.low %v1900, %v1908
    %v2982 = vcombine.low %v1907, %v1909
    %v2984 = vunpack.c.l.s4 1983009808
    %v2985 = vunpack.c.0.s8 %v2984
    %v2986 = vlaneseq
    %v2987 = vshrl.u32 %v2986, 7
    %v2988 = vsub.s32 %v2985, %v2987
    %v2989 = vrot.slane %v2981, %v2988
    %v2991 = vunpack.c.l.s4 1983009808
    %v2992 = vunpack.c.0.s8 %v2991
    %v2993 = vlaneseq
    %v2994 = vshrl.u32 %v2993, 7
    %v2995 = vsub.s32 %v2992, %v2994
    %v2996 = vrot.slane %v2982, %v2995
    %v2997 = vcombine.low %v2989, %v2996
    %v2998 = vcombine.low %v1917, %v1925
    %v2999 = vcombine.low %v1924, %v1926
    %v3001 = vunpack.c.l.s4 1983009808
    %v3002 = vunpack.c.0.s8 %v3001
    %v3003 = vlaneseq
    %v3004 = vshrl.u32 %v3003, 7
    %v3005 = vsub.s32 %v3002, %v3004
    %v3006 = vrot.slane %v2998, %v3005
    %v3008 = vunpack.c.l.s4 1983009808
    %v3009 = vunpack.c.0.s8 %v3008
    %v3010 = vlaneseq
    %v3011 = vshrl.u32 %v3010, 7
    %v3012 = vsub.s32 %v3009, %v3011
    %v3013 = vrot.slane %v2999, %v3012
    %v3014 = vcombine.low %v3006, %v3013
    %v3015 = vcombine.low %v1934, %v1942
    %v3016 = vcombine.low %v1941, %v1943
    %v3018 = vunpack.c.l.s4 1983009808
    %v3019 = vunpack.c.0.s8 %v3018
    %v3020 = vlaneseq
    %v3021 = vshrl.u32 %v3020, 7
    %v3022 = vsub.s32 %v3019, %v3021
    %v3023 = vrot.slane %v3015, %v3022
    %v3025 = vunpack.c.l.s4 1983009808
    %v3026 = vunpack.c.0.s8 %v3025
    %v3027 = vlaneseq
    %v3028 = vshrl.u32 %v3027, 7
    %v3029 = vsub.s32 %v3026, %v3028
    %v3030 = vrot.slane %v3016, %v3029
    %v3031 = vcombine.low %v3023, %v3030
    %v3032 = vcombine.low %v1951, %v1959
    %v3033 = vcombine.low %v1958, %v1960
    %v3035 = vunpack.c.l.s4 1983009808
    %v3036 = vunpack.c.0.s8 %v3035
    %v3037 = vlaneseq
    %v3038 = vshrl.u32 %v3037, 7
    %v3039 = vsub.s32 %v3036, %v3038
    %v3040 = vrot.slane %v3032, %v3039
    %v3042 = vunpack.c.l.s4 1983009808
    %v3043 = vunpack.c.0.s8 %v3042
    %v3044 = vlaneseq
    %v3045 = vshrl.u32 %v3044, 7
    %v3046 = vsub.s32 %v3043, %v3045
    %v3047 = vrot.slane %v3033, %v3046
    %v3048 = vcombine.low %v3040, %v3047
    %v3049 = vcombine.low %v1968, %v1976
    %v3050 = vcombine.low %v1975, %v1977
    %v3052 = vunpack.c.l.s4 1983009808
    %v3053 = vunpack.c.0.s8 %v3052
    %v3054 = vlaneseq
    %v3055 = vshrl.u32 %v3054, 7
    %v3056 = vsub.s32 %v3053, %v3055
    %v3057 = vrot.slane %v3049, %v3056
    %v3059 = vunpack.c.l.s4 1983009808
    %v3060 = vunpack.c.0.s8 %v3059
    %v3061 = vlaneseq
    %v3062 = vshrl.u32 %v3061, 7
    %v3063 = vsub.s32 %v3060, %v3062
    %v3064 = vrot.slane %v3050, %v3063
    %v3065 = vcombine.low %v3057, %v3064
    %v3066 = vcombine.low %v1985, %v1993
    %v3067 = vcombine.low %v1992, %v1994
    %v3069 = vunpack.c.l.s4 1983009808
    %v3070 = vunpack.c.0.s8 %v3069
    %v3071 = vlaneseq
    %v3072 = vshrl.u32 %v3071, 7
    %v3073 = vsub.s32 %v3070, %v3072
    %v3074 = vrot.slane %v3066, %v3073
    %v3076 = vunpack.c.l.s4 1983009808
    %v3077 = vunpack.c.0.s8 %v3076
    %v3078 = vlaneseq
    %v3079 = vshrl.u32 %v3078, 7
    %v3080 = vsub.s32 %v3077, %v3079
    %v3081 = vrot.slane %v3067, %v3080
    %v3082 = vcombine.low %v3074, %v3081
    %v3083 = vcombine.low %v2002, %v2010
    %v3084 = vcombine.low %v2009, %v2011
    %v3086 = vunpack.c.l.s4 1983009808
    %v3087 = vunpack.c.0.s8 %v3086
    %v3088 = vlaneseq
    %v3089 = vshrl.u32 %v3088, 7
    %v3090 = vsub.s32 %v3087, %v3089
    %v3091 = vrot.slane %v3083, %v3090
    %v3093 = vunpack.c.l.s4 1983009808
    %v3094 = vunpack.c.0.s8 %v3093
    %v3095 = vlaneseq
    %v3096 = vshrl.u32 %v3095, 7
    %v3097 = vsub.s32 %v3094, %v3096
    %v3098 = vrot.slane %v3084, %v3097
    %v3099 = vcombine.low %v3091, %v3098
    %v3100 = vcombine.low %v2019, %v2027
    %v3101 = vcombine.low %v2026, %v2028
    %v3103 = vunpack.c.l.s4 1983009808
    %v3104 = vunpack.c.0.s8 %v3103
    %v3105 = vlaneseq
    %v3106 = vshrl.u32 %v3105, 7
    %v3107 = vsub.s32 %v3104, %v3106
    %v3108 = vrot.slane %v3100, %v3107
    %v3110 = vunpack.c.l.s4 1983009808
    %v3111 = vunpack.c.0.s8 %v3110
    %v3112 = vlaneseq
    %v3113 = vshrl.u32 %v3112, 7
    %v3114 = vsub.s32 %v3111, %v3113
    %v3115 = vrot.slane %v3101, %v3114
    %v3116 = vcombine.low %v3108, %v3115
    %v3117 = vcombine.low %v2036, %v2044
    %v3118 = vcombine.low %v2043, %v2045
    %v3120 = vunpack.c.l.s4 1983009808
    %v3121 = vunpack.c.0.s8 %v3120
    %v3122 = vlaneseq
    %v3123 = vshrl.u32 %v3122, 7
    %v3124 = vsub.s32 %v3121, %v3123
    %v3125 = vrot.slane %v3117, %v3124
    %v3127 = vunpack.c.l.s4 1983009808
    %v3128 = vunpack.c.0.s8 %v3127
    %v3129 = vlaneseq
    %v3130 = vshrl.u32 %v3129, 7
    %v3131 = vsub.s32 %v3128, %v3130
    %v3132 = vrot.slane %v3118, %v3131
    %v3133 = vcombine.low %v3125, %v3132
    %v3134 = vcombine.low %v2053, %v2061
    %v3135 = vcombine.low %v2060, %v2062
    %v3137 = vunpack.c.l.s4 1983009808
    %v3138 = vunpack.c.0.s8 %v3137
    %v3139 = vlaneseq
    %v3140 = vshrl.u32 %v3139, 7
    %v3141 = vsub.s32 %v3138, %v3140
    %v3142 = vrot.slane %v3134, %v3141
    %v3144 = vunpack.c.l.s4 1983009808
    %v3145 = vunpack.c.0.s8 %v3144
    %v3146 = vlaneseq
    %v3147 = vshrl.u32 %v3146, 7
    %v3148 = vsub.s32 %v3145, %v3147
    %v3149 = vrot.slane %v3135, %v3148
    %v3150 = vcombine.low %v3142, %v3149
    %v3151 = vcombine.low %v2070, %v2078
    %v3152 = vcombine.low %v2077, %v2079
    %v3154 = vunpack.c.l.s4 1983009808
    %v3155 = vunpack.c.0.s8 %v3154
    %v3156 = vlaneseq
    %v3157 = vshrl.u32 %v3156, 7
    %v3158 = vsub.s32 %v3155, %v3157
    %v3159 = vrot.slane %v3151, %v3158
    %v3161 = vunpack.c.l.s4 1983009808
    %v3162 = vunpack.c.0.s8 %v3161
    %v3163 = vlaneseq
    %v3164 = vshrl.u32 %v3163, 7
    %v3165 = vsub.s32 %v3162, %v3164
    %v3166 = vrot.slane %v3152, %v3165
    %v3167 = vcombine.low %v3159, %v3166
    %v3168 = vcombine.low %v2087, %v2095
    %v3169 = vcombine.low %v2094, %v2096
    %v3171 = vunpack.c.l.s4 1983009808
    %v3172 = vunpack.c.0.s8 %v3171
    %v3173 = vlaneseq
    %v3174 = vshrl.u32 %v3173, 7
    %v3175 = vsub.s32 %v3172, %v3174
    %v3176 = vrot.slane %v3168, %v3175
    %v3178 = vunpack.c.l.s4 1983009808
    %v3179 = vunpack.c.0.s8 %v3178
    %v3180 = vlaneseq
    %v3181 = vshrl.u32 %v3180, 7
    %v3182 = vsub.s32 %v3179, %v3181
    %v3183 = vrot.slane %v3169, %v3182
    %v3184 = vcombine.low %v3176, %v3183
    %v3185 = vcombine.low %v2104, %v2112
    %v3186 = vcombine.low %v2111, %v2113
    %v3188 = vunpack.c.l.s4 1983009808
    %v3189 = vunpack.c.0.s8 %v3188
    %v3190 = vlaneseq
    %v3191 = vshrl.u32 %v3190, 7
    %v3192 = vsub.s32 %v3189, %v3191
    %v3193 = vrot.slane %v3185, %v3192
    %v3195 = vunpack.c.l.s4 1983009808
    %v3196 = vunpack.c.0.s8 %v3195
    %v3197 = vlaneseq
    %v3198 = vshrl.u32 %v3197, 7
    %v3199 = vsub.s32 %v3196, %v3198
    %v3200 = vrot.slane %v3186, %v3199
    %v3201 = vcombine.low %v3193, %v3200
    %v3202 = vcombine.low %v2121, %v2129
    %v3203 = vcombine.low %v2128, %v2130
    %v3205 = vunpack.c.l.s4 1983009808
    %v3206 = vunpack.c.0.s8 %v3205
    %v3207 = vlaneseq
    %v3208 = vshrl.u32 %v3207, 7
    %v3209 = vsub.s32 %v3206, %v3208
    %v3210 = vrot.slane %v3202, %v3209
    %v3212 = vunpack.c.l.s4 1983009808
    %v3213 = vunpack.c.0.s8 %v3212
    %v3214 = vlaneseq
    %v3215 = vshrl.u32 %v3214, 7
    %v3216 = vsub.s32 %v3213, %v3215
    %v3217 = vrot.slane %v3203, %v3216
    %v3218 = vcombine.low %v3210, %v3217
    %v3219 = vcombine.low %v2138, %v2146
    %v3220 = vcombine.low %v2145, %v2147
    %v3222 = vunpack.c.l.s4 1983009808
    %v3223 = vunpack.c.0.s8 %v3222
    %v3224 = vlaneseq
    %v3225 = vshrl.u32 %v3224, 7
    %v3226 = vsub.s32 %v3223, %v3225
    %v3227 = vrot.slane %v3219, %v3226
    %v3229 = vunpack.c.l.s4 1983009808
    %v3230 = vunpack.c.0.s8 %v3229
    %v3231 = vlaneseq
    %v3232 = vshrl.u32 %v3231, 7
    %v3233 = vsub.s32 %v3230, %v3232
    %v3234 = vrot.slane %v3220, %v3233
    %v3235 = vcombine.low %v3227, %v3234
    %v3236 = vcombine.low %v2155, %v2163
    %v3237 = vcombine.low %v2162, %v2164
    %v3239 = vunpack.c.l.s4 1983009808
    %v3240 = vunpack.c.0.s8 %v3239
    %v3241 = vlaneseq
    %v3242 = vshrl.u32 %v3241, 7
    %v3243 = vsub.s32 %v3240, %v3242
    %v3244 = vrot.slane %v3236, %v3243
    %v3246 = vunpack.c.l.s4 1983009808
    %v3247 = vunpack.c.0.s8 %v3246
    %v3248 = vlaneseq
    %v3249 = vshrl.u32 %v3248, 7
    %v3250 = vsub.s32 %v3247, %v3249
    %v3251 = vrot.slane %v3237, %v3250
    %v3252 = vcombine.low %v3244, %v3251
    %v3253 = vcombine.low %v2172, %v2180
    %v3254 = vcombine.low %v2179, %v2181
    %v3256 = vunpack.c.l.s4 1983009808
    %v3257 = vunpack.c.0.s8 %v3256
    %v3258 = vlaneseq
    %v3259 = vshrl.u32 %v3258, 7
    %v3260 = vsub.s32 %v3257, %v3259
    %v3261 = vrot.slane %v3253, %v3260
    %v3263 = vunpack.c.l.s4 1983009808
    %v3264 = vunpack.c.0.s8 %v3263
    %v3265 = vlaneseq
    %v3266 = vshrl.u32 %v3265, 7
    %v3267 = vsub.s32 %v3264, %v3266
    %v3268 = vrot.slane %v3254, %v3267
    %v3269 = vcombine.low %v3261, %v3268
    %v3270 = vcombine.low %v2189, %v2197
    %v3271 = vcombine.low %v2196, %v2198
    %v3273 = vunpack.c.l.s4 1983009808
    %v3274 = vunpack.c.0.s8 %v3273
    %v3275 = vlaneseq
    %v3276 = vshrl.u32 %v3275, 7
    %v3277 = vsub.s32 %v3274, %v3276
    %v3278 = vrot.slane %v3270, %v3277
    %v3280 = vunpack.c.l.s4 1983009808
    %v3281 = vunpack.c.0.s8 %v3280
    %v3282 = vlaneseq
    %v3283 = vshrl.u32 %v3282, 7
    %v3284 = vsub.s32 %v3281, %v3283
    %v3285 = vrot.slane %v3271, %v3284
    %v3286 = vcombine.low %v3278, %v3285
    %v3287 = vcombine.low %v2206, %v2214
    %v3288 = vcombine.low %v2213, %v2215
    %v3290 = vunpack.c.l.s4 1983009808
    %v3291 = vunpack.c.0.s8 %v3290
    %v3292 = vlaneseq
    %v3293 = vshrl.u32 %v3292, 7
    %v3294 = vsub.s32 %v3291, %v3293
    %v3295 = vrot.slane %v3287, %v3294
    %v3297 = vunpack.c.l.s4 1983009808
    %v3298 = vunpack.c.0.s8 %v3297
    %v3299 = vlaneseq
    %v3300 = vshrl.u32 %v3299, 7
    %v3301 = vsub.s32 %v3298, %v3300
    %v3302 = vrot.slane %v3288, %v3301
    %v3303 = vcombine.low %v3295, %v3302
    %v3304 = vcombine.low %v2223, %v2231
    %v3305 = vcombine.low %v2230, %v2232
    %v3307 = vunpack.c.l.s4 1983009808
    %v3308 = vunpack.c.0.s8 %v3307
    %v3309 = vlaneseq
    %v3310 = vshrl.u32 %v3309, 7
    %v3311 = vsub.s32 %v3308, %v3310
    %v3312 = vrot.slane %v3304, %v3311
    %v3314 = vunpack.c.l.s4 1983009808
    %v3315 = vunpack.c.0.s8 %v3314
    %v3316 = vlaneseq
    %v3317 = vshrl.u32 %v3316, 7
    %v3318 = vsub.s32 %v3315, %v3317
    %v3319 = vrot.slane %v3305, %v3318
    %v3320 = vcombine.low %v3312, %v3319
    %v3321 = vcombine.low %v2240, %v2248
    %v3322 = vcombine.low %v2247, %v2249
    %v3324 = vunpack.c.l.s4 1983009808
    %v3325 = vunpack.c.0.s8 %v3324
    %v3326 = vlaneseq
    %v3327 = vshrl.u32 %v3326, 7
    %v3328 = vsub.s32 %v3325, %v3327
    %v3329 = vrot.slane %v3321, %v3328
    %v3331 = vunpack.c.l.s4 1983009808
    %v3332 = vunpack.c.0.s8 %v3331
    %v3333 = vlaneseq
    %v3334 = vshrl.u32 %v3333, 7
    %v3335 = vsub.s32 %v3332, %v3334
    %v3336 = vrot.slane %v3322, %v3335
    %v3337 = vcombine.low %v3329, %v3336
    %v3338 = vcombine.low %v2257, %v2265
    %v3339 = vcombine.low %v2264, %v2266
    %v3341 = vunpack.c.l.s4 1983009808
    %v3342 = vunpack.c.0.s8 %v3341
    %v3343 = vlaneseq
    %v3344 = vshrl.u32 %v3343, 7
    %v3345 = vsub.s32 %v3342, %v3344
    %v3346 = vrot.slane %v3338, %v3345
    %v3348 = vunpack.c.l.s4 1983009808
    %v3349 = vunpack.c.0.s8 %v3348
    %v3350 = vlaneseq
    %v3351 = vshrl.u32 %v3350, 7
    %v3352 = vsub.s32 %v3349, %v3351
    %v3353 = vrot.slane %v3339, %v3352
    %v3354 = vcombine.low %v3346, %v3353
    %v3355 = vcombine.low %v2274, %v2282
    %v3356 = vcombine.low %v2281, %v2283
    %v3358 = vunpack.c.l.s4 1983009808
    %v3359 = vunpack.c.0.s8 %v3358
    %v3360 = vlaneseq
    %v3361 = vshrl.u32 %v3360, 7
    %v3362 = vsub.s32 %v3359, %v3361
    %v3363 = vrot.slane %v3355, %v3362
    %v3365 = vunpack.c.l.s4 1983009808
    %v3366 = vunpack.c.0.s8 %v3365
    %v3367 = vlaneseq
    %v3368 = vshrl.u32 %v3367, 7
    %v3369 = vsub.s32 %v3366, %v3368
    %v3370 = vrot.slane %v3356, %v3369
    %v3371 = vcombine.low %v3363, %v3370
    %v3372 = vcombine.low %v2291, %v2299
    %v3373 = vcombine.low %v2298, %v2300
    %v3375 = vunpack.c.l.s4 1983009808
    %v3376 = vunpack.c.0.s8 %v3375
    %v3377 = vlaneseq
    %v3378 = vshrl.u32 %v3377, 7
    %v3379 = vsub.s32 %v3376, %v3378
    %v3380 = vrot.slane %v3372, %v3379
    %v3382 = vunpack.c.l.s4 1983009808
    %v3383 = vunpack.c.0.s8 %v3382
    %v3384 = vlaneseq
    %v3385 = vshrl.u32 %v3384, 7
    %v3386 = vsub.s32 %v3383, %v3385
    %v3387 = vrot.slane %v3373, %v3386
    %v3388 = vcombine.low %v3380, %v3387
    %v3389 = vcombine.low %v2308, %v2316
    %v3390 = vcombine.low %v2315, %v2317
    %v3392 = vunpack.c.l.s4 1983009808
    %v3393 = vunpack.c.0.s8 %v3392
    %v3394 = vlaneseq
    %v3395 = vshrl.u32 %v3394, 7
    %v3396 = vsub.s32 %v3393, %v3395
    %v3397 = vrot.slane %v3389, %v3396
    %v3399 = vunpack.c.l.s4 1983009808
    %v3400 = vunpack.c.0.s8 %v3399
    %v3401 = vlaneseq
    %v3402 = vshrl.u32 %v3401, 7
    %v3403 = vsub.s32 %v3400, %v3402
    %v3404 = vrot.slane %v3390, %v3403
    %v3405 = vcombine.low %v3397, %v3404
    %v3406 = vcombine.low %v2325, %v2333
    %v3407 = vcombine.low %v2332, %v2334
    %v3409 = vunpack.c.l.s4 1983009808
    %v3410 = vunpack.c.0.s8 %v3409
    %v3411 = vlaneseq
    %v3412 = vshrl.u32 %v3411, 7
    %v3413 = vsub.s32 %v3410, %v3412
    %v3414 = vrot.slane %v3406, %v3413
    %v3416 = vunpack.c.l.s4 1983009808
    %v3417 = vunpack.c.0.s8 %v3416
    %v3418 = vlaneseq
    %v3419 = vshrl.u32 %v3418, 7
    %v3420 = vsub.s32 %v3417, %v3419
    %v3421 = vrot.slane %v3407, %v3420
    %v3422 = vcombine.low %v3414, %v3421
    %v3423 = vcombine.low %v2342, %v2350
    %v3424 = vcombine.low %v2349, %v2351
    %v3426 = vunpack.c.l.s4 1983009808
    %v3427 = vunpack.c.0.s8 %v3426
    %v3428 = vlaneseq
    %v3429 = vshrl.u32 %v3428, 7
    %v3430 = vsub.s32 %v3427, %v3429
    %v3431 = vrot.slane %v3423, %v3430
    %v3433 = vunpack.c.l.s4 1983009808
    %v3434 = vunpack.c.0.s8 %v3433
    %v3435 = vlaneseq
    %v3436 = vshrl.u32 %v3435, 7
    %v3437 = vsub.s32 %v3434, %v3436
    %v3438 = vrot.slane %v3424, %v3437
    %v3439 = vcombine.low %v3431, %v3438
    %v3440 = vcombine.low %v2359, %v2367
    %v3441 = vcombine.low %v2366, %v2368
    %v3443 = vunpack.c.l.s4 1983009808
    %v3444 = vunpack.c.0.s8 %v3443
    %v3445 = vlaneseq
    %v3446 = vshrl.u32 %v3445, 7
    %v3447 = vsub.s32 %v3444, %v3446
    %v3448 = vrot.slane %v3440, %v3447
    %v3450 = vunpack.c.l.s4 1983009808
    %v3451 = vunpack.c.0.s8 %v3450
    %v3452 = vlaneseq
    %v3453 = vshrl.u32 %v3452, 7
    %v3454 = vsub.s32 %v3451, %v3453
    %v3455 = vrot.slane %v3441, %v3454
    %v3456 = vcombine.low %v3448, %v3455
    %v3457 = vcombine.low %v2376, %v2384
    %v3458 = vcombine.low %v2383, %v2385
    %v3460 = vunpack.c.l.s4 1983009808
    %v3461 = vunpack.c.0.s8 %v3460
    %v3462 = vlaneseq
    %v3463 = vshrl.u32 %v3462, 7
    %v3464 = vsub.s32 %v3461, %v3463
    %v3465 = vrot.slane %v3457, %v3464
    %v3467 = vunpack.c.l.s4 1983009808
    %v3468 = vunpack.c.0.s8 %v3467
    %v3469 = vlaneseq
    %v3470 = vshrl.u32 %v3469, 7
    %v3471 = vsub.s32 %v3468, %v3470
    %v3472 = vrot.slane %v3458, %v3471
    %v3473 = vcombine.low %v3465, %v3472
    %v3474 = vcombine.low %v2393, %v2401
    %v3475 = vcombine.low %v2400, %v2402
    %v3477 = vunpack.c.l.s4 1983009808
    %v3478 = vunpack.c.0.s8 %v3477
    %v3479 = vlaneseq
    %v3480 = vshrl.u32 %v3479, 7
    %v3481 = vsub.s32 %v3478, %v3480
    %v3482 = vrot.slane %v3474, %v3481
    %v3484 = vunpack.c.l.s4 1983009808
    %v3485 = vunpack.c.0.s8 %v3484
    %v3486 = vlaneseq
    %v3487 = vshrl.u32 %v3486, 7
    %v3488 = vsub.s32 %v3485, %v3487
    %v3489 = vrot.slane %v3475, %v3488
    %v3490 = vcombine.low %v3482, %v3489
    %v3491 = vcombine.low %v2410, %v2418
    %v3492 = vcombine.low %v2417, %v2419
    %v3494 = vunpack.c.l.s4 1983009808
    %v3495 = vunpack.c.0.s8 %v3494
    %v3496 = vlaneseq
    %v3497 = vshrl.u32 %v3496, 7
    %v3498 = vsub.s32 %v3495, %v3497
    %v3499 = vrot.slane %v3491, %v3498
    %v3501 = vunpack.c.l.s4 1983009808
    %v3502 = vunpack.c.0.s8 %v3501
    %v3503 = vlaneseq
    %v3504 = vshrl.u32 %v3503, 7
    %v3505 = vsub.s32 %v3502, %v3504
    %v3506 = vrot.slane %v3492, %v3505
    %v3507 = vcombine.low %v3499, %v3506
    %v3508 = vcombine.low %v2427, %v2435
    %v3509 = vcombine.low %v2434, %v2436
    %v3511 = vunpack.c.l.s4 1983009808
    %v3512 = vunpack.c.0.s8 %v3511
    %v3513 = vlaneseq
    %v3514 = vshrl.u32 %v3513, 7
    %v3515 = vsub.s32 %v3512, %v3514
    %v3516 = vrot.slane %v3508, %v3515
    %v3518 = vunpack.c.l.s4 1983009808
    %v3519 = vunpack.c.0.s8 %v3518
    %v3520 = vlaneseq
    %v3521 = vshrl.u32 %v3520, 7
    %v3522 = vsub.s32 %v3519, %v3521
    %v3523 = vrot.slane %v3509, %v3522
    %v3524 = vcombine.low %v3516, %v3523
    %v3525 = vcombine.low %v2444, %v2452
    %v3526 = vcombine.low %v2451, %v2453
    %v3528 = vunpack.c.l.s4 1983009808
    %v3529 = vunpack.c.0.s8 %v3528
    %v3530 = vlaneseq
    %v3531 = vshrl.u32 %v3530, 7
    %v3532 = vsub.s32 %v3529, %v3531
    %v3533 = vrot.slane %v3525, %v3532
    %v3535 = vunpack.c.l.s4 1983009808
    %v3536 = vunpack.c.0.s8 %v3535
    %v3537 = vlaneseq
    %v3538 = vshrl.u32 %v3537, 7
    %v3539 = vsub.s32 %v3536, %v3538
    %v3540 = vrot.slane %v3526, %v3539
    %v3541 = vcombine.low %v3533, %v3540
    %v3542 = vcombine.low %v2461, %v2469
    %v3543 = vcombine.low %v2468, %v2470
    %v3545 = vunpack.c.l.s4 1983009808
    %v3546 = vunpack.c.0.s8 %v3545
    %v3547 = vlaneseq
    %v3548 = vshrl.u32 %v3547, 7
    %v3549 = vsub.s32 %v3546, %v3548
    %v3550 = vrot.slane %v3542, %v3549
    %v3552 = vunpack.c.l.s4 1983009808
    %v3553 = vunpack.c.0.s8 %v3552
    %v3554 = vlaneseq
    %v3555 = vshrl.u32 %v3554, 7
    %v3556 = vsub.s32 %v3553, %v3555
    %v3557 = vrot.slane %v3543, %v3556
    %v3558 = vcombine.low %v3550, %v3557
    %v3559 = vcombine.low %v2478, %v2486
    %v3560 = vcombine.low %v2485, %v2487
    %v3562 = vunpack.c.l.s4 1983009808
    %v3563 = vunpack.c.0.s8 %v3562
    %v3564 = vlaneseq
    %v3565 = vshrl.u32 %v3564, 7
    %v3566 = vsub.s32 %v3563, %v3565
    %v3567 = vrot.slane %v3559, %v3566
    %v3569 = vunpack.c.l.s4 1983009808
    %v3570 = vunpack.c.0.s8 %v3569
    %v3571 = vlaneseq
    %v3572 = vshrl.u32 %v3571, 7
    %v3573 = vsub.s32 %v3570, %v3572
    %v3574 = vrot.slane %v3560, %v3573
    %v3575 = vcombine.low %v3567, %v3574
    %v3576 = vcombine.low %v2495, %v2503
    %v3577 = vcombine.low %v2502, %v2504
    %v3579 = vunpack.c.l.s4 1983009808
    %v3580 = vunpack.c.0.s8 %v3579
    %v3581 = vlaneseq
    %v3582 = vshrl.u32 %v3581, 7
    %v3583 = vsub.s32 %v3580, %v3582
    %v3584 = vrot.slane %v3576, %v3583
    %v3586 = vunpack.c.l.s4 1983009808
    %v3587 = vunpack.c.0.s8 %v3586
    %v3588 = vlaneseq
    %v3589 = vshrl.u32 %v3588, 7
    %v3590 = vsub.s32 %v3587, %v3589
    %v3591 = vrot.slane %v3577, %v3590
    %v3592 = vcombine.low %v3584, %v3591
    %v3593 = vcombine.low %v2512, %v2520
    %v3594 = vcombine.low %v2519, %v2521
    %v3596 = vunpack.c.l.s4 1983009808
    %v3597 = vunpack.c.0.s8 %v3596
    %v3598 = vlaneseq
    %v3599 = vshrl.u32 %v3598, 7
    %v3600 = vsub.s32 %v3597, %v3599
    %v3601 = vrot.slane %v3593, %v3600
    %v3603 = vunpack.c.l.s4 1983009808
    %v3604 = vunpack.c.0.s8 %v3603
    %v3605 = vlaneseq
    %v3606 = vshrl.u32 %v3605, 7
    %v3607 = vsub.s32 %v3604, %v3606
    %v3608 = vrot.slane %v3594, %v3607
    %v3609 = vcombine.low %v3601, %v3608
    %v3610 = vcombine.low %v2529, %v2537
    %v3611 = vcombine.low %v2536, %v2538
    %v3613 = vunpack.c.l.s4 1983009808
    %v3614 = vunpack.c.0.s8 %v3613
    %v3615 = vlaneseq
    %v3616 = vshrl.u32 %v3615, 7
    %v3617 = vsub.s32 %v3614, %v3616
    %v3618 = vrot.slane %v3610, %v3617
    %v3620 = vunpack.c.l.s4 1983009808
    %v3621 = vunpack.c.0.s8 %v3620
    %v3622 = vlaneseq
    %v3623 = vshrl.u32 %v3622, 7
    %v3624 = vsub.s32 %v3621, %v3623
    %v3625 = vrot.slane %v3611, %v3624
    %v3626 = vcombine.low %v3618, %v3625
    %v3627 = vcombine.low %v2546, %v2554
    %v3628 = vcombine.low %v2553, %v2555
    %v3630 = vunpack.c.l.s4 1983009808
    %v3631 = vunpack.c.0.s8 %v3630
    %v3632 = vlaneseq
    %v3633 = vshrl.u32 %v3632, 7
    %v3634 = vsub.s32 %v3631, %v3633
    %v3635 = vrot.slane %v3627, %v3634
    %v3637 = vunpack.c.l.s4 1983009808
    %v3638 = vunpack.c.0.s8 %v3637
    %v3639 = vlaneseq
    %v3640 = vshrl.u32 %v3639, 7
    %v3641 = vsub.s32 %v3638, %v3640
    %v3642 = vrot.slane %v3628, %v3641
    %v3643 = vcombine.low %v3635, %v3642
    %v3644 = vcombine.low %v2563, %v2571
    %v3645 = vcombine.low %v2570, %v2572
    %v3647 = vunpack.c.l.s4 1983009808
    %v3648 = vunpack.c.0.s8 %v3647
    %v3649 = vlaneseq
    %v3650 = vshrl.u32 %v3649, 7
    %v3651 = vsub.s32 %v3648, %v3650
    %v3652 = vrot.slane %v3644, %v3651
    %v3654 = vunpack.c.l.s4 1983009808
    %v3655 = vunpack.c.0.s8 %v3654
    %v3656 = vlaneseq
    %v3657 = vshrl.u32 %v3656, 7
    %v3658 = vsub.s32 %v3655, %v3657
    %v3659 = vrot.slane %v3645, %v3658
    %v3660 = vcombine.low %v3652, %v3659
    %v3661 = vcombine.low %v2580, %v2588
    %v3662 = vcombine.low %v2587, %v2589
    %v3664 = vunpack.c.l.s4 1983009808
    %v3665 = vunpack.c.0.s8 %v3664
    %v3666 = vlaneseq
    %v3667 = vshrl.u32 %v3666, 7
    %v3668 = vsub.s32 %v3665, %v3667
    %v3669 = vrot.slane %v3661, %v3668
    %v3671 = vunpack.c.l.s4 1983009808
    %v3672 = vunpack.c.0.s8 %v3671
    %v3673 = vlaneseq
    %v3674 = vshrl.u32 %v3673, 7
    %v3675 = vsub.s32 %v3672, %v3674
    %v3676 = vrot.slane %v3662, %v3675
    %v3677 = vcombine.low %v3669, %v3676
    %v3678 = vcombine.low %v2597, %v2605
    %v3679 = vcombine.low %v2604, %v2606
    %v3681 = vunpack.c.l.s4 1983009808
    %v3682 = vunpack.c.0.s8 %v3681
    %v3683 = vlaneseq
    %v3684 = vshrl.u32 %v3683, 7
    %v3685 = vsub.s32 %v3682, %v3684
    %v3686 = vrot.slane %v3678, %v3685
    %v3688 = vunpack.c.l.s4 1983009808
    %v3689 = vunpack.c.0.s8 %v3688
    %v3690 = vlaneseq
    %v3691 = vshrl.u32 %v3690, 7
    %v3692 = vsub.s32 %v3689, %v3691
    %v3693 = vrot.slane %v3679, %v3692
    %v3694 = vcombine.low %v3686, %v3693
    %v3695 = vcombine.low %v2614, %v2622
    %v3696 = vcombine.low %v2621, %v2623
    %v3698 = vunpack.c.l.s4 1983009808
    %v3699 = vunpack.c.0.s8 %v3698
    %v3700 = vlaneseq
    %v3701 = vshrl.u32 %v3700, 7
    %v3702 = vsub.s32 %v3699, %v3701
    %v3703 = vrot.slane %v3695, %v3702
    %v3705 = vunpack.c.l.s4 1983009808
    %v3706 = vunpack.c.0.s8 %v3705
    %v3707 = vlaneseq
    %v3708 = vshrl.u32 %v3707, 7
    %v3709 = vsub.s32 %v3706, %v3708
    %v3710 = vrot.slane %v3696, %v3709
    %v3711 = vcombine.low %v3703, %v3710
    %v3712 = vcombine.low %v2631, %v2639
    %v3713 = vcombine.low %v2638, %v2640
    %v3715 = vunpack.c.l.s4 1983009808
    %v3716 = vunpack.c.0.s8 %v3715
    %v3717 = vlaneseq
    %v3718 = vshrl.u32 %v3717, 7
    %v3719 = vsub.s32 %v3716, %v3718
    %v3720 = vrot.slane %v3712, %v3719
    %v3722 = vunpack.c.l.s4 1983009808
    %v3723 = vunpack.c.0.s8 %v3722
    %v3724 = vlaneseq
    %v3725 = vshrl.u32 %v3724, 7
    %v3726 = vsub.s32 %v3723, %v3725
    %v3727 = vrot.slane %v3713, %v3726
    %v3728 = vcombine.low %v3720, %v3727
    %3729 = vset.pattern.permute.xlu0 0
    %3730 = vperm.xlu0 %3729, %v2657
    %v3731 = vpop.permute.xlu0 %3730
    %3732 = vset.pattern.permute.xlu0 0
    %3733 = vperm.xlu0 %3732, %v2674
    %v3734 = vpop.permute.xlu0 %3733
    %3735 = vset.pattern.permute.xlu0 0
    %3736 = vperm.xlu0 %3735, %v2691
    %v3737 = vpop.permute.xlu0 %3736
    %3738 = vset.pattern.permute.xlu0 0
    %3739 = vperm.xlu0 %3738, %v2708
    %v3740 = vpop.permute.xlu0 %3739
    %3741 = vset.pattern.permute.xlu0 0
    %3742 = vperm.xlu0 %3741, %v2725
    %v3743 = vpop.permute.xlu0 %3742
    %3744 = vset.pattern.permute.xlu0 0
    %3745 = vperm.xlu0 %3744, %v2742
    %v3746 = vpop.permute.xlu0 %3745
    %3747 = vset.pattern.permute.xlu0 0
    %3748 = vperm.xlu0 %3747, %v2759
    %v3749 = vpop.permute.xlu0 %3748
    %3750 = vset.pattern.permute.xlu0 0
    %3751 = vperm.xlu0 %3750, %v2776
    %v3752 = vpop.permute.xlu0 %3751
    %3753 = vset.pattern.permute.xlu0 0
    %3754 = vperm.xlu0 %3753, %v2793
    %v3755 = vpop.permute.xlu0 %3754
    %3756 = vset.pattern.permute.xlu0 0
    %3757 = vperm.xlu0 %3756, %v2810
    %v3758 = vpop.permute.xlu0 %3757
    %3759 = vset.pattern.permute.xlu0 0
    %3760 = vperm.xlu0 %3759, %v2827
    %v3761 = vpop.permute.xlu0 %3760
    %3762 = vset.pattern.permute.xlu0 0
    %3763 = vperm.xlu0 %3762, %v2844
    %v3764 = vpop.permute.xlu0 %3763
    %3765 = vset.pattern.permute.xlu0 0
    %3766 = vperm.xlu0 %3765, %v2861
    %v3767 = vpop.permute.xlu0 %3766
    %3768 = vset.pattern.permute.xlu0 0
    %3769 = vperm.xlu0 %3768, %v2878
    %v3770 = vpop.permute.xlu0 %3769
    %3771 = vset.pattern.permute.xlu0 0
    %3772 = vperm.xlu0 %3771, %v2895
    %v3773 = vpop.permute.xlu0 %3772
    %3774 = vset.pattern.permute.xlu0 0
    %3775 = vperm.xlu0 %3774, %v2912
    %v3776 = vpop.permute.xlu0 %3775
    %3777 = vset.pattern.permute.xlu0 0
    %3778 = vperm.xlu0 %3777, %v2929
    %v3779 = vpop.permute.xlu0 %3778
    %3780 = vset.pattern.permute.xlu0 0
    %3781 = vperm.xlu0 %3780, %v2946
    %v3782 = vpop.permute.xlu0 %3781
    %3783 = vset.pattern.permute.xlu0 0
    %3784 = vperm.xlu0 %3783, %v2963
    %v3785 = vpop.permute.xlu0 %3784
    %3786 = vset.pattern.permute.xlu0 0
    %3787 = vperm.xlu0 %3786, %v2980
    %v3788 = vpop.permute.xlu0 %3787
    %3789 = vset.pattern.permute.xlu0 0
    %3790 = vperm.xlu0 %3789, %v2997
    %v3791 = vpop.permute.xlu0 %3790
    %3792 = vset.pattern.permute.xlu0 0
    %3793 = vperm.xlu0 %3792, %v3014
    %v3794 = vpop.permute.xlu0 %3793
    %3795 = vset.pattern.permute.xlu0 0
    %3796 = vperm.xlu0 %3795, %v3031
    %v3797 = vpop.permute.xlu0 %3796
    %3798 = vset.pattern.permute.xlu0 0
    %3799 = vperm.xlu0 %3798, %v3048
    %v3800 = vpop.permute.xlu0 %3799
    %3801 = vset.pattern.permute.xlu0 0
    %3802 = vperm.xlu0 %3801, %v3065
    %v3803 = vpop.permute.xlu0 %3802
    %3804 = vset.pattern.permute.xlu0 0
    %3805 = vperm.xlu0 %3804, %v3082
    %v3806 = vpop.permute.xlu0 %3805
    %3807 = vset.pattern.permute.xlu0 0
    %3808 = vperm.xlu0 %3807, %v3099
    %v3809 = vpop.permute.xlu0 %3808
    %3810 = vset.pattern.permute.xlu0 0
    %3811 = vperm.xlu0 %3810, %v3116
    %v3812 = vpop.permute.xlu0 %3811
    %3813 = vset.pattern.permute.xlu0 0
    %3814 = vperm.xlu0 %3813, %v3133
    %v3815 = vpop.permute.xlu0 %3814
    %3816 = vset.pattern.permute.xlu0 0
    %3817 = vperm.xlu0 %3816, %v3150
    %v3818 = vpop.permute.xlu0 %3817
    %3819 = vset.pattern.permute.xlu0 0
    %3820 = vperm.xlu0 %3819, %v3167
    %v3821 = vpop.permute.xlu0 %3820
    %3822 = vset.pattern.permute.xlu0 0
    %3823 = vperm.xlu0 %3822, %v3184
    %v3824 = vpop.permute.xlu0 %3823
    %3825 = vset.pattern.permute.xlu0 0
    %3826 = vperm.xlu0 %3825, %v3201
    %v3827 = vpop.permute.xlu0 %3826
    %3828 = vset.pattern.permute.xlu0 0
    %3829 = vperm.xlu0 %3828, %v3218
    %v3830 = vpop.permute.xlu0 %3829
    %3831 = vset.pattern.permute.xlu0 0
    %3832 = vperm.xlu0 %3831, %v3235
    %v3833 = vpop.permute.xlu0 %3832
    %3834 = vset.pattern.permute.xlu0 0
    %3835 = vperm.xlu0 %3834, %v3252
    %v3836 = vpop.permute.xlu0 %3835
    %3837 = vset.pattern.permute.xlu0 0
    %3838 = vperm.xlu0 %3837, %v3269
    %v3839 = vpop.permute.xlu0 %3838
    %3840 = vset.pattern.permute.xlu0 0
    %3841 = vperm.xlu0 %3840, %v3286
    %v3842 = vpop.permute.xlu0 %3841
    %3843 = vset.pattern.permute.xlu0 0
    %3844 = vperm.xlu0 %3843, %v3303
    %v3845 = vpop.permute.xlu0 %3844
    %3846 = vset.pattern.permute.xlu0 0
    %3847 = vperm.xlu0 %3846, %v3320
    %v3848 = vpop.permute.xlu0 %3847
    %3849 = vset.pattern.permute.xlu0 0
    %3850 = vperm.xlu0 %3849, %v3337
    %v3851 = vpop.permute.xlu0 %3850
    %3852 = vset.pattern.permute.xlu0 0
    %3853 = vperm.xlu0 %3852, %v3354
    %v3854 = vpop.permute.xlu0 %3853
    %3855 = vset.pattern.permute.xlu0 0
    %3856 = vperm.xlu0 %3855, %v3371
    %v3857 = vpop.permute.xlu0 %3856
    %3858 = vset.pattern.permute.xlu0 0
    %3859 = vperm.xlu0 %3858, %v3388
    %v3860 = vpop.permute.xlu0 %3859
    %3861 = vset.pattern.permute.xlu0 0
    %3862 = vperm.xlu0 %3861, %v3405
    %v3863 = vpop.permute.xlu0 %3862
    %3864 = vset.pattern.permute.xlu0 0
    %3865 = vperm.xlu0 %3864, %v3422
    %v3866 = vpop.permute.xlu0 %3865
    %3867 = vset.pattern.permute.xlu0 0
    %3868 = vperm.xlu0 %3867, %v3439
    %v3869 = vpop.permute.xlu0 %3868
    %3870 = vset.pattern.permute.xlu0 0
    %3871 = vperm.xlu0 %3870, %v3456
    %v3872 = vpop.permute.xlu0 %3871
    %3873 = vset.pattern.permute.xlu0 0
    %3874 = vperm.xlu0 %3873, %v3473
    %v3875 = vpop.permute.xlu0 %3874
    %3876 = vset.pattern.permute.xlu0 0
    %3877 = vperm.xlu0 %3876, %v3490
    %v3878 = vpop.permute.xlu0 %3877
    %3879 = vset.pattern.permute.xlu0 0
    %3880 = vperm.xlu0 %3879, %v3507
    %v3881 = vpop.permute.xlu0 %3880
    %3882 = vset.pattern.permute.xlu0 0
    %3883 = vperm.xlu0 %3882, %v3524
    %v3884 = vpop.permute.xlu0 %3883
    %3885 = vset.pattern.permute.xlu0 0
    %3886 = vperm.xlu0 %3885, %v3541
    %v3887 = vpop.permute.xlu0 %3886
    %3888 = vset.pattern.permute.xlu0 0
    %3889 = vperm.xlu0 %3888, %v3558
    %v3890 = vpop.permute.xlu0 %3889
    %3891 = vset.pattern.permute.xlu0 0
    %3892 = vperm.xlu0 %3891, %v3575
    %v3893 = vpop.permute.xlu0 %3892
    %3894 = vset.pattern.permute.xlu0 0
    %3895 = vperm.xlu0 %3894, %v3592
    %v3896 = vpop.permute.xlu0 %3895
    %3897 = vset.pattern.permute.xlu0 0
    %3898 = vperm.xlu0 %3897, %v3609
    %v3899 = vpop.permute.xlu0 %3898
    %3900 = vset.pattern.permute.xlu0 0
    %3901 = vperm.xlu0 %3900, %v3626
    %v3902 = vpop.permute.xlu0 %3901
    %3903 = vset.pattern.permute.xlu0 0
    %3904 = vperm.xlu0 %3903, %v3643
    %v3905 = vpop.permute.xlu0 %3904
    %3906 = vset.pattern.permute.xlu0 0
    %3907 = vperm.xlu0 %3906, %v3660
    %v3908 = vpop.permute.xlu0 %3907
    %3909 = vset.pattern.permute.xlu0 0
    %3910 = vperm.xlu0 %3909, %v3677
    %v3911 = vpop.permute.xlu0 %3910
    %3912 = vset.pattern.permute.xlu0 0
    %3913 = vperm.xlu0 %3912, %v3694
    %v3914 = vpop.permute.xlu0 %3913
    %3915 = vset.pattern.permute.xlu0 0
    %3916 = vperm.xlu0 %3915, %v3711
    %v3917 = vpop.permute.xlu0 %3916
    %3918 = vset.pattern.permute.xlu0 0
    %3919 = vperm.xlu0 %3918, %v3728
    %v3920 = vpop.permute.xlu0 %3919
    %v3921 = vlaneseq
    %v3922 = vshrl.u32 %v3921, 7
    %v3923 = vsub.s32 %v331, %v3922
    %v3924 = vrot.slane %v3731, %v3923
    %v3925 = vlaneseq
    %v3926 = vshrl.u32 %v3925, 7
    %v3927 = vsub.s32 %v336, %v3926
    %v3928 = vrot.slane %v3734, %v3927
    %v3929 = vsel %vm341, %v3928, %v3924
    %v3930 = vlaneseq
    %v3931 = vshrl.u32 %v3930, 7
    %v3932 = vsub.s32 %v343, %v3931
    %v3933 = vrot.slane %v3737, %v3932
    %v3934 = vsel %vm348, %v3933, %v3929
    %v3935 = vlaneseq
    %v3936 = vshrl.u32 %v3935, 7
    %v3937 = vsub.s32 %v350, %v3936
    %v3938 = vrot.slane %v3740, %v3937
    %v3939 = vsel %vm355, %v3938, %v3934
    %v3940 = vlaneseq
    %v3941 = vshrl.u32 %v3940, 7
    %v3942 = vsub.s32 %v357, %v3941
    %v3943 = vrot.slane %v3743, %v3942
    %v3944 = vsel %vm362, %v3943, %v3939
    %v3945 = vlaneseq
    %v3946 = vshrl.u32 %v3945, 7
    %v3947 = vsub.s32 %v364, %v3946
    %v3948 = vrot.slane %v3746, %v3947
    %v3949 = vsel %vm369, %v3948, %v3944
    %v3950 = vlaneseq
    %v3951 = vshrl.u32 %v3950, 7
    %v3952 = vsub.s32 %v371, %v3951
    %v3953 = vrot.slane %v3749, %v3952
    %v3954 = vsel %vm376, %v3953, %v3949
    %v3955 = vlaneseq
    %v3956 = vshrl.u32 %v3955, 7
    %v3957 = vsub.s32 %v378, %v3956
    %v3958 = vrot.slane %v3752, %v3957
    %v3959 = vsel %vm383, %v3958, %v3954
    %v3960 = vlaneseq
    %v3961 = vshrl.u32 %v3960, 7
    %v3962 = vsub.s32 %v385, %v3961
    %v3963 = vrot.slane %v3755, %v3962
    %v3964 = vsel %vm390, %v3963, %v3959
    %v3965 = vlaneseq
    %v3966 = vshrl.u32 %v3965, 7
    %v3967 = vsub.s32 %v392, %v3966
    %v3968 = vrot.slane %v3758, %v3967
    %v3969 = vsel %vm397, %v3968, %v3964
    %v3970 = vlaneseq
    %v3971 = vshrl.u32 %v3970, 7
    %v3972 = vsub.s32 %v399, %v3971
    %v3973 = vrot.slane %v3761, %v3972
    %v3974 = vsel %vm404, %v3973, %v3969
    %v3975 = vlaneseq
    %v3976 = vshrl.u32 %v3975, 7
    %v3977 = vsub.s32 %v406, %v3976
    %v3978 = vrot.slane %v3764, %v3977
    %v3979 = vsel %vm411, %v3978, %v3974
    %v3980 = vlaneseq
    %v3981 = vshrl.u32 %v3980, 7
    %v3982 = vsub.s32 %v413, %v3981
    %v3983 = vrot.slane %v3767, %v3982
    %v3984 = vsel %vm418, %v3983, %v3979
    %v3985 = vlaneseq
    %v3986 = vshrl.u32 %v3985, 7
    %v3987 = vsub.s32 %v420, %v3986
    %v3988 = vrot.slane %v3770, %v3987
    %v3989 = vsel %vm425, %v3988, %v3984
    %v3990 = vlaneseq
    %v3991 = vshrl.u32 %v3990, 7
    %v3992 = vsub.s32 %v427, %v3991
    %v3993 = vrot.slane %v3773, %v3992
    %v3994 = vsel %vm432, %v3993, %v3989
    %v3995 = vlaneseq
    %v3996 = vshrl.u32 %v3995, 7
    %v3997 = vsub.s32 %v434, %v3996
    %v3998 = vrot.slane %v3776, %v3997
    %v3999 = vsel %vm439, %v3998, %v3994
    %v4000 = vlaneseq
    %v4001 = vshrl.u32 %v4000, 7
    %v4002 = vsub.s32 %v331, %v4001
    %v4003 = vrot.slane %v3779, %v4002
    %v4004 = vlaneseq
    %v4005 = vshrl.u32 %v4004, 7
    %v4006 = vsub.s32 %v336, %v4005
    %v4007 = vrot.slane %v3782, %v4006
    %v4008 = vsel %vm341, %v4007, %v4003
    %v4009 = vlaneseq
    %v4010 = vshrl.u32 %v4009, 7
    %v4011 = vsub.s32 %v343, %v4010
    %v4012 = vrot.slane %v3785, %v4011
    %v4013 = vsel %vm348, %v4012, %v4008
    %v4014 = vlaneseq
    %v4015 = vshrl.u32 %v4014, 7
    %v4016 = vsub.s32 %v350, %v4015
    %v4017 = vrot.slane %v3788, %v4016
    %v4018 = vsel %vm355, %v4017, %v4013
    %v4019 = vlaneseq
    %v4020 = vshrl.u32 %v4019, 7
    %v4021 = vsub.s32 %v357, %v4020
    %v4022 = vrot.slane %v3791, %v4021
    %v4023 = vsel %vm362, %v4022, %v4018
    %v4024 = vlaneseq
    %v4025 = vshrl.u32 %v4024, 7
    %v4026 = vsub.s32 %v364, %v4025
    %v4027 = vrot.slane %v3794, %v4026
    %v4028 = vsel %vm369, %v4027, %v4023
    %v4029 = vlaneseq
    %v4030 = vshrl.u32 %v4029, 7
    %v4031 = vsub.s32 %v371, %v4030
    %v4032 = vrot.slane %v3797, %v4031
    %v4033 = vsel %vm376, %v4032, %v4028
    %v4034 = vlaneseq
    %v4035 = vshrl.u32 %v4034, 7
    %v4036 = vsub.s32 %v378, %v4035
    %v4037 = vrot.slane %v3800, %v4036
    %v4038 = vsel %vm383, %v4037, %v4033
    %v4039 = vlaneseq
    %v4040 = vshrl.u32 %v4039, 7
    %v4041 = vsub.s32 %v385, %v4040
    %v4042 = vrot.slane %v3803, %v4041
    %v4043 = vsel %vm390, %v4042, %v4038
    %v4044 = vlaneseq
    %v4045 = vshrl.u32 %v4044, 7
    %v4046 = vsub.s32 %v392, %v4045
    %v4047 = vrot.slane %v3806, %v4046
    %v4048 = vsel %vm397, %v4047, %v4043
    %v4049 = vlaneseq
    %v4050 = vshrl.u32 %v4049, 7
    %v4051 = vsub.s32 %v399, %v4050
    %v4052 = vrot.slane %v3809, %v4051
    %v4053 = vsel %vm404, %v4052, %v4048
    %v4054 = vlaneseq
    %v4055 = vshrl.u32 %v4054, 7
    %v4056 = vsub.s32 %v406, %v4055
    %v4057 = vrot.slane %v3812, %v4056
    %v4058 = vsel %vm411, %v4057, %v4053
    %v4059 = vlaneseq
    %v4060 = vshrl.u32 %v4059, 7
    %v4061 = vsub.s32 %v413, %v4060
    %v4062 = vrot.slane %v3815, %v4061
    %v4063 = vsel %vm418, %v4062, %v4058
    %v4064 = vlaneseq
    %v4065 = vshrl.u32 %v4064, 7
    %v4066 = vsub.s32 %v420, %v4065
    %v4067 = vrot.slane %v3818, %v4066
    %v4068 = vsel %vm425, %v4067, %v4063
    %v4069 = vlaneseq
    %v4070 = vshrl.u32 %v4069, 7
    %v4071 = vsub.s32 %v427, %v4070
    %v4072 = vrot.slane %v3821, %v4071
    %v4073 = vsel %vm432, %v4072, %v4068
    %v4074 = vlaneseq
    %v4075 = vshrl.u32 %v4074, 7
    %v4076 = vsub.s32 %v434, %v4075
    %v4077 = vrot.slane %v3824, %v4076
    %v4078 = vsel %vm439, %v4077, %v4073
    %v4079 = vlaneseq
    %v4080 = vshrl.u32 %v4079, 7
    %v4081 = vsub.s32 %v331, %v4080
    %v4082 = vrot.slane %v3827, %v4081
    %v4083 = vlaneseq
    %v4084 = vshrl.u32 %v4083, 7
    %v4085 = vsub.s32 %v336, %v4084
    %v4086 = vrot.slane %v3830, %v4085
    %v4087 = vsel %vm341, %v4086, %v4082
    %v4088 = vlaneseq
    %v4089 = vshrl.u32 %v4088, 7
    %v4090 = vsub.s32 %v343, %v4089
    %v4091 = vrot.slane %v3833, %v4090
    %v4092 = vsel %vm348, %v4091, %v4087
    %v4093 = vlaneseq
    %v4094 = vshrl.u32 %v4093, 7
    %v4095 = vsub.s32 %v350, %v4094
    %v4096 = vrot.slane %v3836, %v4095
    %v4097 = vsel %vm355, %v4096, %v4092
    %v4098 = vlaneseq
    %v4099 = vshrl.u32 %v4098, 7
    %v4100 = vsub.s32 %v357, %v4099
    %v4101 = vrot.slane %v3839, %v4100
    %v4102 = vsel %vm362, %v4101, %v4097
    %v4103 = vlaneseq
    %v4104 = vshrl.u32 %v4103, 7
    %v4105 = vsub.s32 %v364, %v4104
    %v4106 = vrot.slane %v3842, %v4105
    %v4107 = vsel %vm369, %v4106, %v4102
    %v4108 = vlaneseq
    %v4109 = vshrl.u32 %v4108, 7
    %v4110 = vsub.s32 %v371, %v4109
    %v4111 = vrot.slane %v3845, %v4110
    %v4112 = vsel %vm376, %v4111, %v4107
    %v4113 = vlaneseq
    %v4114 = vshrl.u32 %v4113, 7
    %v4115 = vsub.s32 %v378, %v4114
    %v4116 = vrot.slane %v3848, %v4115
    %v4117 = vsel %vm383, %v4116, %v4112
    %v4118 = vlaneseq
    %v4119 = vshrl.u32 %v4118, 7
    %v4120 = vsub.s32 %v385, %v4119
    %v4121 = vrot.slane %v3851, %v4120
    %v4122 = vsel %vm390, %v4121, %v4117
    %v4123 = vlaneseq
    %v4124 = vshrl.u32 %v4123, 7
    %v4125 = vsub.s32 %v392, %v4124
    %v4126 = vrot.slane %v3854, %v4125
    %v4127 = vsel %vm397, %v4126, %v4122
    %v4128 = vlaneseq
    %v4129 = vshrl.u32 %v4128, 7
    %v4130 = vsub.s32 %v399, %v4129
    %v4131 = vrot.slane %v3857, %v4130
    %v4132 = vsel %vm404, %v4131, %v4127
    %v4133 = vlaneseq
    %v4134 = vshrl.u32 %v4133, 7
    %v4135 = vsub.s32 %v406, %v4134
    %v4136 = vrot.slane %v3860, %v4135
    %v4137 = vsel %vm411, %v4136, %v4132
    %v4138 = vlaneseq
    %v4139 = vshrl.u32 %v4138, 7
    %v4140 = vsub.s32 %v413, %v4139
    %v4141 = vrot.slane %v3863, %v4140
    %v4142 = vsel %vm418, %v4141, %v4137
    %v4143 = vlaneseq
    %v4144 = vshrl.u32 %v4143, 7
    %v4145 = vsub.s32 %v420, %v4144
    %v4146 = vrot.slane %v3866, %v4145
    %v4147 = vsel %vm425, %v4146, %v4142
    %v4148 = vlaneseq
    %v4149 = vshrl.u32 %v4148, 7
    %v4150 = vsub.s32 %v427, %v4149
    %v4151 = vrot.slane %v3869, %v4150
    %v4152 = vsel %vm432, %v4151, %v4147
    %v4153 = vlaneseq
    %v4154 = vshrl.u32 %v4153, 7
    %v4155 = vsub.s32 %v434, %v4154
    %v4156 = vrot.slane %v3872, %v4155
    %v4157 = vsel %vm439, %v4156, %v4152
    %v4158 = vlaneseq
    %v4159 = vshrl.u32 %v4158, 7
    %v4160 = vsub.s32 %v331, %v4159
    %v4161 = vrot.slane %v3875, %v4160
    %v4162 = vlaneseq
    %v4163 = vshrl.u32 %v4162, 7
    %v4164 = vsub.s32 %v336, %v4163
    %v4165 = vrot.slane %v3878, %v4164
    %v4166 = vsel %vm341, %v4165, %v4161
    %v4167 = vlaneseq
    %v4168 = vshrl.u32 %v4167, 7
    %v4169 = vsub.s32 %v343, %v4168
    %v4170 = vrot.slane %v3881, %v4169
    %v4171 = vsel %vm348, %v4170, %v4166
    %v4172 = vlaneseq
    %v4173 = vshrl.u32 %v4172, 7
    %v4174 = vsub.s32 %v350, %v4173
    %v4175 = vrot.slane %v3884, %v4174
    %v4176 = vsel %vm355, %v4175, %v4171
    %v4177 = vlaneseq
    %v4178 = vshrl.u32 %v4177, 7
    %v4179 = vsub.s32 %v357, %v4178
    %v4180 = vrot.slane %v3887, %v4179
    %v4181 = vsel %vm362, %v4180, %v4176
    %v4182 = vlaneseq
    %v4183 = vshrl.u32 %v4182, 7
    %v4184 = vsub.s32 %v364, %v4183
    %v4185 = vrot.slane %v3890, %v4184
    %v4186 = vsel %vm369, %v4185, %v4181
    %v4187 = vlaneseq
    %v4188 = vshrl.u32 %v4187, 7
    %v4189 = vsub.s32 %v371, %v4188
    %v4190 = vrot.slane %v3893, %v4189
    %v4191 = vsel %vm376, %v4190, %v4186
    %v4192 = vlaneseq
    %v4193 = vshrl.u32 %v4192, 7
    %v4194 = vsub.s32 %v378, %v4193
    %v4195 = vrot.slane %v3896, %v4194
    %v4196 = vsel %vm383, %v4195, %v4191
    %v4197 = vlaneseq
    %v4198 = vshrl.u32 %v4197, 7
    %v4199 = vsub.s32 %v385, %v4198
    %v4200 = vrot.slane %v3899, %v4199
    %v4201 = vsel %vm390, %v4200, %v4196
    %v4202 = vlaneseq
    %v4203 = vshrl.u32 %v4202, 7
    %v4204 = vsub.s32 %v392, %v4203
    %v4205 = vrot.slane %v3902, %v4204
    %v4206 = vsel %vm397, %v4205, %v4201
    %v4207 = vlaneseq
    %v4208 = vshrl.u32 %v4207, 7
    %v4209 = vsub.s32 %v399, %v4208
    %v4210 = vrot.slane %v3905, %v4209
    %v4211 = vsel %vm404, %v4210, %v4206
    %v4212 = vlaneseq
    %v4213 = vshrl.u32 %v4212, 7
    %v4214 = vsub.s32 %v406, %v4213
    %v4215 = vrot.slane %v3908, %v4214
    %v4216 = vsel %vm411, %v4215, %v4211
    %v4217 = vlaneseq
    %v4218 = vshrl.u32 %v4217, 7
    %v4219 = vsub.s32 %v413, %v4218
    %v4220 = vrot.slane %v3911, %v4219
    %v4221 = vsel %vm418, %v4220, %v4216
    %v4222 = vlaneseq
    %v4223 = vshrl.u32 %v4222, 7
    %v4224 = vsub.s32 %v420, %v4223
    %v4225 = vrot.slane %v3914, %v4224
    %v4226 = vsel %vm425, %v4225, %v4221
    %v4227 = vlaneseq
    %v4228 = vshrl.u32 %v4227, 7
    %v4229 = vsub.s32 %v427, %v4228
    %v4230 = vrot.slane %v3917, %v4229
    %v4231 = vsel %vm432, %v4230, %v4226
    %v4232 = vlaneseq
    %v4233 = vshrl.u32 %v4232, 7
    %v4234 = vsub.s32 %v434, %v4233
    %v4235 = vrot.slane %v3920, %v4234
    %v4236 = vsel %vm439, %v4235, %v4231
    %v4237 = vsel %vm678, %v4157, %v3999
    %v4238 = vsel %vm678, %v4236, %v4078
    %v4239 = vcombine.low %v4237, %v4238
    %v4241 = vunpack.c.l.s4 1983009808
    %v4242 = vunpack.c.0.s8 %v4241
    %v4243 = vlaneseq
    %v4244 = vshrl.u32 %v4243, 7
    %v4245 = vsub.s32 %v4242, %v4244
    %v4246 = vrot.slane %v4239, %v4245
    %4248 = vst [vmem:[#allocation2] sm:$0xf] %v4246
    // Predicated region
    $region6: #{extractor_forward.1} parent=1 // pred_check
      _
    $region7: #{extractor_forward.1} parent=1 // pred_check_branch
      %4250 = sbr.rel (0) target = $region9
    $region8: #{extractor_forward.1} parent=1 // pred_region
      %s4252 = ssub.s32 64, 64
      %4253 = vsyncadd [#allocation3], %s4252
      %s4255 = sshll.u32 [#allocation2], 4
      %s4256 = int_to_ptr.vmem [resolvable:$true] %s4255
      %4258 = dma.vmem_to_hbm [thread:$0]  %s4256, 64, %s1, [#allocation3]
    $region9: #{extractor_forward.1} parent=1 // pred_fallthru
      _
    // Predicated region
    $region10: #{extractor_forward.1} parent=1 // pred_check
      _
    $region11: #{extractor_forward.1} parent=1 // pred_check_branch
      %4260 = sbr.rel (0) target = $region13
    $region12: #{extractor_forward.1} parent=1 // pred_region
      %4261 = dma.done [#allocation3], 64
    $region13: #{extractor_forward.1} parent=1 // pred_fallthru
      _
    %4262 = vsyncpa [#allocation3], 1

</llo_original>
